<compile_context>
chip_gen: v7x
topology: tpu7x:2x2x1
jax: 0.10.0
libtpu: 0.0.40
codegen_flags: <defaults>
</compile_context>

<pallas_src>
import functools

import jax
import jax.numpy as jnp
from jax.experimental import pallas as pl
from jax.experimental.pallas import tpu as pltpu


def _encoder_layer_kernel(
    x_ref, mask_ref, lhm_ref,
    wq_ref, bq_ref, wk_ref, bk_ref, wv_ref, bv_ref,
    wo_ref, bo_ref,
    ln1_g_ref, ln1_b_ref,
    w1_ref, b1_ref, w2_ref, b2_ref,
    ln2_g_ref, ln2_b_ref,
    o_ref,
    *, num_heads, head_dim, ln_eps):
    # x_ref:  (1, S, D)   one batch element of hidden_states
    # mask:   (1, 1, S, S) additive attention mask
    # lhm:    (H,)        layer_head_mask, in SMEM
    # wq/wk/wv: (H, D, hd) per-head (in, out) projection weights
    # bq/bk/bv: (H, 1, hd) per-head biases
    # wo:     (H, hd, D)  per-head rows of out_proj (in, out)
    x = x_ref[0]                                     # (S, D), native dtype
    mask = mask_ref[0, 0].astype(jnp.float32)        # (S, S)
    scale = head_dim ** -0.5

    S, D = x.shape
    attn = jnp.zeros((S, D), jnp.float32)

    # Static loop over heads; per-head weights avoid in-kernel slicing of the
    # activation lanes and the final concat (out_proj is summed per head).
    for h in range(num_heads):
        q_h = (jnp.dot(x, wq_ref[h], preferred_element_type=jnp.float32)
               + bq_ref[h].astype(jnp.float32)) * scale           # (S, hd)
        k_h = (jnp.dot(x, wk_ref[h], preferred_element_type=jnp.float32)
               + bk_ref[h].astype(jnp.float32))                   # (S, hd)
        v_h = (jnp.dot(x, wv_ref[h], preferred_element_type=jnp.float32)
               + bv_ref[h].astype(jnp.float32))                   # (S, hd)

        # scores = q_h @ k_h^T without emitting a transpose (contract hd axes).
        scores = jax.lax.dot_general(
            q_h, k_h, (((1,), (1,)), ((), ())),
            preferred_element_type=jnp.float32)                   # (S, S)
        scores = scores + mask
        scores = scores - jnp.max(scores, axis=-1, keepdims=True)
        p = jnp.exp(scores)
        p = p / jnp.sum(p, axis=-1, keepdims=True)
        p = p * lhm_ref[h]                                        # head mask

        ctx = jnp.dot(p, v_h, preferred_element_type=jnp.float32)  # (S, hd)
        attn = attn + jnp.dot(ctx, wo_ref[h],
                              preferred_element_type=jnp.float32)  # (S, D)
    attn = attn + bo_ref[...].astype(jnp.float32)

    # dropout omitted (eval mode).  Residual + LayerNorm #1.
    h1 = x.astype(jnp.float32) + attn
    mu = jnp.mean(h1, axis=-1, keepdims=True)
    var = jnp.mean(jnp.square(h1 - mu), axis=-1, keepdims=True)
    h1 = (h1 - mu) * jax.lax.rsqrt(var + ln_eps)
    h1 = h1 * ln1_g_ref[...] + ln1_b_ref[...]

    # FFN: fc1 -> gelu -> fc2   (weights pre-transposed to (in, out)).
    # TODO(synk): torch F.gelu default is the exact erf gelu; the tanh
    # approximation is used here for robust Mosaic lowering (matched in ref).
    f = jnp.dot(h1, w1_ref[...], preferred_element_type=jnp.float32) + b1_ref[...]
    f = jax.nn.gelu(f, approximate=True)
    f = jnp.dot(f, w2_ref[...], preferred_element_type=jnp.float32) + b2_ref[...]

    # Residual + LayerNorm #2.
    h2 = h1 + f
    mu2 = jnp.mean(h2, axis=-1, keepdims=True)
    var2 = jnp.mean(jnp.square(h2 - mu2), axis=-1, keepdims=True)
    h2 = (h2 - mu2) * jax.lax.rsqrt(var2 + ln_eps)
    h2 = h2 * ln2_g_ref[...] + ln2_b_ref[...]

    # TODO(synk): fp16 inf/nan clamp branch of the reference is skipped (f32 path).
    o_ref[0] = h2.astype(o_ref.dtype)


def bart_encoder_layer_pallas(x, attn_mask, layer_head_mask, params, *,
                              num_heads, ln_eps=1e-5):
    B, S, D = x.shape
    hd = D // num_heads
    assert hd * num_heads == D
    F = params["fc1_w"].shape[0]
    f32 = jnp.float32

    # --- layout plumbing (done once, outside the kernel) ---
    def t(w):                                  # torch (out, in) -> (in, out)
        return jnp.asarray(w, f32).T

    def split_w(w):                            # (D, D) -> (H, D, hd)
        return t(w).reshape(D, num_heads, hd).transpose(1, 0, 2)

    def split_b(b):                            # (D,) -> (H, 1, hd)
        return jnp.asarray(b, f32).reshape(num_heads, 1, hd)

    wq, bq = split_w(params["q_w"]), split_b(params["q_b"])
    wk, bk = split_w(params["k_w"]), split_b(params["k_b"])
    wv, bv = split_w(params["v_w"]), split_b(params["v_b"])
    wo = t(params["o_w"]).reshape(num_heads, hd, D)         # (H, hd, D)
    bo = jnp.asarray(params["o_b"], f32).reshape(1, D)
    ln1_g = jnp.asarray(params["ln1_g"], f32).reshape(1, D)
    ln1_b = jnp.asarray(params["ln1_b"], f32).reshape(1, D)
    w1 = t(params["fc1_w"])                                  # (D, F)
    b1 = jnp.asarray(params["fc1_b"], f32).reshape(1, F)
    w2 = t(params["fc2_w"])                                  # (F, D)
    b2 = jnp.asarray(params["fc2_b"], f32).reshape(1, D)
    ln2_g = jnp.asarray(params["ln2_g"], f32).reshape(1, D)
    ln2_b = jnp.asarray(params["ln2_b"], f32).reshape(1, D)
    lhm = jnp.asarray(layer_head_mask, f32)                  # (H,)
    mask = jnp.asarray(attn_mask, f32)                       # (B, 1, S, S)

    kernel = functools.partial(_encoder_layer_kernel, num_heads=num_heads,
                               head_dim=hd, ln_eps=ln_eps)

    def full(shape):                           # whole-array VMEM block
        return pl.BlockSpec(shape, lambda b: (0,) * len(shape))

    grid_spec = pltpu.PrefetchScalarGridSpec(
        num_scalar_prefetch=0,
        grid=(B,),
        in_specs=[
            pl.BlockSpec((1, S, D), lambda b: (b, 0, 0)),           # x
            pl.BlockSpec((1, 1, S, S), lambda b: (b, 0, 0, 0)),     # mask
            pl.BlockSpec(memory_space=pltpu.MemorySpace.SMEM),      # lhm
            full((num_heads, D, hd)), full((num_heads, 1, hd)),     # wq, bq
            full((num_heads, D, hd)), full((num_heads, 1, hd)),     # wk, bk
            full((num_heads, D, hd)), full((num_heads, 1, hd)),     # wv, bv
            full((num_heads, hd, D)), full((1, D)),                 # wo, bo
            full((1, D)), full((1, D)),                             # ln1 g, b
            full((D, F)), full((1, F)),                             # fc1
            full((F, D)), full((1, D)),                             # fc2
            full((1, D)), full((1, D)),                             # ln2 g, b
        ],
        out_specs=pl.BlockSpec((1, S, D), lambda b: (b, 0, 0)),
    )

    return pl.pallas_call(
        kernel,
        out_shape=jax.ShapeDtypeStruct((B, S, D), x.dtype),
        grid_spec=grid_spec,
        compiler_params=pltpu.CompilerParams(
            dimension_semantics=("parallel",)),
    )(x, mask, lhm,
      wq, bq, wk, bk, wv, bv,
      wo, bo, ln1_g, ln1_b, w1, b1, w2, b2, ln2_g, ln2_b)


# ---------------- pure-JAX reference (torch-convention weights) ----------------
def _layer_norm_ref(x, g, b, eps):
    mu = jnp.mean(x, axis=-1, keepdims=True)
    var = jnp.mean(jnp.square(x - mu), axis=-1, keepdims=True)
    return (x - mu) * jax.lax.rsqrt(var + eps) * g + b


def bart_encoder_layer_ref(x, mask, lhm, p, num_heads, eps=1e-5):
    B, S, D = x.shape
    hd = D // num_heads
    scale = hd ** -0.5
    q = (x @ p["q_w"].T + p["q_b"]) * scale
    k = x @ p["k_w"].T + p["k_b"]
    v = x @ p["v_w"].T + p["v_b"]

    def split(t):
        return t.reshape(B, S, num_heads, hd).transpose(0, 2, 1, 3)

    qh, kh, vh = split(q), split(k), split(v)
    scores = jnp.einsum("bhqd,bhkd->bhqk", qh, kh) + mask
    probs = jax.nn.softmax(scores, axis=-1)
    probs = probs * lhm.reshape(1, num_heads, 1, 1)
    ctx = jnp.einsum("bhqk,bhkd->bhqd", probs, vh)
    ctx = ctx.transpose(0, 2, 1, 3).reshape(B, S, D)
    attn = ctx @ p["o_w"].T + p["o_b"]

    h = _layer_norm_ref(x + attn, p["ln1_g"], p["ln1_b"], eps)
    f = jax.nn.gelu(h @ p["fc1_w"].T + p["fc1_b"], approximate=True)
    f = f @ p["fc2_w"].T + p["fc2_b"]
    return _layer_norm_ref(h + f, p["ln2_g"], p["ln2_b"], eps)


if __name__ == "__main__":
    B, S, D = 2, 8, 32
    num_heads, F = 4, 64

    key = jax.random.PRNGKey(0)
    keys = jax.random.split(key, 18)

    def w(k, shape, scale):
        return jax.random.normal(k, shape, jnp.float32) * scale

    params = {
        "q_w": w(keys[0], (D, D), D ** -0.5), "q_b": w(keys[1], (D,), 0.02),
        "k_w": w(keys[2], (D, D), D ** -0.5), "k_b": w(keys[3], (D,), 0.02),
        "v_w": w(keys[4], (D, D), D ** -0.5), "v_b": w(keys[5], (D,), 0.02),
        "o_w": w(keys[6], (D, D), D ** -0.5), "o_b": w(keys[7], (D,), 0.02),
        "ln1_g": 1.0 + w(keys[8], (D,), 0.02), "ln1_b": w(keys[9], (D,), 0.02),
        "fc1_w": w(keys[10], (F, D), D ** -0.5), "fc1_b": w(keys[11], (F,), 0.02),
        "fc2_w": w(keys[12], (D, F), F ** -0.5), "fc2_b": w(keys[13], (D,), 0.02),
        "ln2_g": 1.0 + w(keys[14], (D,), 0.02), "ln2_b": w(keys[15], (D,), 0.02),
    }
    x = jax.random.normal(keys[16], (B, S, D), jnp.float32)

    # Additive attention mask (batch 1 has its last two key positions padded out).
    mask = jnp.zeros((B, 1, S, S), jnp.float32)
    mask = mask.at[1, :, :, S - 2:].set(-1e9)
    layer_head_mask = jnp.array([1.0, 0.5, 1.0, 0.25], jnp.float32)

    out = bart_encoder_layer_pallas(x, mask, layer_head_mask, params,
                                    num_heads=num_heads)
    out = jax.block_until_ready(out)

    ref = bart_encoder_layer_ref(x, mask, layer_head_mask, params, num_heads)
    assert out.shape == (B, S, D)
    err = float(jnp.max(jnp.abs(out - ref)))
    assert jnp.allclose(out, ref, atol=2e-4, rtol=2e-4), f"mismatch vs reference: {err}"

    print("KERNEL_OK")
</pallas_src>

<mosaic_0001>
module attributes {stable_mosaic.version = 11 : i64} {
  func.func @_encoder_layer_kernel(%arg0: i32, %arg1: memref<1x8x32xf32, #tpu.memory_space<vmem>>, %arg2: memref<1x1x8x8xf32, #tpu.memory_space<vmem>>, %arg3: memref<4xf32, #tpu.memory_space<smem>>, %arg4: memref<4x32x8xf32, #tpu.memory_space<vmem>>, %arg5: memref<4x1x8xf32, #tpu.memory_space<vmem>>, %arg6: memref<4x32x8xf32, #tpu.memory_space<vmem>>, %arg7: memref<4x1x8xf32, #tpu.memory_space<vmem>>, %arg8: memref<4x32x8xf32, #tpu.memory_space<vmem>>, %arg9: memref<4x1x8xf32, #tpu.memory_space<vmem>>, %arg10: memref<4x8x32xf32, #tpu.memory_space<vmem>>, %arg11: memref<1x32xf32, #tpu.memory_space<vmem>>, %arg12: memref<1x32xf32, #tpu.memory_space<vmem>>, %arg13: memref<1x32xf32, #tpu.memory_space<vmem>>, %arg14: memref<32x64xf32, #tpu.memory_space<vmem>>, %arg15: memref<1x64xf32, #tpu.memory_space<vmem>>, %arg16: memref<64x32xf32, #tpu.memory_space<vmem>>, %arg17: memref<1x32xf32, #tpu.memory_space<vmem>>, %arg18: memref<1x32xf32, #tpu.memory_space<vmem>>, %arg19: memref<1x32xf32, #tpu.memory_space<vmem>>, %arg20: memref<1x8x32xf32, #tpu.memory_space<vmem>>) attributes {dimension_semantics = [#tpu.dimension_semantics<parallel>], iteration_bounds = array<i64: 2>, scalar_prefetch = 0 : i64, scratch_operands = 0 : i64, tpu.core_type = #tpu.core_type<tc>, window_params = [{transform_indices = @transform_0, window_bounds = array<i64: 1, 8, 32>}, {transform_indices = @transform_1, window_bounds = array<i64: 1, 1, 8, 8>}, {transform_indices = @transform_2, window_bounds = array<i64: 4>}, {pipeline_mode = #tpu.pipeline_mode<synchronous>, transform_indices = @transform_3, window_bounds = array<i64: 4, 32, 8>}, {pipeline_mode = #tpu.pipeline_mode<synchronous>, transform_indices = @transform_4, window_bounds = array<i64: 4, 1, 8>}, {pipeline_mode = #tpu.pipeline_mode<synchronous>, transform_indices = @transform_5, window_bounds = array<i64: 4, 32, 8>}, {pipeline_mode = #tpu.pipeline_mode<synchronous>, transform_indices = @transform_6, window_bounds = array<i64: 4, 1, 8>}, {pipeline_mode = #tpu.pipeline_mode<synchronous>, transform_indices = @transform_7, window_bounds = array<i64: 4, 32, 8>}, {pipeline_mode = #tpu.pipeline_mode<synchronous>, transform_indices = @transform_8, window_bounds = array<i64: 4, 1, 8>}, {pipeline_mode = #tpu.pipeline_mode<synchronous>, transform_indices = @transform_9, window_bounds = array<i64: 4, 8, 32>}, {pipeline_mode = #tpu.pipeline_mode<synchronous>, transform_indices = @transform_10, window_bounds = array<i64: 1, 32>}, {pipeline_mode = #tpu.pipeline_mode<synchronous>, transform_indices = @transform_11, window_bounds = array<i64: 1, 32>}, {pipeline_mode = #tpu.pipeline_mode<synchronous>, transform_indices = @transform_12, window_bounds = array<i64: 1, 32>}, {pipeline_mode = #tpu.pipeline_mode<synchronous>, transform_indices = @transform_13, window_bounds = array<i64: 32, 64>}, {pipeline_mode = #tpu.pipeline_mode<synchronous>, transform_indices = @transform_14, window_bounds = array<i64: 1, 64>}, {pipeline_mode = #tpu.pipeline_mode<synchronous>, transform_indices = @transform_15, window_bounds = array<i64: 64, 32>}, {pipeline_mode = #tpu.pipeline_mode<synchronous>, transform_indices = @transform_16, window_bounds = array<i64: 1, 32>}, {pipeline_mode = #tpu.pipeline_mode<synchronous>, transform_indices = @transform_17, window_bounds = array<i64: 1, 32>}, {pipeline_mode = #tpu.pipeline_mode<synchronous>, transform_indices = @transform_18, window_bounds = array<i64: 1, 32>}, {transform_indices = @transform_19, window_bounds = array<i64: 1, 8, 32>}]} {
    %c0 = arith.constant 0 : index
    %c0_0 = arith.constant 0 : index
    %c0_1 = arith.constant 0 : index
    %0 = vector.load %arg1[%c0, %c0_0, %c0_1] : memref<1x8x32xf32, #tpu.memory_space<vmem>>, vector<1x8x32xf32>
    %1 = vector.shape_cast %0 : vector<1x8x32xf32> to vector<8x32xf32>
    %c0_2 = arith.constant 0 : index
    %c0_3 = arith.constant 0 : index
    %c0_4 = arith.constant 0 : index
    %c0_5 = arith.constant 0 : index
    %2 = vector.load %arg2[%c0_2, %c0_3, %c0_4, %c0_5] : memref<1x1x8x8xf32, #tpu.memory_space<vmem>>, vector<1x1x8x8xf32>
    %3 = vector.shape_cast %2 : vector<1x1x8x8xf32> to vector<8x8xf32>
    %cst = arith.constant 0.000000e+00 : f32
    %4 = vector.broadcast %cst : f32 to vector<8x32xf32>
    %c0_6 = arith.constant 0 : index
    %c0_7 = arith.constant 0 : index
    %c0_8 = arith.constant 0 : index
    %5 = vector.load %arg4[%c0_6, %c0_7, %c0_8] : memref<4x32x8xf32, #tpu.memory_space<vmem>>, vector<1x32x8xf32>
    %6 = vector.shape_cast %5 : vector<1x32x8xf32> to vector<32x8xf32>
    %cst_9 = arith.constant dense<0.000000e+00> : vector<8x8xf32>
    %7 = tpu.matmul %1, %6, %cst_9 {dimension_numbers = #tpu.dot_dimension_numbers<[1], [0], [0], [1], [0, 0, 1, 1], [], []>} : vector<8x32xf32>, vector<32x8xf32>, vector<8x8xf32> -> vector<8x8xf32>
    %c0_10 = arith.constant 0 : index
    %c0_11 = arith.constant 0 : index
    %c0_12 = arith.constant 0 : index
    %8 = vector.load %arg5[%c0_10, %c0_11, %c0_12] : memref<4x1x8xf32, #tpu.memory_space<vmem>>, vector<1x1x8xf32>
    %9 = vector.shape_cast %8 : vector<1x1x8xf32> to vector<1x8xf32>
    %10 = vector.broadcast %9 : vector<1x8xf32> to vector<8x8xf32>
    %11 = arith.addf %7, %10 : vector<8x8xf32>
    %cst_13 = arith.constant 0.353553385 : f32
    %12 = vector.broadcast %cst_13 : f32 to vector<8x8xf32>
    %13 = arith.mulf %11, %12 : vector<8x8xf32>
    %c0_14 = arith.constant 0 : index
    %c0_15 = arith.constant 0 : index
    %c0_16 = arith.constant 0 : index
    %14 = vector.load %arg6[%c0_14, %c0_15, %c0_16] : memref<4x32x8xf32, #tpu.memory_space<vmem>>, vector<1x32x8xf32>
    %15 = vector.shape_cast %14 : vector<1x32x8xf32> to vector<32x8xf32>
    %cst_17 = arith.constant dense<0.000000e+00> : vector<8x8xf32>
    %16 = tpu.matmul %1, %15, %cst_17 {dimension_numbers = #tpu.dot_dimension_numbers<[1], [0], [0], [1], [0, 0, 1, 1], [], []>} : vector<8x32xf32>, vector<32x8xf32>, vector<8x8xf32> -> vector<8x8xf32>
    %c0_18 = arith.constant 0 : index
    %c0_19 = arith.constant 0 : index
    %c0_20 = arith.constant 0 : index
    %17 = vector.load %arg7[%c0_18, %c0_19, %c0_20] : memref<4x1x8xf32, #tpu.memory_space<vmem>>, vector<1x1x8xf32>
    %18 = vector.shape_cast %17 : vector<1x1x8xf32> to vector<1x8xf32>
    %19 = vector.broadcast %18 : vector<1x8xf32> to vector<8x8xf32>
    %20 = arith.addf %16, %19 : vector<8x8xf32>
    %c0_21 = arith.constant 0 : index
    %c0_22 = arith.constant 0 : index
    %c0_23 = arith.constant 0 : index
    %21 = vector.load %arg8[%c0_21, %c0_22, %c0_23] : memref<4x32x8xf32, #tpu.memory_space<vmem>>, vector<1x32x8xf32>
    %22 = vector.shape_cast %21 : vector<1x32x8xf32> to vector<32x8xf32>
    %cst_24 = arith.constant dense<0.000000e+00> : vector<8x8xf32>
    %23 = tpu.matmul %1, %22, %cst_24 {dimension_numbers = #tpu.dot_dimension_numbers<[1], [0], [0], [1], [0, 0, 1, 1], [], []>} : vector<8x32xf32>, vector<32x8xf32>, vector<8x8xf32> -> vector<8x8xf32>
    %c0_25 = arith.constant 0 : index
    %c0_26 = arith.constant 0 : index
    %c0_27 = arith.constant 0 : index
    %24 = vector.load %arg9[%c0_25, %c0_26, %c0_27] : memref<4x1x8xf32, #tpu.memory_space<vmem>>, vector<1x1x8xf32>
    %25 = vector.shape_cast %24 : vector<1x1x8xf32> to vector<1x8xf32>
    %26 = vector.broadcast %25 : vector<1x8xf32> to vector<8x8xf32>
    %27 = arith.addf %23, %26 : vector<8x8xf32>
    %cst_28 = arith.constant dense<0.000000e+00> : vector<8x8xf32>
    %28 = tpu.matmul %13, %20, %cst_28 {dimension_numbers = #tpu.dot_dimension_numbers<[1], [1], [0], [0], [0, 0, 1, 0], [], []>} : vector<8x8xf32>, vector<8x8xf32>, vector<8x8xf32> -> vector<8x8xf32>
    %29 = arith.addf %28, %3 : vector<8x8xf32>
    %cst_29 = arith.constant dense<0xFF800000> : vector<8xf32>
    %30 = vector.multi_reduction <maximumf>, %29, %cst_29 [1] : vector<8x8xf32> to vector<8xf32>
    %31 = vector.shape_cast %30 : vector<8xf32> to vector<8x1xf32>
    %32 = vector.broadcast %31 : vector<8x1xf32> to vector<8x8xf32>
    %33 = arith.subf %29, %32 : vector<8x8xf32>
    %34 = math.exp %33 : vector<8x8xf32>
    %cst_30 = arith.constant dense<0.000000e+00> : vector<8xf32>
    %35 = vector.multi_reduction <add>, %34, %cst_30 [1] : vector<8x8xf32> to vector<8xf32>
    %36 = vector.shape_cast %35 : vector<8xf32> to vector<8x1xf32>
    %37 = vector.broadcast %36 : vector<8x1xf32> to vector<8x8xf32>
    %38 = arith.divf %34, %37 : vector<8x8xf32>
    %c0_31 = arith.constant 0 : index
    %39 = memref.load %arg3[%c0_31] : memref<4xf32, #tpu.memory_space<smem>>
    %40 = vector.broadcast %39 : f32 to vector<8x8xf32>
    %41 = arith.mulf %38, %40 : vector<8x8xf32>
    %cst_32 = arith.constant dense<0.000000e+00> : vector<8x8xf32>
    %42 = tpu.matmul %41, %27, %cst_32 {dimension_numbers = #tpu.dot_dimension_numbers<[1], [0], [0], [1], [0, 0, 1, 1], [], []>} : vector<8x8xf32>, vector<8x8xf32>, vector<8x8xf32> -> vector<8x8xf32>
    %c0_33 = arith.constant 0 : index
    %c0_34 = arith.constant 0 : index
    %c0_35 = arith.constant 0 : index
    %43 = vector.load %arg10[%c0_33, %c0_34, %c0_35] : memref<4x8x32xf32, #tpu.memory_space<vmem>>, vector<1x8x32xf32>
    %44 = vector.shape_cast %43 : vector<1x8x32xf32> to vector<8x32xf32>
    %cst_36 = arith.constant dense<0.000000e+00> : vector<8x32xf32>
    %45 = tpu.matmul %42, %44, %cst_36 {dimension_numbers = #tpu.dot_dimension_numbers<[1], [0], [0], [1], [0, 0, 1, 1], [], []>} : vector<8x8xf32>, vector<8x32xf32>, vector<8x32xf32> -> vector<8x32xf32>
    %46 = arith.addf %4, %45 : vector<8x32xf32>
    %c1 = arith.constant 1 : index
    %c0_37 = arith.constant 0 : index
    %c0_38 = arith.constant 0 : index
    %47 = vector.load %arg4[%c1, %c0_37, %c0_38] : memref<4x32x8xf32, #tpu.memory_space<vmem>>, vector<1x32x8xf32>
    %48 = vector.shape_cast %47 : vector<1x32x8xf32> to vector<32x8xf32>
    %cst_39 = arith.constant dense<0.000000e+00> : vector<8x8xf32>
    %49 = tpu.matmul %1, %48, %cst_39 {dimension_numbers = #tpu.dot_dimension_numbers<[1], [0], [0], [1], [0, 0, 1, 1], [], []>} : vector<8x32xf32>, vector<32x8xf32>, vector<8x8xf32> -> vector<8x8xf32>
    %c1_40 = arith.constant 1 : index
    %c0_41 = arith.constant 0 : index
    %c0_42 = arith.constant 0 : index
    %50 = vector.load %arg5[%c1_40, %c0_41, %c0_42] : memref<4x1x8xf32, #tpu.memory_space<vmem>>, vector<1x1x8xf32>
    %51 = vector.shape_cast %50 : vector<1x1x8xf32> to vector<1x8xf32>
    %52 = vector.broadcast %51 : vector<1x8xf32> to vector<8x8xf32>
    %53 = arith.addf %49, %52 : vector<8x8xf32>
    %cst_43 = arith.constant 0.353553385 : f32
    %54 = vector.broadcast %cst_43 : f32 to vector<8x8xf32>
    %55 = arith.mulf %53, %54 : vector<8x8xf32>
    %c1_44 = arith.constant 1 : index
    %c0_45 = arith.constant 0 : index
    %c0_46 = arith.constant 0 : index
    %56 = vector.load %arg6[%c1_44, %c0_45, %c0_46] : memref<4x32x8xf32, #tpu.memory_space<vmem>>, vector<1x32x8xf32>
    %57 = vector.shape_cast %56 : vector<1x32x8xf32> to vector<32x8xf32>
    %cst_47 = arith.constant dense<0.000000e+00> : vector<8x8xf32>
    %58 = tpu.matmul %1, %57, %cst_47 {dimension_numbers = #tpu.dot_dimension_numbers<[1], [0], [0], [1], [0, 0, 1, 1], [], []>} : vector<8x32xf32>, vector<32x8xf32>, vector<8x8xf32> -> vector<8x8xf32>
    %c1_48 = arith.constant 1 : index
    %c0_49 = arith.constant 0 : index
    %c0_50 = arith.constant 0 : index
    %59 = vector.load %arg7[%c1_48, %c0_49, %c0_50] : memref<4x1x8xf32, #tpu.memory_space<vmem>>, vector<1x1x8xf32>
    %60 = vector.shape_cast %59 : vector<1x1x8xf32> to vector<1x8xf32>
    %61 = vector.broadcast %60 : vector<1x8xf32> to vector<8x8xf32>
    %62 = arith.addf %58, %61 : vector<8x8xf32>
    %c1_51 = arith.constant 1 : index
    %c0_52 = arith.constant 0 : index
    %c0_53 = arith.constant 0 : index
    %63 = vector.load %arg8[%c1_51, %c0_52, %c0_53] : memref<4x32x8xf32, #tpu.memory_space<vmem>>, vector<1x32x8xf32>
    %64 = vector.shape_cast %63 : vector<1x32x8xf32> to vector<32x8xf32>
    %cst_54 = arith.constant dense<0.000000e+00> : vector<8x8xf32>
    %65 = tpu.matmul %1, %64, %cst_54 {dimension_numbers = #tpu.dot_dimension_numbers<[1], [0], [0], [1], [0, 0, 1, 1], [], []>} : vector<8x32xf32>, vector<32x8xf32>, vector<8x8xf32> -> vector<8x8xf32>
    %c1_55 = arith.constant 1 : index
    %c0_56 = arith.constant 0 : index
    %c0_57 = arith.constant 0 : index
    %66 = vector.load %arg9[%c1_55, %c0_56, %c0_57] : memref<4x1x8xf32, #tpu.memory_space<vmem>>, vector<1x1x8xf32>
    %67 = vector.shape_cast %66 : vector<1x1x8xf32> to vector<1x8xf32>
    %68 = vector.broadcast %67 : vector<1x8xf32> to vector<8x8xf32>
    %69 = arith.addf %65, %68 : vector<8x8xf32>
    %cst_58 = arith.constant dense<0.000000e+00> : vector<8x8xf32>
    %70 = tpu.matmul %55, %62, %cst_58 {dimension_numbers = #tpu.dot_dimension_numbers<[1], [1], [0], [0], [0, 0, 1, 0], [], []>} : vector<8x8xf32>, vector<8x8xf32>, vector<8x8xf32> -> vector<8x8xf32>
    %71 = arith.addf %70, %3 : vector<8x8xf32>
    %cst_59 = arith.constant dense<0xFF800000> : vector<8xf32>
    %72 = vector.multi_reduction <maximumf>, %71, %cst_59 [1] : vector<8x8xf32> to vector<8xf32>
    %73 = vector.shape_cast %72 : vector<8xf32> to vector<8x1xf32>
    %74 = vector.broadcast %73 : vector<8x1xf32> to vector<8x8xf32>
    %75 = arith.subf %71, %74 : vector<8x8xf32>
    %76 = math.exp %75 : vector<8x8xf32>
    %cst_60 = arith.constant dense<0.000000e+00> : vector<8xf32>
    %77 = vector.multi_reduction <add>, %76, %cst_60 [1] : vector<8x8xf32> to vector<8xf32>
    %78 = vector.shape_cast %77 : vector<8xf32> to vector<8x1xf32>
    %79 = vector.broadcast %78 : vector<8x1xf32> to vector<8x8xf32>
    %80 = arith.divf %76, %79 : vector<8x8xf32>
    %c1_61 = arith.constant 1 : index
    %81 = memref.load %arg3[%c1_61] : memref<4xf32, #tpu.memory_space<smem>>
    %82 = vector.broadcast %81 : f32 to vector<8x8xf32>
    %83 = arith.mulf %80, %82 : vector<8x8xf32>
    %cst_62 = arith.constant dense<0.000000e+00> : vector<8x8xf32>
    %84 = tpu.matmul %83, %69, %cst_62 {dimension_numbers = #tpu.dot_dimension_numbers<[1], [0], [0], [1], [0, 0, 1, 1], [], []>} : vector<8x8xf32>, vector<8x8xf32>, vector<8x8xf32> -> vector<8x8xf32>
    %c1_63 = arith.constant 1 : index
    %c0_64 = arith.constant 0 : index
    %c0_65 = arith.constant 0 : index
    %85 = vector.load %arg10[%c1_63, %c0_64, %c0_65] : memref<4x8x32xf32, #tpu.memory_space<vmem>>, vector<1x8x32xf32>
    %86 = vector.shape_cast %85 : vector<1x8x32xf32> to vector<8x32xf32>
    %cst_66 = arith.constant dense<0.000000e+00> : vector<8x32xf32>
    %87 = tpu.matmul %84, %86, %cst_66 {dimension_numbers = #tpu.dot_dimension_numbers<[1], [0], [0], [1], [0, 0, 1, 1], [], []>} : vector<8x8xf32>, vector<8x32xf32>, vector<8x32xf32> -> vector<8x32xf32>
    %88 = arith.addf %46, %87 : vector<8x32xf32>
    %c2 = arith.constant 2 : index
    %c0_67 = arith.constant 0 : index
    %c0_68 = arith.constant 0 : index
    %89 = vector.load %arg4[%c2, %c0_67, %c0_68] : memref<4x32x8xf32, #tpu.memory_space<vmem>>, vector<1x32x8xf32>
    %90 = vector.shape_cast %89 : vector<1x32x8xf32> to vector<32x8xf32>
    %cst_69 = arith.constant dense<0.000000e+00> : vector<8x8xf32>
    %91 = tpu.matmul %1, %90, %cst_69 {dimension_numbers = #tpu.dot_dimension_numbers<[1], [0], [0], [1], [0, 0, 1, 1], [], []>} : vector<8x32xf32>, vector<32x8xf32>, vector<8x8xf32> -> vector<8x8xf32>
    %c2_70 = arith.constant 2 : index
    %c0_71 = arith.constant 0 : index
    %c0_72 = arith.constant 0 : index
    %92 = vector.load %arg5[%c2_70, %c0_71, %c0_72] : memref<4x1x8xf32, #tpu.memory_space<vmem>>, vector<1x1x8xf32>
    %93 = vector.shape_cast %92 : vector<1x1x8xf32> to vector<1x8xf32>
    %94 = vector.broadcast %93 : vector<1x8xf32> to vector<8x8xf32>
    %95 = arith.addf %91, %94 : vector<8x8xf32>
    %cst_73 = arith.constant 0.353553385 : f32
    %96 = vector.broadcast %cst_73 : f32 to vector<8x8xf32>
    %97 = arith.mulf %95, %96 : vector<8x8xf32>
    %c2_74 = arith.constant 2 : index
    %c0_75 = arith.constant 0 : index
    %c0_76 = arith.constant 0 : index
    %98 = vector.load %arg6[%c2_74, %c0_75, %c0_76] : memref<4x32x8xf32, #tpu.memory_space<vmem>>, vector<1x32x8xf32>
    %99 = vector.shape_cast %98 : vector<1x32x8xf32> to vector<32x8xf32>
    %cst_77 = arith.constant dense<0.000000e+00> : vector<8x8xf32>
    %100 = tpu.matmul %1, %99, %cst_77 {dimension_numbers = #tpu.dot_dimension_numbers<[1], [0], [0], [1], [0, 0, 1, 1], [], []>} : vector<8x32xf32>, vector<32x8xf32>, vector<8x8xf32> -> vector<8x8xf32>
    %c2_78 = arith.constant 2 : index
    %c0_79 = arith.constant 0 : index
    %c0_80 = arith.constant 0 : index
    %101 = vector.load %arg7[%c2_78, %c0_79, %c0_80] : memref<4x1x8xf32, #tpu.memory_space<vmem>>, vector<1x1x8xf32>
    %102 = vector.shape_cast %101 : vector<1x1x8xf32> to vector<1x8xf32>
    %103 = vector.broadcast %102 : vector<1x8xf32> to vector<8x8xf32>
    %104 = arith.addf %100, %103 : vector<8x8xf32>
    %c2_81 = arith.constant 2 : index
    %c0_82 = arith.constant 0 : index
    %c0_83 = arith.constant 0 : index
    %105 = vector.load %arg8[%c2_81, %c0_82, %c0_83] : memref<4x32x8xf32, #tpu.memory_space<vmem>>, vector<1x32x8xf32>
    %106 = vector.shape_cast %105 : vector<1x32x8xf32> to vector<32x8xf32>
    %cst_84 = arith.constant dense<0.000000e+00> : vector<8x8xf32>
    %107 = tpu.matmul %1, %106, %cst_84 {dimension_numbers = #tpu.dot_dimension_numbers<[1], [0], [0], [1], [0, 0, 1, 1], [], []>} : vector<8x32xf32>, vector<32x8xf32>, vector<8x8xf32> -> vector<8x8xf32>
    %c2_85 = arith.constant 2 : index
    %c0_86 = arith.constant 0 : index
    %c0_87 = arith.constant 0 : index
    %108 = vector.load %arg9[%c2_85, %c0_86, %c0_87] : memref<4x1x8xf32, #tpu.memory_space<vmem>>, vector<1x1x8xf32>
    %109 = vector.shape_cast %108 : vector<1x1x8xf32> to vector<1x8xf32>
    %110 = vector.broadcast %109 : vector<1x8xf32> to vector<8x8xf32>
    %111 = arith.addf %107, %110 : vector<8x8xf32>
    %cst_88 = arith.constant dense<0.000000e+00> : vector<8x8xf32>
    %112 = tpu.matmul %97, %104, %cst_88 {dimension_numbers = #tpu.dot_dimension_numbers<[1], [1], [0], [0], [0, 0, 1, 0], [], []>} : vector<8x8xf32>, vector<8x8xf32>, vector<8x8xf32> -> vector<8x8xf32>
    %113 = arith.addf %112, %3 : vector<8x8xf32>
    %cst_89 = arith.constant dense<0xFF800000> : vector<8xf32>
    %114 = vector.multi_reduction <maximumf>, %113, %cst_89 [1] : vector<8x8xf32> to vector<8xf32>
    %115 = vector.shape_cast %114 : vector<8xf32> to vector<8x1xf32>
    %116 = vector.broadcast %115 : vector<8x1xf32> to vector<8x8xf32>
    %117 = arith.subf %113, %116 : vector<8x8xf32>
    %118 = math.exp %117 : vector<8x8xf32>
    %cst_90 = arith.constant dense<0.000000e+00> : vector<8xf32>
    %119 = vector.multi_reduction <add>, %118, %cst_90 [1] : vector<8x8xf32> to vector<8xf32>
    %120 = vector.shape_cast %119 : vector<8xf32> to vector<8x1xf32>
    %121 = vector.broadcast %120 : vector<8x1xf32> to vector<8x8xf32>
    %122 = arith.divf %118, %121 : vector<8x8xf32>
    %c2_91 = arith.constant 2 : index
    %123 = memref.load %arg3[%c2_91] : memref<4xf32, #tpu.memory_space<smem>>
    %124 = vector.broadcast %123 : f32 to vector<8x8xf32>
    %125 = arith.mulf %122, %124 : vector<8x8xf32>
    %cst_92 = arith.constant dense<0.000000e+00> : vector<8x8xf32>
    %126 = tpu.matmul %125, %111, %cst_92 {dimension_numbers = #tpu.dot_dimension_numbers<[1], [0], [0], [1], [0, 0, 1, 1], [], []>} : vector<8x8xf32>, vector<8x8xf32>, vector<8x8xf32> -> vector<8x8xf32>
    %c2_93 = arith.constant 2 : index
    %c0_94 = arith.constant 0 : index
    %c0_95 = arith.constant 0 : index
    %127 = vector.load %arg10[%c2_93, %c0_94, %c0_95] : memref<4x8x32xf32, #tpu.memory_space<vmem>>, vector<1x8x32xf32>
    %128 = vector.shape_cast %127 : vector<1x8x32xf32> to vector<8x32xf32>
    %cst_96 = arith.constant dense<0.000000e+00> : vector<8x32xf32>
    %129 = tpu.matmul %126, %128, %cst_96 {dimension_numbers = #tpu.dot_dimension_numbers<[1], [0], [0], [1], [0, 0, 1, 1], [], []>} : vector<8x8xf32>, vector<8x32xf32>, vector<8x32xf32> -> vector<8x32xf32>
    %130 = arith.addf %88, %129 : vector<8x32xf32>
    %c3 = arith.constant 3 : index
    %c0_97 = arith.constant 0 : index
    %c0_98 = arith.constant 0 : index
    %131 = vector.load %arg4[%c3, %c0_97, %c0_98] : memref<4x32x8xf32, #tpu.memory_space<vmem>>, vector<1x32x8xf32>
    %132 = vector.shape_cast %131 : vector<1x32x8xf32> to vector<32x8xf32>
    %cst_99 = arith.constant dense<0.000000e+00> : vector<8x8xf32>
    %133 = tpu.matmul %1, %132, %cst_99 {dimension_numbers = #tpu.dot_dimension_numbers<[1], [0], [0], [1], [0, 0, 1, 1], [], []>} : vector<8x32xf32>, vector<32x8xf32>, vector<8x8xf32> -> vector<8x8xf32>
    %c3_100 = arith.constant 3 : index
    %c0_101 = arith.constant 0 : index
    %c0_102 = arith.constant 0 : index
    %134 = vector.load %arg5[%c3_100, %c0_101, %c0_102] : memref<4x1x8xf32, #tpu.memory_space<vmem>>, vector<1x1x8xf32>
    %135 = vector.shape_cast %134 : vector<1x1x8xf32> to vector<1x8xf32>
    %136 = vector.broadcast %135 : vector<1x8xf32> to vector<8x8xf32>
    %137 = arith.addf %133, %136 : vector<8x8xf32>
    %cst_103 = arith.constant 0.353553385 : f32
    %138 = vector.broadcast %cst_103 : f32 to vector<8x8xf32>
    %139 = arith.mulf %137, %138 : vector<8x8xf32>
    %c3_104 = arith.constant 3 : index
    %c0_105 = arith.constant 0 : index
    %c0_106 = arith.constant 0 : index
    %140 = vector.load %arg6[%c3_104, %c0_105, %c0_106] : memref<4x32x8xf32, #tpu.memory_space<vmem>>, vector<1x32x8xf32>
    %141 = vector.shape_cast %140 : vector<1x32x8xf32> to vector<32x8xf32>
    %cst_107 = arith.constant dense<0.000000e+00> : vector<8x8xf32>
    %142 = tpu.matmul %1, %141, %cst_107 {dimension_numbers = #tpu.dot_dimension_numbers<[1], [0], [0], [1], [0, 0, 1, 1], [], []>} : vector<8x32xf32>, vector<32x8xf32>, vector<8x8xf32> -> vector<8x8xf32>
    %c3_108 = arith.constant 3 : index
    %c0_109 = arith.constant 0 : index
    %c0_110 = arith.constant 0 : index
    %143 = vector.load %arg7[%c3_108, %c0_109, %c0_110] : memref<4x1x8xf32, #tpu.memory_space<vmem>>, vector<1x1x8xf32>
    %144 = vector.shape_cast %143 : vector<1x1x8xf32> to vector<1x8xf32>
    %145 = vector.broadcast %144 : vector<1x8xf32> to vector<8x8xf32>
    %146 = arith.addf %142, %145 : vector<8x8xf32>
    %c3_111 = arith.constant 3 : index
    %c0_112 = arith.constant 0 : index
    %c0_113 = arith.constant 0 : index
    %147 = vector.load %arg8[%c3_111, %c0_112, %c0_113] : memref<4x32x8xf32, #tpu.memory_space<vmem>>, vector<1x32x8xf32>
    %148 = vector.shape_cast %147 : vector<1x32x8xf32> to vector<32x8xf32>
    %cst_114 = arith.constant dense<0.000000e+00> : vector<8x8xf32>
    %149 = tpu.matmul %1, %148, %cst_114 {dimension_numbers = #tpu.dot_dimension_numbers<[1], [0], [0], [1], [0, 0, 1, 1], [], []>} : vector<8x32xf32>, vector<32x8xf32>, vector<8x8xf32> -> vector<8x8xf32>
    %c3_115 = arith.constant 3 : index
    %c0_116 = arith.constant 0 : index
    %c0_117 = arith.constant 0 : index
    %150 = vector.load %arg9[%c3_115, %c0_116, %c0_117] : memref<4x1x8xf32, #tpu.memory_space<vmem>>, vector<1x1x8xf32>
    %151 = vector.shape_cast %150 : vector<1x1x8xf32> to vector<1x8xf32>
    %152 = vector.broadcast %151 : vector<1x8xf32> to vector<8x8xf32>
    %153 = arith.addf %149, %152 : vector<8x8xf32>
    %cst_118 = arith.constant dense<0.000000e+00> : vector<8x8xf32>
    %154 = tpu.matmul %139, %146, %cst_118 {dimension_numbers = #tpu.dot_dimension_numbers<[1], [1], [0], [0], [0, 0, 1, 0], [], []>} : vector<8x8xf32>, vector<8x8xf32>, vector<8x8xf32> -> vector<8x8xf32>
    %155 = arith.addf %154, %3 : vector<8x8xf32>
    %cst_119 = arith.constant dense<0xFF800000> : vector<8xf32>
    %156 = vector.multi_reduction <maximumf>, %155, %cst_119 [1] : vector<8x8xf32> to vector<8xf32>
    %157 = vector.shape_cast %156 : vector<8xf32> to vector<8x1xf32>
    %158 = vector.broadcast %157 : vector<8x1xf32> to vector<8x8xf32>
    %159 = arith.subf %155, %158 : vector<8x8xf32>
    %160 = math.exp %159 : vector<8x8xf32>
    %cst_120 = arith.constant dense<0.000000e+00> : vector<8xf32>
    %161 = vector.multi_reduction <add>, %160, %cst_120 [1] : vector<8x8xf32> to vector<8xf32>
    %162 = vector.shape_cast %161 : vector<8xf32> to vector<8x1xf32>
    %163 = vector.broadcast %162 : vector<8x1xf32> to vector<8x8xf32>
    %164 = arith.divf %160, %163 : vector<8x8xf32>
    %c3_121 = arith.constant 3 : index
    %165 = memref.load %arg3[%c3_121] : memref<4xf32, #tpu.memory_space<smem>>
    %166 = vector.broadcast %165 : f32 to vector<8x8xf32>
    %167 = arith.mulf %164, %166 : vector<8x8xf32>
    %cst_122 = arith.constant dense<0.000000e+00> : vector<8x8xf32>
    %168 = tpu.matmul %167, %153, %cst_122 {dimension_numbers = #tpu.dot_dimension_numbers<[1], [0], [0], [1], [0, 0, 1, 1], [], []>} : vector<8x8xf32>, vector<8x8xf32>, vector<8x8xf32> -> vector<8x8xf32>
    %c3_123 = arith.constant 3 : index
    %c0_124 = arith.constant 0 : index
    %c0_125 = arith.constant 0 : index
    %169 = vector.load %arg10[%c3_123, %c0_124, %c0_125] : memref<4x8x32xf32, #tpu.memory_space<vmem>>, vector<1x8x32xf32>
    %170 = vector.shape_cast %169 : vector<1x8x32xf32> to vector<8x32xf32>
    %cst_126 = arith.constant dense<0.000000e+00> : vector<8x32xf32>
    %171 = tpu.matmul %168, %170, %cst_126 {dimension_numbers = #tpu.dot_dimension_numbers<[1], [0], [0], [1], [0, 0, 1, 1], [], []>} : vector<8x8xf32>, vector<8x32xf32>, vector<8x32xf32> -> vector<8x32xf32>
    %172 = arith.addf %130, %171 : vector<8x32xf32>
    %c0_127 = arith.constant 0 : index
    %c0_128 = arith.constant 0 : index
    %173 = vector.load %arg11[%c0_127, %c0_128] : memref<1x32xf32, #tpu.memory_space<vmem>>, vector<1x32xf32>
    %174 = vector.broadcast %173 : vector<1x32xf32> to vector<8x32xf32>
    %175 = arith.addf %172, %174 : vector<8x32xf32>
    %176 = arith.addf %1, %175 : vector<8x32xf32>
    %cst_129 = arith.constant dense<0.000000e+00> : vector<8xf32>
    %177 = vector.multi_reduction <add>, %176, %cst_129 [1] : vector<8x32xf32> to vector<8xf32>
    %178 = vector.shape_cast %177 : vector<8xf32> to vector<8x1xf32>
    %cst_130 = arith.constant 3.200000e+01 : f32
    %179 = vector.broadcast %cst_130 : f32 to vector<8x1xf32>
    %180 = arith.divf %178, %179 : vector<8x1xf32>
    %181 = vector.broadcast %180 : vector<8x1xf32> to vector<8x32xf32>
    %182 = arith.subf %176, %181 : vector<8x32xf32>
    %183 = arith.mulf %182, %182 : vector<8x32xf32>
    %cst_131 = arith.constant dense<0.000000e+00> : vector<8xf32>
    %184 = vector.multi_reduction <add>, %183, %cst_131 [1] : vector<8x32xf32> to vector<8xf32>
    %185 = vector.shape_cast %184 : vector<8xf32> to vector<8x1xf32>
    %cst_132 = arith.constant 3.200000e+01 : f32
    %186 = vector.broadcast %cst_132 : f32 to vector<8x1xf32>
    %187 = arith.divf %185, %186 : vector<8x1xf32>
    %188 = vector.broadcast %180 : vector<8x1xf32> to vector<8x32xf32>
    %189 = arith.subf %176, %188 : vector<8x32xf32>
    %cst_133 = arith.constant 9.99999974E-6 : f32
    %190 = vector.broadcast %cst_133 : f32 to vector<8x1xf32>
    %191 = arith.addf %187, %190 : vector<8x1xf32>
    %192 = math.rsqrt %191 : vector<8x1xf32>
    %193 = vector.broadcast %192 : vector<8x1xf32> to vector<8x32xf32>
    %194 = arith.mulf %189, %193 : vector<8x32xf32>
    %c0_134 = arith.constant 0 : index
    %c0_135 = arith.constant 0 : index
    %195 = vector.load %arg12[%c0_134, %c0_135] : memref<1x32xf32, #tpu.memory_space<vmem>>, vector<1x32xf32>
    %196 = vector.broadcast %195 : vector<1x32xf32> to vector<8x32xf32>
    %197 = arith.mulf %194, %196 : vector<8x32xf32>
    %c0_136 = arith.constant 0 : index
    %c0_137 = arith.constant 0 : index
    %198 = vector.load %arg13[%c0_136, %c0_137] : memref<1x32xf32, #tpu.memory_space<vmem>>, vector<1x32xf32>
    %199 = vector.broadcast %198 : vector<1x32xf32> to vector<8x32xf32>
    %200 = arith.addf %197, %199 : vector<8x32xf32>
    %c0_138 = arith.constant 0 : index
    %c0_139 = arith.constant 0 : index
    %201 = vector.load %arg14[%c0_138, %c0_139] : memref<32x64xf32, #tpu.memory_space<vmem>>, vector<32x64xf32>
    %cst_140 = arith.constant dense<0.000000e+00> : vector<8x64xf32>
    %202 = tpu.matmul %200, %201, %cst_140 {dimension_numbers = #tpu.dot_dimension_numbers<[1], [0], [0], [1], [0, 0, 1, 1], [], []>} : vector<8x32xf32>, vector<32x64xf32>, vector<8x64xf32> -> vector<8x64xf32>
    %c0_141 = arith.constant 0 : index
    %c0_142 = arith.constant 0 : index
    %203 = vector.load %arg15[%c0_141, %c0_142] : memref<1x64xf32, #tpu.memory_space<vmem>>, vector<1x64xf32>
    %204 = vector.broadcast %203 : vector<1x64xf32> to vector<8x64xf32>
    %205 = arith.addf %202, %204 : vector<8x64xf32>
    %206 = arith.mulf %205, %205 : vector<8x64xf32>
    %207 = arith.mulf %205, %206 : vector<8x64xf32>
    %cst_143 = arith.constant 4.471500e-02 : f32
    %208 = vector.broadcast %cst_143 : f32 to vector<8x64xf32>
    %209 = arith.mulf %208, %207 : vector<8x64xf32>
    %210 = arith.addf %205, %209 : vector<8x64xf32>
    %cst_144 = arith.constant 0.797884583 : f32
    %211 = vector.broadcast %cst_144 : f32 to vector<8x64xf32>
    %212 = arith.mulf %211, %210 : vector<8x64xf32>
    %213 = math.tanh %212 : vector<8x64xf32>
    %cst_145 = arith.constant 1.000000e+00 : f32
    %214 = vector.broadcast %cst_145 : f32 to vector<8x64xf32>
    %215 = arith.addf %214, %213 : vector<8x64xf32>
    %cst_146 = arith.constant 5.000000e-01 : f32
    %216 = vector.broadcast %cst_146 : f32 to vector<8x64xf32>
    %217 = arith.mulf %216, %215 : vector<8x64xf32>
    %218 = arith.mulf %205, %217 : vector<8x64xf32>
    %c0_147 = arith.constant 0 : index
    %c0_148 = arith.constant 0 : index
    %219 = vector.load %arg16[%c0_147, %c0_148] : memref<64x32xf32, #tpu.memory_space<vmem>>, vector<64x32xf32>
    %cst_149 = arith.constant dense<0.000000e+00> : vector<8x32xf32>
    %220 = tpu.matmul %218, %219, %cst_149 {dimension_numbers = #tpu.dot_dimension_numbers<[1], [0], [0], [1], [0, 0, 1, 1], [], []>} : vector<8x64xf32>, vector<64x32xf32>, vector<8x32xf32> -> vector<8x32xf32>
    %c0_150 = arith.constant 0 : index
    %c0_151 = arith.constant 0 : index
    %221 = vector.load %arg17[%c0_150, %c0_151] : memref<1x32xf32, #tpu.memory_space<vmem>>, vector<1x32xf32>
    %222 = vector.broadcast %221 : vector<1x32xf32> to vector<8x32xf32>
    %223 = arith.addf %220, %222 : vector<8x32xf32>
    %224 = arith.addf %200, %223 : vector<8x32xf32>
    %cst_152 = arith.constant dense<0.000000e+00> : vector<8xf32>
    %225 = vector.multi_reduction <add>, %224, %cst_152 [1] : vector<8x32xf32> to vector<8xf32>
    %226 = vector.shape_cast %225 : vector<8xf32> to vector<8x1xf32>
    %cst_153 = arith.constant 3.200000e+01 : f32
    %227 = vector.broadcast %cst_153 : f32 to vector<8x1xf32>
    %228 = arith.divf %226, %227 : vector<8x1xf32>
    %229 = vector.broadcast %228 : vector<8x1xf32> to vector<8x32xf32>
    %230 = arith.subf %224, %229 : vector<8x32xf32>
    %231 = arith.mulf %230, %230 : vector<8x32xf32>
    %cst_154 = arith.constant dense<0.000000e+00> : vector<8xf32>
    %232 = vector.multi_reduction <add>, %231, %cst_154 [1] : vector<8x32xf32> to vector<8xf32>
    %233 = vector.shape_cast %232 : vector<8xf32> to vector<8x1xf32>
    %cst_155 = arith.constant 3.200000e+01 : f32
    %234 = vector.broadcast %cst_155 : f32 to vector<8x1xf32>
    %235 = arith.divf %233, %234 : vector<8x1xf32>
    %236 = vector.broadcast %228 : vector<8x1xf32> to vector<8x32xf32>
    %237 = arith.subf %224, %236 : vector<8x32xf32>
    %cst_156 = arith.constant 9.99999974E-6 : f32
    %238 = vector.broadcast %cst_156 : f32 to vector<8x1xf32>
    %239 = arith.addf %235, %238 : vector<8x1xf32>
    %240 = math.rsqrt %239 : vector<8x1xf32>
    %241 = vector.broadcast %240 : vector<8x1xf32> to vector<8x32xf32>
    %242 = arith.mulf %237, %241 : vector<8x32xf32>
    %c0_157 = arith.constant 0 : index
    %c0_158 = arith.constant 0 : index
    %243 = vector.load %arg18[%c0_157, %c0_158] : memref<1x32xf32, #tpu.memory_space<vmem>>, vector<1x32xf32>
    %244 = vector.broadcast %243 : vector<1x32xf32> to vector<8x32xf32>
    %245 = arith.mulf %242, %244 : vector<8x32xf32>
    %c0_159 = arith.constant 0 : index
    %c0_160 = arith.constant 0 : index
    %246 = vector.load %arg19[%c0_159, %c0_160] : memref<1x32xf32, #tpu.memory_space<vmem>>, vector<1x32xf32>
    %247 = vector.broadcast %246 : vector<1x32xf32> to vector<8x32xf32>
    %248 = arith.addf %245, %247 : vector<8x32xf32>
    %c0_161 = arith.constant 0 : index
    %c0_162 = arith.constant 0 : index
    %c0_163 = arith.constant 0 : index
    %249 = vector.load %arg20[%c0_161, %c0_162, %c0_163] : memref<1x8x32xf32, #tpu.memory_space<vmem>>, vector<1x8x32xf32>
    %250 = vector.shape_cast %249 : vector<1x8x32xf32> to vector<8x32xf32>
    %251 = vector.shape_cast %248 : vector<8x32xf32> to vector<1x8x32xf32>
    tpu.vector_store %arg20[%c0_161, %c0_162, %c0_163], %251 {strides = array<i32>} : memref<1x8x32xf32, #tpu.memory_space<vmem>>, vector<1x8x32xf32>,
    return
  }
  func.func @transform_0(%arg0: i32) -> (i32, i32, i32) {
    %c0_i32 = arith.constant 0 : i32
    %c0_i32_0 = arith.constant 0 : i32
    %c0_i32_1 = arith.constant 0 : i32
    return %arg0, %c0_i32, %c0_i32_0 : i32, i32, i32
  }
  func.func @transform_1(%arg0: i32) -> (i32, i32, i32, i32) {
    %c0_i32 = arith.constant 0 : i32
    %c0_i32_0 = arith.constant 0 : i32
    %c0_i32_1 = arith.constant 0 : i32
    %c0_i32_2 = arith.constant 0 : i32
    return %arg0, %c0_i32, %c0_i32_0, %c0_i32_1 : i32, i32, i32, i32
  }
  func.func @transform_2(%arg0: i32) -> i32 {
    %c0_i32 = arith.constant 0 : i32
    %c0_i32_0 = arith.constant 0 : i32
    return %c0_i32 : i32
  }
  func.func @transform_3(%arg0: i32) -> (i32, i32, i32) {
    %c0_i32 = arith.constant 0 : i32
    %c0_i32_0 = arith.constant 0 : i32
    %c0_i32_1 = arith.constant 0 : i32
    %c0_i32_2 = arith.constant 0 : i32
    return %c0_i32, %c0_i32_0, %c0_i32_1 : i32, i32, i32
  }
  func.func @transform_4(%arg0: i32) -> (i32, i32, i32) {
    %c0_i32 = arith.constant 0 : i32
    %c0_i32_0 = arith.constant 0 : i32
    %c0_i32_1 = arith.constant 0 : i32
    %c0_i32_2 = arith.constant 0 : i32
    return %c0_i32, %c0_i32_0, %c0_i32_1 : i32, i32, i32
  }
  func.func @transform_5(%arg0: i32) -> (i32, i32, i32) {
    %c0_i32 = arith.constant 0 : i32
    %c0_i32_0 = arith.constant 0 : i32
    %c0_i32_1 = arith.constant 0 : i32
    %c0_i32_2 = arith.constant 0 : i32
    return %c0_i32, %c0_i32_0, %c0_i32_1 : i32, i32, i32
  }
  func.func @transform_6(%arg0: i32) -> (i32, i32, i32) {
    %c0_i32 = arith.constant 0 : i32
    %c0_i32_0 = arith.constant 0 : i32
    %c0_i32_1 = arith.constant 0 : i32
    %c0_i32_2 = arith.constant 0 : i32
    return %c0_i32, %c0_i32_0, %c0_i32_1 : i32, i32, i32
  }
  func.func @transform_7(%arg0: i32) -> (i32, i32, i32) {
    %c0_i32 = arith.constant 0 : i32
    %c0_i32_0 = arith.constant 0 : i32
    %c0_i32_1 = arith.constant 0 : i32
    %c0_i32_2 = arith.constant 0 : i32
    return %c0_i32, %c0_i32_0, %c0_i32_1 : i32, i32, i32
  }
  func.func @transform_8(%arg0: i32) -> (i32, i32, i32) {
    %c0_i32 = arith.constant 0 : i32
    %c0_i32_0 = arith.constant 0 : i32
    %c0_i32_1 = arith.constant 0 : i32
    %c0_i32_2 = arith.constant 0 : i32
    return %c0_i32, %c0_i32_0, %c0_i32_1 : i32, i32, i32
  }
  func.func @transform_9(%arg0: i32) -> (i32, i32, i32) {
    %c0_i32 = arith.constant 0 : i32
    %c0_i32_0 = arith.constant 0 : i32
    %c0_i32_1 = arith.constant 0 : i32
    %c0_i32_2 = arith.constant 0 : i32
    return %c0_i32, %c0_i32_0, %c0_i32_1 : i32, i32, i32
  }
  func.func @transform_10(%arg0: i32) -> (i32, i32) {
    %c0_i32 = arith.constant 0 : i32
    %c0_i32_0 = arith.constant 0 : i32
    %c0_i32_1 = arith.constant 0 : i32
    return %c0_i32, %c0_i32_0 : i32, i32
  }
  func.func @transform_11(%arg0: i32) -> (i32, i32) {
    %c0_i32 = arith.constant 0 : i32
    %c0_i32_0 = arith.constant 0 : i32
    %c0_i32_1 = arith.constant 0 : i32
    return %c0_i32, %c0_i32_0 : i32, i32
  }
  func.func @transform_12(%arg0: i32) -> (i32, i32) {
    %c0_i32 = arith.constant 0 : i32
    %c0_i32_0 = arith.constant 0 : i32
    %c0_i32_1 = arith.constant 0 : i32
    return %c0_i32, %c0_i32_0 : i32, i32
  }
  func.func @transform_13(%arg0: i32) -> (i32, i32) {
    %c0_i32 = arith.constant 0 : i32
    %c0_i32_0 = arith.constant 0 : i32
    %c0_i32_1 = arith.constant 0 : i32
    return %c0_i32, %c0_i32_0 : i32, i32
  }
  func.func @transform_14(%arg0: i32) -> (i32, i32) {
    %c0_i32 = arith.constant 0 : i32
    %c0_i32_0 = arith.constant 0 : i32
    %c0_i32_1 = arith.constant 0 : i32
    return %c0_i32, %c0_i32_0 : i32, i32
  }
  func.func @transform_15(%arg0: i32) -> (i32, i32) {
    %c0_i32 = arith.constant 0 : i32
    %c0_i32_0 = arith.constant 0 : i32
    %c0_i32_1 = arith.constant 0 : i32
    return %c0_i32, %c0_i32_0 : i32, i32
  }
  func.func @transform_16(%arg0: i32) -> (i32, i32) {
    %c0_i32 = arith.constant 0 : i32
    %c0_i32_0 = arith.constant 0 : i32
    %c0_i32_1 = arith.constant 0 : i32
    return %c0_i32, %c0_i32_0 : i32, i32
  }
  func.func @transform_17(%arg0: i32) -> (i32, i32) {
    %c0_i32 = arith.constant 0 : i32
    %c0_i32_0 = arith.constant 0 : i32
    %c0_i32_1 = arith.constant 0 : i32
    return %c0_i32, %c0_i32_0 : i32, i32
  }
  func.func @transform_18(%arg0: i32) -> (i32, i32) {
    %c0_i32 = arith.constant 0 : i32
    %c0_i32_0 = arith.constant 0 : i32
    %c0_i32_1 = arith.constant 0 : i32
    return %c0_i32, %c0_i32_0 : i32, i32
  }
  func.func @transform_19(%arg0: i32) -> (i32, i32, i32) {
    %c0_i32 = arith.constant 0 : i32
    %c0_i32_0 = arith.constant 0 : i32
    %c0_i32_1 = arith.constant 0 : i32
    return %arg0, %c0_i32, %c0_i32_0 : i32, i32, i32
  }
}

</mosaic_0001>

<llo_original>
// kernel: tpu_custom_call.1
$region0: #{tpu_custom_call.1}
  #allocation0 [shape = 'u32[]', space=smem, size = 0x4, offset = 0x4, fixed_abs, tag = 'smem constant byte address 0x4 - core index']
  #allocation1 [shape = 'u32[144,128]{1,0:T(1,128)}', space=vmem, size = 0x12000, scoped, tag = 'internal scratch']
  %s0 = inlined_call_operand.vmem [shape: f32[2,8,32], index: 0, kind: input, shape index: {}]
  %s1 = inlined_call_operand.vmem [shape: f32[2,1,8,8], index: 1, kind: input, shape index: {}]
  %s2 = inlined_call_operand.vmem [shape: f32[4], index: 2, kind: input, shape index: {}]
  %s3 = inlined_call_operand.vmem [shape: f32[4,32,8], index: 3, kind: input, shape index: {}]
  %s4 = inlined_call_operand.vmem [shape: f32[4,1,8], index: 4, kind: input, shape index: {}]
  %s5 = inlined_call_operand.vmem [shape: f32[4,32,8], index: 5, kind: input, shape index: {}]
  %s6 = inlined_call_operand.vmem [shape: f32[4,1,8], index: 6, kind: input, shape index: {}]
  %s7 = inlined_call_operand.vmem [shape: f32[4,32,8], index: 7, kind: input, shape index: {}]
  %s8 = inlined_call_operand.vmem [shape: f32[4,1,8], index: 8, kind: input, shape index: {}]
  %s9 = inlined_call_operand.vmem [shape: f32[4,8,32], index: 9, kind: input, shape index: {}]
  %s10 = inlined_call_operand.vmem [shape: f32[1,32], index: 10, kind: input, shape index: {}]
  %s11 = inlined_call_operand.vmem [shape: f32[1,32], index: 11, kind: input, shape index: {}]
  %s12 = inlined_call_operand.vmem [shape: f32[1,32], index: 12, kind: input, shape index: {}]
  %s13 = inlined_call_operand.vmem [shape: f32[32,64], index: 13, kind: input, shape index: {}]
  %s14 = inlined_call_operand.vmem [shape: f32[1,64], index: 14, kind: input, shape index: {}]
  %s15 = inlined_call_operand.vmem [shape: f32[64,32], index: 15, kind: input, shape index: {}]
  %s16 = inlined_call_operand.vmem [shape: f32[1,32], index: 16, kind: input, shape index: {}]
  %s17 = inlined_call_operand.vmem [shape: f32[1,32], index: 17, kind: input, shape index: {}]
  %s18 = inlined_call_operand.vmem [shape: f32[1,32], index: 18, kind: input, shape index: {}]
  %s19 = inlined_call_operand.hbm [shape: f32[2,8,32], index: 19, kind: output, shape index: {}]
  %s20 = sld [smem:[#allocation0]]
  $region113: #{tpu_custom_call.1} parent=0
    _
  %s22 = ssub.s32 1, %s20
  %s23 = scalar_select 0, %s22, %s20
  $region1: #{tpu_custom_call.1} parent=0
    #allocation2 [shape = 'u8[512]{0}', space=smem, size = 0x200, scoped, tag = 'input window, operand 2, single buffered']
    #allocation3 [shape = 's32[2]{0}', space=sflag, size = 0x8, scoped, tag = 'scoped memory for tpu_custom_call.1']
    #allocation4 [shape = 's32[2]{0}', space=sflag, size = 0x8, scoped, tag = 'scoped memory for tpu_custom_call.1']
    #allocation5 [shape = 'u8[8192]{0}', space=vmem, size = 0x2000, scoped, tag = 'output window, operand 0']
    %24 = vsyncpa [#allocation4], 0
    %25 = vsyncpa [#allocation3], 0
    %s26 = scalar_lea.sflag [#allocation3], 1
    %27 = vsyncpa %s26, 0
    loop: start=0, step=1, limit=4
    $region2: #{tpu_custom_call.1} parent=1 // loop_pre_header
      _
    $region3: #{tpu_custom_call.1} parent=1 // loop_header
      %s29 = sphi 0, %s33
      %p30 = scmp.ge.s32.totalorder %s29, 4
      %s39 = sphi 0, %s41
      %s42 = sphi 0, %s39
      %s43 = sphi 0, %s42
      %s59 = sphi 0, %s43
      %s65 = sphi 0, %s67
      %s68 = sphi 0, %s65
      %s69 = sphi 0, %s68
      %s85 = sphi 0, %s69
      %s89 = sphi 0, %s89
      %s91 = sphi 0, %s89
      %s92 = sphi 0, %s91
      %s106 = sphi 0, %s92
      %s110 = sphi 0, %s110
      %s112 = sphi 0, %s110
      %s113 = sphi 0, %s112
      %s127 = sphi 0, %s113
      %s131 = sphi 0, %s131
      %s133 = sphi 0, %s131
      %s134 = sphi 0, %s133
      %s148 = sphi 0, %s134
      %s152 = sphi 0, %s152
      %s154 = sphi 0, %s152
      %s155 = sphi 0, %s154
      %s169 = sphi 0, %s155
      %s173 = sphi 0, %s173
      %s175 = sphi 0, %s173
      %s176 = sphi 0, %s175
      %s190 = sphi 0, %s176
      %s194 = sphi 0, %s194
      %s196 = sphi 0, %s194
      %s197 = sphi 0, %s196
      %s211 = sphi 0, %s197
      %s215 = sphi 0, %s215
      %s217 = sphi 0, %s215
      %s218 = sphi 0, %s217
      %s232 = sphi 0, %s218
      %s236 = sphi 0, %s236
      %s238 = sphi 0, %s236
      %s239 = sphi 0, %s238
      %s253 = sphi 0, %s239
      %s257 = sphi 0, %s257
      %s259 = sphi 0, %s257
      %s260 = sphi 0, %s259
      %s274 = sphi 0, %s260
      %s278 = sphi 0, %s278
      %s280 = sphi 0, %s278
      %s281 = sphi 0, %s280
      %s295 = sphi 0, %s281
      %s299 = sphi 0, %s299
      %s301 = sphi 0, %s299
      %s302 = sphi 0, %s301
      %s316 = sphi 0, %s302
      %s320 = sphi 0, %s320
      %s322 = sphi 0, %s320
      %s323 = sphi 0, %s322
      %s337 = sphi 0, %s323
      %s341 = sphi 0, %s341
      %s343 = sphi 0, %s341
      %s344 = sphi 0, %s343
      %s358 = sphi 0, %s344
      %s362 = sphi 0, %s362
      %s364 = sphi 0, %s362
      %s365 = sphi 0, %s364
      %s379 = sphi 0, %s365
      %s383 = sphi 0, %s383
      %s385 = sphi 0, %s383
      %s386 = sphi 0, %s385
      %s400 = sphi 0, %s386
      %s404 = sphi 0, %s404
      %s406 = sphi 0, %s404
      %s407 = sphi 0, %s406
      %s421 = sphi 0, %s407
      %s425 = sphi 0, %s425
      %s427 = sphi 0, %s425
      %s428 = sphi 0, %s427
      %s442 = sphi 0, %s428
      %s448 = sphi 0, %s450
      %s451 = sphi 0, %s448
      %s452 = sphi 0, %s451
      %s468 = sphi 0, %s452
    $region4: #{tpu_custom_call.1} parent=1 // loop_header_branch
      %32 = sbr.rel (%p30) target = $region8
    $region5: #{tpu_custom_call.1} parent=1 // loop_body
      %s34 = ssub.s32 %s29, 1
      %s35 = ssub.s32 %s29, 2
      %s36 = sadd.s32 %s29, 1
      %s37 = ssub.s32 %s29, %s36
      %p38 = scmp.eq.s32.totalorder %s37, 0
      %s40 = sadd.s32 %s39, 1
      %s41 = scalar_select %p38, %s39, %s40
      %p44 = pneg %p38
      %p45 = scmp.eq.s32.totalorder %s29, 1
      %p46 = por %p44, %p45
      %p47 = scmp.ne.s32.totalorder %s39, %s42
      %p48 = scmp.eq.s32.totalorder %s29, 0
      %p49 = por %p47, %p48
      %p50 = scmp.ne.s32.totalorder %s39, %s42
      %p51 = scmp.eq.s32.totalorder %s34, 1
      %p52 = por %p50, %p51
      %p53 = scmp.ne.s32.totalorder %s42, %s43
      %p54 = scmp.eq.s32.totalorder %s34, 0
      %p55 = por %p53, %p54
      %p56 = scmp.ne.s32.totalorder %s42, %s43
      %p57 = scmp.eq.s32.totalorder %s35, 1
      %p58 = por %p56, %p57
      %p60 = scmp.ne.s32.totalorder %s43, %s59
      %p61 = scmp.eq.s32.totalorder %s35, 0
      %p62 = por %p60, %p61
      %s63 = ssub.s32 %s29, %s36
      %p64 = scmp.eq.s32.totalorder %s63, 0
      %s66 = sadd.s32 %s65, 1
      %s67 = scalar_select %p64, %s65, %s66
      %p70 = pneg %p64
      %p71 = scmp.eq.s32.totalorder %s29, 1
      %p72 = por %p70, %p71
      %p73 = scmp.ne.s32.totalorder %s65, %s68
      %p74 = scmp.eq.s32.totalorder %s29, 0
      %p75 = por %p73, %p74
      %p76 = scmp.ne.s32.totalorder %s65, %s68
      %p77 = scmp.eq.s32.totalorder %s34, 1
      %p78 = por %p76, %p77
      %p79 = scmp.ne.s32.totalorder %s68, %s69
      %p80 = scmp.eq.s32.totalorder %s34, 0
      %p81 = por %p79, %p80
      %p82 = scmp.ne.s32.totalorder %s68, %s69
      %p83 = scmp.eq.s32.totalorder %s35, 1
      %p84 = por %p82, %p83
      %p86 = scmp.ne.s32.totalorder %s69, %s85
      %p87 = scmp.eq.s32.totalorder %s35, 0
      %p88 = por %p86, %p87
      %s90 = sadd.s32 %s89, 1
      %p93 = scmp.eq.s32.totalorder %s29, 1
      %p94 = scmp.ne.s32.totalorder %s89, %s91
      %p95 = scmp.eq.s32.totalorder %s29, 0
      %p96 = por %p94, %p95
      %p97 = scmp.ne.s32.totalorder %s89, %s91
      %p98 = scmp.eq.s32.totalorder %s34, 1
      %p99 = por %p97, %p98
      %p100 = scmp.ne.s32.totalorder %s91, %s92
      %p101 = scmp.eq.s32.totalorder %s34, 0
      %p102 = por %p100, %p101
      %p103 = scmp.ne.s32.totalorder %s91, %s92
      %p104 = scmp.eq.s32.totalorder %s35, 1
      %p105 = por %p103, %p104
      %p107 = scmp.ne.s32.totalorder %s92, %s106
      %p108 = scmp.eq.s32.totalorder %s35, 0
      %p109 = por %p107, %p108
      %s111 = sadd.s32 %s110, 1
      %p114 = scmp.eq.s32.totalorder %s29, 1
      %p115 = scmp.ne.s32.totalorder %s110, %s112
      %p116 = scmp.eq.s32.totalorder %s29, 0
      %p117 = por %p115, %p116
      %p118 = scmp.ne.s32.totalorder %s110, %s112
      %p119 = scmp.eq.s32.totalorder %s34, 1
      %p120 = por %p118, %p119
      %p121 = scmp.ne.s32.totalorder %s112, %s113
      %p122 = scmp.eq.s32.totalorder %s34, 0
      %p123 = por %p121, %p122
      %p124 = scmp.ne.s32.totalorder %s112, %s113
      %p125 = scmp.eq.s32.totalorder %s35, 1
      %p126 = por %p124, %p125
      %p128 = scmp.ne.s32.totalorder %s113, %s127
      %p129 = scmp.eq.s32.totalorder %s35, 0
      %p130 = por %p128, %p129
      %s132 = sadd.s32 %s131, 1
      %p135 = scmp.eq.s32.totalorder %s29, 1
      %p136 = scmp.ne.s32.totalorder %s131, %s133
      %p137 = scmp.eq.s32.totalorder %s29, 0
      %p138 = por %p136, %p137
      %p139 = scmp.ne.s32.totalorder %s131, %s133
      %p140 = scmp.eq.s32.totalorder %s34, 1
      %p141 = por %p139, %p140
      %p142 = scmp.ne.s32.totalorder %s133, %s134
      %p143 = scmp.eq.s32.totalorder %s34, 0
      %p144 = por %p142, %p143
      %p145 = scmp.ne.s32.totalorder %s133, %s134
      %p146 = scmp.eq.s32.totalorder %s35, 1
      %p147 = por %p145, %p146
      %p149 = scmp.ne.s32.totalorder %s134, %s148
      %p150 = scmp.eq.s32.totalorder %s35, 0
      %p151 = por %p149, %p150
      %s153 = sadd.s32 %s152, 1
      %p156 = scmp.eq.s32.totalorder %s29, 1
      %p157 = scmp.ne.s32.totalorder %s152, %s154
      %p158 = scmp.eq.s32.totalorder %s29, 0
      %p159 = por %p157, %p158
      %p160 = scmp.ne.s32.totalorder %s152, %s154
      %p161 = scmp.eq.s32.totalorder %s34, 1
      %p162 = por %p160, %p161
      %p163 = scmp.ne.s32.totalorder %s154, %s155
      %p164 = scmp.eq.s32.totalorder %s34, 0
      %p165 = por %p163, %p164
      %p166 = scmp.ne.s32.totalorder %s154, %s155
      %p167 = scmp.eq.s32.totalorder %s35, 1
      %p168 = por %p166, %p167
      %p170 = scmp.ne.s32.totalorder %s155, %s169
      %p171 = scmp.eq.s32.totalorder %s35, 0
      %p172 = por %p170, %p171
      %s174 = sadd.s32 %s173, 1
      %p177 = scmp.eq.s32.totalorder %s29, 1
      %p178 = scmp.ne.s32.totalorder %s173, %s175
      %p179 = scmp.eq.s32.totalorder %s29, 0
      %p180 = por %p178, %p179
      %p181 = scmp.ne.s32.totalorder %s173, %s175
      %p182 = scmp.eq.s32.totalorder %s34, 1
      %p183 = por %p181, %p182
      %p184 = scmp.ne.s32.totalorder %s175, %s176
      %p185 = scmp.eq.s32.totalorder %s34, 0
      %p186 = por %p184, %p185
      %p187 = scmp.ne.s32.totalorder %s175, %s176
      %p188 = scmp.eq.s32.totalorder %s35, 1
      %p189 = por %p187, %p188
      %p191 = scmp.ne.s32.totalorder %s176, %s190
      %p192 = scmp.eq.s32.totalorder %s35, 0
      %p193 = por %p191, %p192
      %s195 = sadd.s32 %s194, 1
      %p198 = scmp.eq.s32.totalorder %s29, 1
      %p199 = scmp.ne.s32.totalorder %s194, %s196
      %p200 = scmp.eq.s32.totalorder %s29, 0
      %p201 = por %p199, %p200
      %p202 = scmp.ne.s32.totalorder %s194, %s196
      %p203 = scmp.eq.s32.totalorder %s34, 1
      %p204 = por %p202, %p203
      %p205 = scmp.ne.s32.totalorder %s196, %s197
      %p206 = scmp.eq.s32.totalorder %s34, 0
      %p207 = por %p205, %p206
      %p208 = scmp.ne.s32.totalorder %s196, %s197
      %p209 = scmp.eq.s32.totalorder %s35, 1
      %p210 = por %p208, %p209
      %p212 = scmp.ne.s32.totalorder %s197, %s211
      %p213 = scmp.eq.s32.totalorder %s35, 0
      %p214 = por %p212, %p213
      %s216 = sadd.s32 %s215, 1
      %p219 = scmp.eq.s32.totalorder %s29, 1
      %p220 = scmp.ne.s32.totalorder %s215, %s217
      %p221 = scmp.eq.s32.totalorder %s29, 0
      %p222 = por %p220, %p221
      %p223 = scmp.ne.s32.totalorder %s215, %s217
      %p224 = scmp.eq.s32.totalorder %s34, 1
      %p225 = por %p223, %p224
      %p226 = scmp.ne.s32.totalorder %s217, %s218
      %p227 = scmp.eq.s32.totalorder %s34, 0
      %p228 = por %p226, %p227
      %p229 = scmp.ne.s32.totalorder %s217, %s218
      %p230 = scmp.eq.s32.totalorder %s35, 1
      %p231 = por %p229, %p230
      %p233 = scmp.ne.s32.totalorder %s218, %s232
      %p234 = scmp.eq.s32.totalorder %s35, 0
      %p235 = por %p233, %p234
      %s237 = sadd.s32 %s236, 1
      %p240 = scmp.eq.s32.totalorder %s29, 1
      %p241 = scmp.ne.s32.totalorder %s236, %s238
      %p242 = scmp.eq.s32.totalorder %s29, 0
      %p243 = por %p241, %p242
      %p244 = scmp.ne.s32.totalorder %s236, %s238
      %p245 = scmp.eq.s32.totalorder %s34, 1
      %p246 = por %p244, %p245
      %p247 = scmp.ne.s32.totalorder %s238, %s239
      %p248 = scmp.eq.s32.totalorder %s34, 0
      %p249 = por %p247, %p248
      %p250 = scmp.ne.s32.totalorder %s238, %s239
      %p251 = scmp.eq.s32.totalorder %s35, 1
      %p252 = por %p250, %p251
      %p254 = scmp.ne.s32.totalorder %s239, %s253
      %p255 = scmp.eq.s32.totalorder %s35, 0
      %p256 = por %p254, %p255
      %s258 = sadd.s32 %s257, 1
      %p261 = scmp.eq.s32.totalorder %s29, 1
      %p262 = scmp.ne.s32.totalorder %s257, %s259
      %p263 = scmp.eq.s32.totalorder %s29, 0
      %p264 = por %p262, %p263
      %p265 = scmp.ne.s32.totalorder %s257, %s259
      %p266 = scmp.eq.s32.totalorder %s34, 1
      %p267 = por %p265, %p266
      %p268 = scmp.ne.s32.totalorder %s259, %s260
      %p269 = scmp.eq.s32.totalorder %s34, 0
      %p270 = por %p268, %p269
      %p271 = scmp.ne.s32.totalorder %s259, %s260
      %p272 = scmp.eq.s32.totalorder %s35, 1
      %p273 = por %p271, %p272
      %p275 = scmp.ne.s32.totalorder %s260, %s274
      %p276 = scmp.eq.s32.totalorder %s35, 0
      %p277 = por %p275, %p276
      %s279 = sadd.s32 %s278, 1
      %p282 = scmp.eq.s32.totalorder %s29, 1
      %p283 = scmp.ne.s32.totalorder %s278, %s280
      %p284 = scmp.eq.s32.totalorder %s29, 0
      %p285 = por %p283, %p284
      %p286 = scmp.ne.s32.totalorder %s278, %s280
      %p287 = scmp.eq.s32.totalorder %s34, 1
      %p288 = por %p286, %p287
      %p289 = scmp.ne.s32.totalorder %s280, %s281
      %p290 = scmp.eq.s32.totalorder %s34, 0
      %p291 = por %p289, %p290
      %p292 = scmp.ne.s32.totalorder %s280, %s281
      %p293 = scmp.eq.s32.totalorder %s35, 1
      %p294 = por %p292, %p293
      %p296 = scmp.ne.s32.totalorder %s281, %s295
      %p297 = scmp.eq.s32.totalorder %s35, 0
      %p298 = por %p296, %p297
      %s300 = sadd.s32 %s299, 1
      %p303 = scmp.eq.s32.totalorder %s29, 1
      %p304 = scmp.ne.s32.totalorder %s299, %s301
      %p305 = scmp.eq.s32.totalorder %s29, 0
      %p306 = por %p304, %p305
      %p307 = scmp.ne.s32.totalorder %s299, %s301
      %p308 = scmp.eq.s32.totalorder %s34, 1
      %p309 = por %p307, %p308
      %p310 = scmp.ne.s32.totalorder %s301, %s302
      %p311 = scmp.eq.s32.totalorder %s34, 0
      %p312 = por %p310, %p311
      %p313 = scmp.ne.s32.totalorder %s301, %s302
      %p314 = scmp.eq.s32.totalorder %s35, 1
      %p315 = por %p313, %p314
      %p317 = scmp.ne.s32.totalorder %s302, %s316
      %p318 = scmp.eq.s32.totalorder %s35, 0
      %p319 = por %p317, %p318
      %s321 = sadd.s32 %s320, 1
      %p324 = scmp.eq.s32.totalorder %s29, 1
      %p325 = scmp.ne.s32.totalorder %s320, %s322
      %p326 = scmp.eq.s32.totalorder %s29, 0
      %p327 = por %p325, %p326
      %p328 = scmp.ne.s32.totalorder %s320, %s322
      %p329 = scmp.eq.s32.totalorder %s34, 1
      %p330 = por %p328, %p329
      %p331 = scmp.ne.s32.totalorder %s322, %s323
      %p332 = scmp.eq.s32.totalorder %s34, 0
      %p333 = por %p331, %p332
      %p334 = scmp.ne.s32.totalorder %s322, %s323
      %p335 = scmp.eq.s32.totalorder %s35, 1
      %p336 = por %p334, %p335
      %p338 = scmp.ne.s32.totalorder %s323, %s337
      %p339 = scmp.eq.s32.totalorder %s35, 0
      %p340 = por %p338, %p339
      %s342 = sadd.s32 %s341, 1
      %p345 = scmp.eq.s32.totalorder %s29, 1
      %p346 = scmp.ne.s32.totalorder %s341, %s343
      %p347 = scmp.eq.s32.totalorder %s29, 0
      %p348 = por %p346, %p347
      %p349 = scmp.ne.s32.totalorder %s341, %s343
      %p350 = scmp.eq.s32.totalorder %s34, 1
      %p351 = por %p349, %p350
      %p352 = scmp.ne.s32.totalorder %s343, %s344
      %p353 = scmp.eq.s32.totalorder %s34, 0
      %p354 = por %p352, %p353
      %p355 = scmp.ne.s32.totalorder %s343, %s344
      %p356 = scmp.eq.s32.totalorder %s35, 1
      %p357 = por %p355, %p356
      %p359 = scmp.ne.s32.totalorder %s344, %s358
      %p360 = scmp.eq.s32.totalorder %s35, 0
      %p361 = por %p359, %p360
      %s363 = sadd.s32 %s362, 1
      %p366 = scmp.eq.s32.totalorder %s29, 1
      %p367 = scmp.ne.s32.totalorder %s362, %s364
      %p368 = scmp.eq.s32.totalorder %s29, 0
      %p369 = por %p367, %p368
      %p370 = scmp.ne.s32.totalorder %s362, %s364
      %p371 = scmp.eq.s32.totalorder %s34, 1
      %p372 = por %p370, %p371
      %p373 = scmp.ne.s32.totalorder %s364, %s365
      %p374 = scmp.eq.s32.totalorder %s34, 0
      %p375 = por %p373, %p374
      %p376 = scmp.ne.s32.totalorder %s364, %s365
      %p377 = scmp.eq.s32.totalorder %s35, 1
      %p378 = por %p376, %p377
      %p380 = scmp.ne.s32.totalorder %s365, %s379
      %p381 = scmp.eq.s32.totalorder %s35, 0
      %p382 = por %p380, %p381
      %s384 = sadd.s32 %s383, 1
      %p387 = scmp.eq.s32.totalorder %s29, 1
      %p388 = scmp.ne.s32.totalorder %s383, %s385
      %p389 = scmp.eq.s32.totalorder %s29, 0
      %p390 = por %p388, %p389
      %p391 = scmp.ne.s32.totalorder %s383, %s385
      %p392 = scmp.eq.s32.totalorder %s34, 1
      %p393 = por %p391, %p392
      %p394 = scmp.ne.s32.totalorder %s385, %s386
      %p395 = scmp.eq.s32.totalorder %s34, 0
      %p396 = por %p394, %p395
      %p397 = scmp.ne.s32.totalorder %s385, %s386
      %p398 = scmp.eq.s32.totalorder %s35, 1
      %p399 = por %p397, %p398
      %p401 = scmp.ne.s32.totalorder %s386, %s400
      %p402 = scmp.eq.s32.totalorder %s35, 0
      %p403 = por %p401, %p402
      %s405 = sadd.s32 %s404, 1
      %p408 = scmp.eq.s32.totalorder %s29, 1
      %p409 = scmp.ne.s32.totalorder %s404, %s406
      %p410 = scmp.eq.s32.totalorder %s29, 0
      %p411 = por %p409, %p410
      %p412 = scmp.ne.s32.totalorder %s404, %s406
      %p413 = scmp.eq.s32.totalorder %s34, 1
      %p414 = por %p412, %p413
      %p415 = scmp.ne.s32.totalorder %s406, %s407
      %p416 = scmp.eq.s32.totalorder %s34, 0
      %p417 = por %p415, %p416
      %p418 = scmp.ne.s32.totalorder %s406, %s407
      %p419 = scmp.eq.s32.totalorder %s35, 1
      %p420 = por %p418, %p419
      %p422 = scmp.ne.s32.totalorder %s407, %s421
      %p423 = scmp.eq.s32.totalorder %s35, 0
      %p424 = por %p422, %p423
      %s426 = sadd.s32 %s425, 1
      %p429 = scmp.eq.s32.totalorder %s29, 1
      %p430 = scmp.ne.s32.totalorder %s425, %s427
      %p431 = scmp.eq.s32.totalorder %s29, 0
      %p432 = por %p430, %p431
      %p433 = scmp.ne.s32.totalorder %s425, %s427
      %p434 = scmp.eq.s32.totalorder %s34, 1
      %p435 = por %p433, %p434
      %p436 = scmp.ne.s32.totalorder %s427, %s428
      %p437 = scmp.eq.s32.totalorder %s34, 0
      %p438 = por %p436, %p437
      %p439 = scmp.ne.s32.totalorder %s427, %s428
      %p440 = scmp.eq.s32.totalorder %s35, 1
      %p441 = por %p439, %p440
      %p443 = scmp.ne.s32.totalorder %s428, %s442
      %p444 = scmp.eq.s32.totalorder %s35, 0
      %p445 = por %p443, %p444
      %s446 = ssub.s32 %s29, %s36
      %p447 = scmp.eq.s32.totalorder %s446, 0
      %s449 = sadd.s32 %s448, 1
      %s450 = scalar_select %p447, %s448, %s449
      %p453 = pneg %p447
      %p454 = scmp.eq.s32.totalorder %s29, 1
      %p455 = por %p453, %p454
      %p456 = scmp.ne.s32.totalorder %s448, %s451
      %p457 = scmp.eq.s32.totalorder %s29, 0
      %p458 = por %p456, %p457
      %p459 = scmp.ne.s32.totalorder %s448, %s451
      %p460 = scmp.eq.s32.totalorder %s34, 1
      %p461 = por %p459, %p460
      %p462 = scmp.ne.s32.totalorder %s451, %s452
      %p463 = scmp.eq.s32.totalorder %s34, 0
      %p464 = por %p462, %p463
      %p465 = scmp.ne.s32.totalorder %s451, %s452
      %p466 = scmp.eq.s32.totalorder %s35, 1
      %p467 = por %p465, %p466
      %p469 = scmp.ne.s32.totalorder %s452, %s468
      %p470 = scmp.eq.s32.totalorder %s35, 0
      %p471 = por %p469, %p470
      %p472 = scmp.le.s32.totalorder 1, %s29
      %p473 = scmp.lt.s32.totalorder %s29, 3
      %p474 = pnand %p472, %p473
      %p475 = pneg %p474
      // Predicated region
      $region9: #{tpu_custom_call.1} parent=5 // pred_check
        _
      $region10: #{tpu_custom_call.1} parent=5 // pred_check_branch
        %477 = sbr.rel (%p474) target = $region12
      $region11: #{tpu_custom_call.1} parent=5 // pred_region
        %s478 = ssub.s32 %s29, 1
        // Predicated region
        $region13: #{tpu_custom_call.1} parent=11 // pred_check
          %p479 = pneg %p102
        $region14: #{tpu_custom_call.1} parent=11 // pred_check_branch
          %481 = sbr.rel (%p479) target = $region16
        $region15: #{tpu_custom_call.1} parent=11 // pred_region
          %s483 = ssub.s32 16, 16
          %484 = vsyncadd [#allocation4], %s483
          %s486 = sshll.u32 %s2, 4
          %s487 = int_to_ptr.vmem [resolvable:$true] %s486
          %489 = dma.vmem_to_smem %s487, 16, [#allocation2], [#allocation4]
        $region16: #{tpu_custom_call.1} parent=11 // pred_fallthru
          _
        // Predicated region
        $region17: #{tpu_custom_call.1} parent=11 // pred_check
          %p490 = pneg %p123
        $region18: #{tpu_custom_call.1} parent=11 // pred_check_branch
          %492 = sbr.rel (%p490) target = $region20
        $region19: #{tpu_custom_call.1} parent=11 // pred_region
          _
        $region20: #{tpu_custom_call.1} parent=11 // pred_fallthru
          _
        // Predicated region
        $region21: #{tpu_custom_call.1} parent=11 // pred_check
          %p493 = pneg %p144
        $region22: #{tpu_custom_call.1} parent=11 // pred_check_branch
          %495 = sbr.rel (%p493) target = $region24
        $region23: #{tpu_custom_call.1} parent=11 // pred_region
          _
        $region24: #{tpu_custom_call.1} parent=11 // pred_fallthru
          _
        // Predicated region
        $region25: #{tpu_custom_call.1} parent=11 // pred_check
          %p496 = pneg %p165
        $region26: #{tpu_custom_call.1} parent=11 // pred_check_branch
          %498 = sbr.rel (%p496) target = $region28
        $region27: #{tpu_custom_call.1} parent=11 // pred_region
          _
        $region28: #{tpu_custom_call.1} parent=11 // pred_fallthru
          _
        // Predicated region
        $region29: #{tpu_custom_call.1} parent=11 // pred_check
          %p499 = pneg %p186
        $region30: #{tpu_custom_call.1} parent=11 // pred_check_branch
          %501 = sbr.rel (%p499) target = $region32
        $region31: #{tpu_custom_call.1} parent=11 // pred_region
          _
        $region32: #{tpu_custom_call.1} parent=11 // pred_fallthru
          _
        // Predicated region
        $region33: #{tpu_custom_call.1} parent=11 // pred_check
          %p502 = pneg %p207
        $region34: #{tpu_custom_call.1} parent=11 // pred_check_branch
          %504 = sbr.rel (%p502) target = $region36
        $region35: #{tpu_custom_call.1} parent=11 // pred_region
          _
        $region36: #{tpu_custom_call.1} parent=11 // pred_fallthru
          _
        // Predicated region
        $region37: #{tpu_custom_call.1} parent=11 // pred_check
          %p505 = pneg %p228
        $region38: #{tpu_custom_call.1} parent=11 // pred_check_branch
          %507 = sbr.rel (%p505) target = $region40
        $region39: #{tpu_custom_call.1} parent=11 // pred_region
          _
        $region40: #{tpu_custom_call.1} parent=11 // pred_fallthru
          _
        // Predicated region
        $region41: #{tpu_custom_call.1} parent=11 // pred_check
          %p508 = pneg %p249
        $region42: #{tpu_custom_call.1} parent=11 // pred_check_branch
          %510 = sbr.rel (%p508) target = $region44
        $region43: #{tpu_custom_call.1} parent=11 // pred_region
          _
        $region44: #{tpu_custom_call.1} parent=11 // pred_fallthru
          _
        // Predicated region
        $region45: #{tpu_custom_call.1} parent=11 // pred_check
          %p511 = pneg %p270
        $region46: #{tpu_custom_call.1} parent=11 // pred_check_branch
          %513 = sbr.rel (%p511) target = $region48
        $region47: #{tpu_custom_call.1} parent=11 // pred_region
          _
        $region48: #{tpu_custom_call.1} parent=11 // pred_fallthru
          _
        // Predicated region
        $region49: #{tpu_custom_call.1} parent=11 // pred_check
          %p514 = pneg %p291
        $region50: #{tpu_custom_call.1} parent=11 // pred_check_branch
          %516 = sbr.rel (%p514) target = $region52
        $region51: #{tpu_custom_call.1} parent=11 // pred_region
          _
        $region52: #{tpu_custom_call.1} parent=11 // pred_fallthru
          _
        // Predicated region
        $region53: #{tpu_custom_call.1} parent=11 // pred_check
          %p517 = pneg %p312
        $region54: #{tpu_custom_call.1} parent=11 // pred_check_branch
          %519 = sbr.rel (%p517) target = $region56
        $region55: #{tpu_custom_call.1} parent=11 // pred_region
          _
        $region56: #{tpu_custom_call.1} parent=11 // pred_fallthru
          _
        // Predicated region
        $region57: #{tpu_custom_call.1} parent=11 // pred_check
          %p520 = pneg %p333
        $region58: #{tpu_custom_call.1} parent=11 // pred_check_branch
          %522 = sbr.rel (%p520) target = $region60
        $region59: #{tpu_custom_call.1} parent=11 // pred_region
          _
        $region60: #{tpu_custom_call.1} parent=11 // pred_fallthru
          _
        // Predicated region
        $region61: #{tpu_custom_call.1} parent=11 // pred_check
          %p523 = pneg %p354
        $region62: #{tpu_custom_call.1} parent=11 // pred_check_branch
          %525 = sbr.rel (%p523) target = $region64
        $region63: #{tpu_custom_call.1} parent=11 // pred_region
          _
        $region64: #{tpu_custom_call.1} parent=11 // pred_fallthru
          _
        // Predicated region
        $region65: #{tpu_custom_call.1} parent=11 // pred_check
          %p526 = pneg %p375
        $region66: #{tpu_custom_call.1} parent=11 // pred_check_branch
          %528 = sbr.rel (%p526) target = $region68
        $region67: #{tpu_custom_call.1} parent=11 // pred_region
          _
        $region68: #{tpu_custom_call.1} parent=11 // pred_fallthru
          _
        // Predicated region
        $region69: #{tpu_custom_call.1} parent=11 // pred_check
          %p529 = pneg %p396
        $region70: #{tpu_custom_call.1} parent=11 // pred_check_branch
          %531 = sbr.rel (%p529) target = $region72
        $region71: #{tpu_custom_call.1} parent=11 // pred_region
          _
        $region72: #{tpu_custom_call.1} parent=11 // pred_fallthru
          _
        // Predicated region
        $region73: #{tpu_custom_call.1} parent=11 // pred_check
          %p532 = pneg %p417
        $region74: #{tpu_custom_call.1} parent=11 // pred_check_branch
          %534 = sbr.rel (%p532) target = $region76
        $region75: #{tpu_custom_call.1} parent=11 // pred_region
          _
        $region76: #{tpu_custom_call.1} parent=11 // pred_fallthru
          _
        // Predicated region
        $region77: #{tpu_custom_call.1} parent=11 // pred_check
          %p535 = pneg %p438
        $region78: #{tpu_custom_call.1} parent=11 // pred_check_branch
          %537 = sbr.rel (%p535) target = $region80
        $region79: #{tpu_custom_call.1} parent=11 // pred_region
          _
        $region80: #{tpu_custom_call.1} parent=11 // pred_fallthru
          _
      $region12: #{tpu_custom_call.1} parent=5 // pred_fallthru
        _
      %p538 = scmp.lt.s32.totalorder %s29, 2
      // Predicated region
      $region81: #{tpu_custom_call.1} parent=5 // pred_check
        %p539 = pneg %p538
      $region82: #{tpu_custom_call.1} parent=5 // pred_check_branch
        %541 = sbr.rel (%p539) target = $region84
      $region83: #{tpu_custom_call.1} parent=5 // pred_region
        // Predicated region
        $region85: #{tpu_custom_call.1} parent=83 // pred_check
          %p542 = pneg %p49
        $region86: #{tpu_custom_call.1} parent=83 // pred_check_branch
          %544 = sbr.rel (%p542) target = $region88
        $region87: #{tpu_custom_call.1} parent=83 // pred_region
          %p545 = scmp.lt.s32.totalorder %s29, 1
          %s546 = scalar_select %p545, %s29, 1
          %s547 = smul.addr %s546, 8
          %s548 = scalar_lea.vmem %s0, %s547
        $region88: #{tpu_custom_call.1} parent=83 // pred_fallthru
          _
        // Predicated region
        $region89: #{tpu_custom_call.1} parent=83 // pred_check
          %p549 = pneg %p75
        $region90: #{tpu_custom_call.1} parent=83 // pred_check_branch
          %551 = sbr.rel (%p549) target = $region92
        $region91: #{tpu_custom_call.1} parent=83 // pred_region
          %p552 = scmp.lt.s32.totalorder %s29, 1
          %s553 = scalar_select %p552, %s29, 1
          %s554 = smul.addr %s553, 8
          %s555 = scalar_lea.vmem %s1, %s554
        $region92: #{tpu_custom_call.1} parent=83 // pred_fallthru
          _
      $region84: #{tpu_custom_call.1} parent=5 // pred_fallthru
        _
      %p556 = scmp.le.s32.totalorder 1, %s29
      %p557 = scmp.lt.s32.totalorder %s29, 3
      %p558 = pnand %p556, %p557
      %p559 = pneg %p558
      // Predicated region
      $region93: #{tpu_custom_call.1} parent=5 // pred_check
        _
      $region94: #{tpu_custom_call.1} parent=5 // pred_check_branch
        %561 = sbr.rel (%p558) target = $region96
      $region95: #{tpu_custom_call.1} parent=5 // pred_region
        %s562 = ssub.s32 %s29, 1
        // Predicated region
        $region97: #{tpu_custom_call.1} parent=95 // pred_check
          %p563 = pneg %p102
        $region98: #{tpu_custom_call.1} parent=95 // pred_check_branch
          %565 = sbr.rel (%p563) target = $region100
        $region99: #{tpu_custom_call.1} parent=95 // pred_region
          %566 = dma.done [#allocation4], 16
        $region100: #{tpu_custom_call.1} parent=95 // pred_fallthru
          _
        %567 = sfence
        %p568 = scmp.lt.s32.totalorder %s34, 1
        %s569 = scalar_select %p568, %s34, 1
        %s570 = smul.addr %s569, 8
        %s571 = scalar_lea.vmem %s0, %s570
        %p572 = pneg %p55
        %p573 = pneg %p52
        %p574 = scmp.lt.s32.totalorder %s34, 1
        %s575 = scalar_select %p574, %s34, 1
        %s576 = smul.addr %s575, 8
        %s577 = scalar_lea.vmem %s1, %s576
        %p578 = pneg %p81
        %p579 = pneg %p78
        %p580 = pneg %p102
        %p581 = pneg %p99
        %p582 = pneg %p123
        %p583 = pneg %p120
        %p584 = pneg %p144
        %p585 = pneg %p141
        %p586 = pneg %p165
        %p587 = pneg %p162
        %p588 = pneg %p186
        %p589 = pneg %p183
        %p590 = pneg %p207
        %p591 = pneg %p204
        %p592 = pneg %p228
        %p593 = pneg %p225
        %p594 = pneg %p249
        %p595 = pneg %p246
        %p596 = pneg %p270
        %p597 = pneg %p267
        %p598 = pneg %p291
        %p599 = pneg %p288
        %p600 = pneg %p312
        %p601 = pneg %p309
        %p602 = pneg %p333
        %p603 = pneg %p330
        %p604 = pneg %p354
        %p605 = pneg %p351
        %p606 = pneg %p375
        %p607 = pneg %p372
        %p608 = pneg %p396
        %p609 = pneg %p393
        %p610 = pneg %p417
        %p611 = pneg %p414
        %p612 = pneg %p438
        %p613 = pneg %p435
        %p614 = pneg %p464
        %p615 = pneg %p461
        %s616 = sand.u32 %s451, 1
        %s617 = scalar_lea.sflag [#allocation3], %s616
        %s618 = sand.u32 %s451, 1
        %s619 = smul.addr %s618, 8
        %s620 = scalar_lea.vmem [#allocation5], %s619
        %p621 = scmp.lt.s32.totalorder %s34, 1
        %s622 = scalar_select %p621, %s34, 1
        %s623 = smul.addr %s622, 8
        %s624 = scalar_lea.vmem %s0, %s623
        %p625 = scmp.lt.s32.totalorder %s34, 1
        %s626 = scalar_select %p625, %s34, 1
        %s627 = smul.addr %s626, 8
        %s628 = scalar_lea.vmem %s1, %s627
        %v629 = vld [vmem:[%s624] sm:$0xff]
        %v630 = vld [vmem:[%s628] sm:$0xff]
        %v631 = vld [vmem:[%s3] sm:$0xff]
        %v632 = vld [vmem:[%s3 + $0x8] sm:$0xff]
        %v633 = vld [vmem:[%s3 + $0x10] sm:$0xff]
        %v634 = vld [vmem:[%s3 + $0x18] sm:$0xff]
        %v635 = vld [vmem:[%s4] sm:$0x1]
        %v637 = vlaneseq
        %v638 = vshrl.u32 %v637, 7
        %v639 = vsub.s32 0, %v638
        %v640 = vrot.slane %v635, %v639
        %vm642 = vcmask 261120
        %v644 = vsel %vm642, %v629, 0
        %646 = vmatprep.subr.mxu0 0.0
        %647 = vmatpush1.msra.mxu0 %v631
        %648 = vmatprep.subr.mxu0 0.0
        %649 = vmatpush1.msra.mxu0 %v632
        %650 = vmatprep.subr.mxu0 0.0
        %651 = vmatpush1.msra.mxu0 %v633
        %652 = vmatprep.subr.mxu0 0.0
        %653 = vmatpush1.msra.mxu0 %v634
        %654 = vmatprep.subr.mxu0 0.0
        %655 = vmatpush1.msra.mxu0 0.0
        %656 = vmatprep.subr.mxu0 0.0
        %657 = vmatpush1.msra.mxu0 0.0
        %658 = vmatprep.subr.mxu0 0.0
        %659 = vmatpush1.msra.mxu0 0.0
        %660 = vmatprep.subr.mxu0 0.0
        %661 = vmatpush1.msra.mxu0 0.0
        %662 = vmatprep.subr.mxu0 0.0
        %663 = vmatpush1.msra.mxu0 0.0
        %664 = vmatprep.subr.mxu0 0.0
        %665 = vmatpush1.msra.mxu0 0.0
        %666 = vmatprep.subr.mxu0 0.0
        %667 = vmatpush1.msra.mxu0 0.0
        %668 = vmatprep.subr.mxu0 0.0
        %669 = vmatpush1.msra.mxu0 0.0
        %670 = vmatprep.subr.mxu0 0.0
        %671 = vmatpush1.msra.mxu0 0.0
        %672 = vmatprep.subr.mxu0 0.0
        %673 = vmatpush1.msra.mxu0 0.0
        %674 = vmatprep.subr.mxu0 0.0
        %675 = vmatpush1.msra.mxu0 0.0
        %676 = vmatprep.subr.mxu0 0.0
        %677 = vmatpush1.msra.mxu0 0.0
        %678 = vmatprep.subr.mxu0 0.0
        %679 = vmatpush1.msra.mxu0 0.0
        %680 = vmatprep.subr.mxu0 0.0
        %681 = vmatpush1.msra.mxu0 0.0
        %682 = vmatprep.subr.mxu0 0.0
        %683 = vmatpush1.msra.mxu0 0.0
        %684 = vmatprep.subr.mxu0 0.0
        %685 = vmatpush1.msra.mxu0 0.0
        %686 = vmatprep.subr.mxu0 0.0
        %687 = vmatpush1.msra.mxu0 0.0
        %688 = vmatprep.subr.mxu0 0.0
        %689 = vmatpush1.msra.mxu0 0.0
        %690 = vmatprep.subr.mxu0 0.0
        %691 = vmatpush1.msra.mxu0 0.0
        %692 = vmatprep.subr.mxu0 0.0
        %693 = vmatpush1.msra.mxu0 0.0
        %694 = vmatprep.subr.mxu0 0.0
        %695 = vmatpush1.msra.mxu0 0.0
        %696 = vmatprep.subr.mxu0 0.0
        %697 = vmatpush1.msra.mxu0 0.0
        %698 = vmatprep.subr.mxu0 0.0
        %699 = vmatpush1.msra.mxu0 0.0
        %700 = vmatprep.subr.mxu0 0.0
        %701 = vmatpush1.msra.mxu0 0.0
        %702 = vmatprep.subr.mxu0 0.0
        %703 = vmatpush1.msra.mxu0 0.0
        %704 = vmatprep.subr.mxu0 0.0
        %705 = vmatpush1.msra.mxu0 0.0
        %706 = vmatprep.subr.mxu0 0.0
        %707 = vmatpush1.msra.mxu0 0.0
        %708 = vmatprep.subr.mxu0 0.0
        %709 = vmatpush1.msra.mxu0 0.0
        %710 = vmatprep.mubr.f32.mxu0 0.0
        %711 = vmatmul.mubr.f32.gmra.mrb[0].mxu0 %v644
        %v712 = vpop.f32.mrb[0].mxu0
        %v713 = vadd.f32 %v640, %v712
        %v714 = vpop.f32.mrb[0].mxu0
        %715 = vdwg.mxu0
        %v716 = vmul.f32 %v713, 0.35355338
        %v717 = vld [vmem:[%s5] sm:$0xff]
        %v718 = vld [vmem:[%s5 + $0x8] sm:$0xff]
        %v719 = vld [vmem:[%s5 + $0x10] sm:$0xff]
        %v720 = vld [vmem:[%s5 + $0x18] sm:$0xff]
        %v721 = vld [vmem:[%s6] sm:$0x1]
        %v723 = vlaneseq
        %v724 = vshrl.u32 %v723, 7
        %v725 = vsub.s32 0, %v724
        %v726 = vrot.slane %v721, %v725
        %728 = vmatprep.subr.mxu0 0.0
        %729 = vmatpush1.msra.mxu0 %v717
        %730 = vmatprep.subr.mxu0 0.0
        %731 = vmatpush1.msra.mxu0 %v718
        %732 = vmatprep.subr.mxu0 0.0
        %733 = vmatpush1.msra.mxu0 %v719
        %734 = vmatprep.subr.mxu0 0.0
        %735 = vmatpush1.msra.mxu0 %v720
        %736 = vmatprep.subr.mxu0 0.0
        %737 = vmatpush1.msra.mxu0 0.0
        %738 = vmatprep.subr.mxu0 0.0
        %739 = vmatpush1.msra.mxu0 0.0
        %740 = vmatprep.subr.mxu0 0.0
        %741 = vmatpush1.msra.mxu0 0.0
        %742 = vmatprep.subr.mxu0 0.0
        %743 = vmatpush1.msra.mxu0 0.0
        %744 = vmatprep.subr.mxu0 0.0
        %745 = vmatpush1.msra.mxu0 0.0
        %746 = vmatprep.subr.mxu0 0.0
        %747 = vmatpush1.msra.mxu0 0.0
        %748 = vmatprep.subr.mxu0 0.0
        %749 = vmatpush1.msra.mxu0 0.0
        %750 = vmatprep.subr.mxu0 0.0
        %751 = vmatpush1.msra.mxu0 0.0
        %752 = vmatprep.subr.mxu0 0.0
        %753 = vmatpush1.msra.mxu0 0.0
        %754 = vmatprep.subr.mxu0 0.0
        %755 = vmatpush1.msra.mxu0 0.0
        %756 = vmatprep.subr.mxu0 0.0
        %757 = vmatpush1.msra.mxu0 0.0
        %758 = vmatprep.subr.mxu0 0.0
        %759 = vmatpush1.msra.mxu0 0.0
        %760 = vmatprep.subr.mxu0 0.0
        %761 = vmatpush1.msra.mxu0 0.0
        %762 = vmatprep.subr.mxu0 0.0
        %763 = vmatpush1.msra.mxu0 0.0
        %764 = vmatprep.subr.mxu0 0.0
        %765 = vmatpush1.msra.mxu0 0.0
        %766 = vmatprep.subr.mxu0 0.0
        %767 = vmatpush1.msra.mxu0 0.0
        %768 = vmatprep.subr.mxu0 0.0
        %769 = vmatpush1.msra.mxu0 0.0
        %770 = vmatprep.subr.mxu0 0.0
        %771 = vmatpush1.msra.mxu0 0.0
        %772 = vmatprep.subr.mxu0 0.0
        %773 = vmatpush1.msra.mxu0 0.0
        %774 = vmatprep.subr.mxu0 0.0
        %775 = vmatpush1.msra.mxu0 0.0
        %776 = vmatprep.subr.mxu0 0.0
        %777 = vmatpush1.msra.mxu0 0.0
        %778 = vmatprep.subr.mxu0 0.0
        %779 = vmatpush1.msra.mxu0 0.0
        %780 = vmatprep.subr.mxu0 0.0
        %781 = vmatpush1.msra.mxu0 0.0
        %782 = vmatprep.subr.mxu0 0.0
        %783 = vmatpush1.msra.mxu0 0.0
        %784 = vmatprep.subr.mxu0 0.0
        %785 = vmatpush1.msra.mxu0 0.0
        %786 = vmatprep.subr.mxu0 0.0
        %787 = vmatpush1.msra.mxu0 0.0
        %788 = vmatprep.subr.mxu0 0.0
        %789 = vmatpush1.msra.mxu0 0.0
        %790 = vmatprep.subr.mxu0 0.0
        %791 = vmatpush1.msra.mxu0 0.0
        %792 = vmatprep.mubr.f32.mxu0 0.0
        %793 = vmatmul.mubr.f32.gmra.mrb[0].mxu0 %v644
        %v794 = vpop.f32.mrb[0].mxu0
        %v795 = vadd.f32 %v726, %v794
        %v796 = vpop.f32.mrb[0].mxu0
        %797 = vdwg.mxu0
        %v798 = vld [vmem:[%s7] sm:$0xff]
        %v799 = vld [vmem:[%s7 + $0x8] sm:$0xff]
        %v800 = vld [vmem:[%s7 + $0x10] sm:$0xff]
        %v801 = vld [vmem:[%s7 + $0x18] sm:$0xff]
        %v802 = vld [vmem:[%s8] sm:$0x1]
        %v804 = vlaneseq
        %v805 = vshrl.u32 %v804, 7
        %v806 = vsub.s32 0, %v805
        %v807 = vrot.slane %v802, %v806
        %809 = vmatprep.subr.mxu0 0.0
        %810 = vmatpush1.msra.mxu0 %v798
        %811 = vmatprep.subr.mxu0 0.0
        %812 = vmatpush1.msra.mxu0 %v799
        %813 = vmatprep.subr.mxu0 0.0
        %814 = vmatpush1.msra.mxu0 %v800
        %815 = vmatprep.subr.mxu0 0.0
        %816 = vmatpush1.msra.mxu0 %v801
        %817 = vmatprep.subr.mxu0 0.0
        %818 = vmatpush1.msra.mxu0 0.0
        %819 = vmatprep.subr.mxu0 0.0
        %820 = vmatpush1.msra.mxu0 0.0
        %821 = vmatprep.subr.mxu0 0.0
        %822 = vmatpush1.msra.mxu0 0.0
        %823 = vmatprep.subr.mxu0 0.0
        %824 = vmatpush1.msra.mxu0 0.0
        %825 = vmatprep.subr.mxu0 0.0
        %826 = vmatpush1.msra.mxu0 0.0
        %827 = vmatprep.subr.mxu0 0.0
        %828 = vmatpush1.msra.mxu0 0.0
        %829 = vmatprep.subr.mxu0 0.0
        %830 = vmatpush1.msra.mxu0 0.0
        %831 = vmatprep.subr.mxu0 0.0
        %832 = vmatpush1.msra.mxu0 0.0
        %833 = vmatprep.subr.mxu0 0.0
        %834 = vmatpush1.msra.mxu0 0.0
        %835 = vmatprep.subr.mxu0 0.0
        %836 = vmatpush1.msra.mxu0 0.0
        %837 = vmatprep.subr.mxu0 0.0
        %838 = vmatpush1.msra.mxu0 0.0
        %839 = vmatprep.subr.mxu0 0.0
        %840 = vmatpush1.msra.mxu0 0.0
        %841 = vmatprep.subr.mxu0 0.0
        %842 = vmatpush1.msra.mxu0 0.0
        %843 = vmatprep.subr.mxu0 0.0
        %844 = vmatpush1.msra.mxu0 0.0
        %845 = vmatprep.subr.mxu0 0.0
        %846 = vmatpush1.msra.mxu0 0.0
        %847 = vmatprep.subr.mxu0 0.0
        %848 = vmatpush1.msra.mxu0 0.0
        %849 = vmatprep.subr.mxu0 0.0
        %850 = vmatpush1.msra.mxu0 0.0
        %851 = vmatprep.subr.mxu0 0.0
        %852 = vmatpush1.msra.mxu0 0.0
        %853 = vmatprep.subr.mxu0 0.0
        %854 = vmatpush1.msra.mxu0 0.0
        %855 = vmatprep.subr.mxu0 0.0
        %856 = vmatpush1.msra.mxu0 0.0
        %857 = vmatprep.subr.mxu0 0.0
        %858 = vmatpush1.msra.mxu0 0.0
        %859 = vmatprep.subr.mxu0 0.0
        %860 = vmatpush1.msra.mxu0 0.0
        %861 = vmatprep.subr.mxu0 0.0
        %862 = vmatpush1.msra.mxu0 0.0
        %863 = vmatprep.subr.mxu0 0.0
        %864 = vmatpush1.msra.mxu0 0.0
        %865 = vmatprep.subr.mxu0 0.0
        %866 = vmatpush1.msra.mxu0 0.0
        %867 = vmatprep.subr.mxu0 0.0
        %868 = vmatpush1.msra.mxu0 0.0
        %869 = vmatprep.subr.mxu0 0.0
        %870 = vmatpush1.msra.mxu0 0.0
        %871 = vmatprep.subr.mxu0 0.0
        %872 = vmatpush1.msra.mxu0 0.0
        %873 = vmatprep.mubr.f32.mxu0 0.0
        %874 = vmatmul.mubr.f32.gmra.mrb[0].mxu0 %v644
        %v875 = vpop.f32.mrb[0].mxu0
        %v876 = vadd.f32 %v807, %v875
        %v877 = vpop.f32.mrb[0].mxu0
        %878 = vdwg.mxu0
        %vm879 = vcmask 64512
        %v881 = vsel %vm879, %v716, 0
        %v884 = vsel %vm879, %v795, 0
        %886 = vmatprep.subr.mxu0 0.0
        %887 = vmatpush1.xpose.msra.mxu0 %v884
        %888 = vmatprep.subr.mxu0 0.0
        %889 = vmatpush1.xpose.msra.mxu0 0.0
        %890 = vmatprep.subr.mxu0 0.0
        %891 = vmatpush1.xpose.msra.mxu0 0.0
        %892 = vmatprep.subr.mxu0 0.0
        %893 = vmatpush1.xpose.msra.mxu0 0.0
        %894 = vmatprep.subr.mxu0 0.0
        %895 = vmatpush1.xpose.msra.mxu0 0.0
        %896 = vmatprep.subr.mxu0 0.0
        %897 = vmatpush1.xpose.msra.mxu0 0.0
        %898 = vmatprep.subr.mxu0 0.0
        %899 = vmatpush1.xpose.msra.mxu0 0.0
        %900 = vmatprep.subr.mxu0 0.0
        %901 = vmatpush1.xpose.msra.mxu0 0.0
        %902 = vmatprep.subr.mxu0 0.0
        %903 = vmatpush1.xpose.msra.mxu0 0.0
        %904 = vmatprep.subr.mxu0 0.0
        %905 = vmatpush1.xpose.msra.mxu0 0.0
        %906 = vmatprep.subr.mxu0 0.0
        %907 = vmatpush1.xpose.msra.mxu0 0.0
        %908 = vmatprep.subr.mxu0 0.0
        %909 = vmatpush1.xpose.msra.mxu0 0.0
        %910 = vmatprep.subr.mxu0 0.0
        %911 = vmatpush1.xpose.msra.mxu0 0.0
        %912 = vmatprep.subr.mxu0 0.0
        %913 = vmatpush1.xpose.msra.mxu0 0.0
        %914 = vmatprep.subr.mxu0 0.0
        %915 = vmatpush1.xpose.msra.mxu0 0.0
        %916 = vmatprep.subr.mxu0 0.0
        %917 = vmatpush1.xpose.msra.mxu0 0.0
        %918 = vmatprep.subr.mxu0 0.0
        %919 = vmatpush1.xpose.msra.mxu0 0.0
        %920 = vmatprep.subr.mxu0 0.0
        %921 = vmatpush1.xpose.msra.mxu0 0.0
        %922 = vmatprep.subr.mxu0 0.0
        %923 = vmatpush1.xpose.msra.mxu0 0.0
        %924 = vmatprep.subr.mxu0 0.0
        %925 = vmatpush1.xpose.msra.mxu0 0.0
        %926 = vmatprep.subr.mxu0 0.0
        %927 = vmatpush1.xpose.msra.mxu0 0.0
        %928 = vmatprep.subr.mxu0 0.0
        %929 = vmatpush1.xpose.msra.mxu0 0.0
        %930 = vmatprep.subr.mxu0 0.0
        %931 = vmatpush1.xpose.msra.mxu0 0.0
        %932 = vmatprep.subr.mxu0 0.0
        %933 = vmatpush1.xpose.msra.mxu0 0.0
        %934 = vmatprep.subr.mxu0 0.0
        %935 = vmatpush1.xpose.msra.mxu0 0.0
        %936 = vmatprep.subr.mxu0 0.0
        %937 = vmatpush1.xpose.msra.mxu0 0.0
        %938 = vmatprep.subr.mxu0 0.0
        %939 = vmatpush1.xpose.msra.mxu0 0.0
        %940 = vmatprep.subr.mxu0 0.0
        %941 = vmatpush1.xpose.msra.mxu0 0.0
        %942 = vmatprep.subr.mxu0 0.0
        %943 = vmatpush1.xpose.msra.mxu0 0.0
        %944 = vmatprep.subr.mxu0 0.0
        %945 = vmatpush1.xpose.msra.mxu0 0.0
        %946 = vmatprep.subr.mxu0 0.0
        %947 = vmatpush1.xpose.msra.mxu0 0.0
        %948 = vmatprep.subr.mxu0 0.0
        %949 = vmatpush1.xpose.msra.mxu0 0.0
        %950 = vmatprep.mubr.f32.mxu0 0.0
        %951 = vmatmul.mubr.f32.gmra.mrb[0].mxu0 %v881
        %v952 = vpop.f32.mrb[0].mxu0
        %v953 = vadd.f32 %v630, %v952
        %v954 = vpop.f32.mrb[0].mxu0
        %955 = vdwg.mxu0
        %v956 = vsel %vm879, %v953, -inf
        %957 = vmax.xlane.f32.xlu0 %v956
        %v958 = vpop.xlane.xlu0 %957
        %v959 = vsub.f32 %v953, %v958
        %v960 = vmul.f32 %v959, 1.442695
        %v961 = vpow.pop %v960
        %v962 = vsel %vm879, %v961, 0.0
        %963 = vadd.xlane.f32.xlu0 %v962
        %v964 = vpop.xlane.xlu0 %963
        %v965 = vrcp.pop %v964
        %v966 = vmul.f32 %v961, %v965
        %s967 = sld [smem:[#allocation2]]
        %v968 = vstv %s967
        %v969 = vmul.f32 %v966, %v968
        %v971 = vsel %vm879, %v969, 0
        %973 = vmatprep.subr.mxu0 0.0
        %974 = vmatpush1.msra.mxu0 %v876
        %975 = vmatprep.subr.mxu0 0.0
        %976 = vmatpush1.msra.mxu0 0.0
        %977 = vmatprep.subr.mxu0 0.0
        %978 = vmatpush1.msra.mxu0 0.0
        %979 = vmatprep.subr.mxu0 0.0
        %980 = vmatpush1.msra.mxu0 0.0
        %981 = vmatprep.subr.mxu0 0.0
        %982 = vmatpush1.msra.mxu0 0.0
        %983 = vmatprep.subr.mxu0 0.0
        %984 = vmatpush1.msra.mxu0 0.0
        %985 = vmatprep.subr.mxu0 0.0
        %986 = vmatpush1.msra.mxu0 0.0
        %987 = vmatprep.subr.mxu0 0.0
        %988 = vmatpush1.msra.mxu0 0.0
        %989 = vmatprep.subr.mxu0 0.0
        %990 = vmatpush1.msra.mxu0 0.0
        %991 = vmatprep.subr.mxu0 0.0
        %992 = vmatpush1.msra.mxu0 0.0
        %993 = vmatprep.subr.mxu0 0.0
        %994 = vmatpush1.msra.mxu0 0.0
        %995 = vmatprep.subr.mxu0 0.0
        %996 = vmatpush1.msra.mxu0 0.0
        %997 = vmatprep.subr.mxu0 0.0
        %998 = vmatpush1.msra.mxu0 0.0
        %999 = vmatprep.subr.mxu0 0.0
        %1000 = vmatpush1.msra.mxu0 0.0
        %1001 = vmatprep.subr.mxu0 0.0
        %1002 = vmatpush1.msra.mxu0 0.0
        %1003 = vmatprep.subr.mxu0 0.0
        %1004 = vmatpush1.msra.mxu0 0.0
        %1005 = vmatprep.subr.mxu0 0.0
        %1006 = vmatpush1.msra.mxu0 0.0
        %1007 = vmatprep.subr.mxu0 0.0
        %1008 = vmatpush1.msra.mxu0 0.0
        %1009 = vmatprep.subr.mxu0 0.0
        %1010 = vmatpush1.msra.mxu0 0.0
        %1011 = vmatprep.subr.mxu0 0.0
        %1012 = vmatpush1.msra.mxu0 0.0
        %1013 = vmatprep.subr.mxu0 0.0
        %1014 = vmatpush1.msra.mxu0 0.0
        %1015 = vmatprep.subr.mxu0 0.0
        %1016 = vmatpush1.msra.mxu0 0.0
        %1017 = vmatprep.subr.mxu0 0.0
        %1018 = vmatpush1.msra.mxu0 0.0
        %1019 = vmatprep.subr.mxu0 0.0
        %1020 = vmatpush1.msra.mxu0 0.0
        %1021 = vmatprep.subr.mxu0 0.0
        %1022 = vmatpush1.msra.mxu0 0.0
        %1023 = vmatprep.subr.mxu0 0.0
        %1024 = vmatpush1.msra.mxu0 0.0
        %1025 = vmatprep.subr.mxu0 0.0
        %1026 = vmatpush1.msra.mxu0 0.0
        %1027 = vmatprep.subr.mxu0 0.0
        %1028 = vmatpush1.msra.mxu0 0.0
        %1029 = vmatprep.subr.mxu0 0.0
        %1030 = vmatpush1.msra.mxu0 0.0
        %1031 = vmatprep.subr.mxu0 0.0
        %1032 = vmatpush1.msra.mxu0 0.0
        %1033 = vmatprep.subr.mxu0 0.0
        %1034 = vmatpush1.msra.mxu0 0.0
        %1035 = vmatprep.subr.mxu0 0.0
        %1036 = vmatpush1.msra.mxu0 0.0
        %1037 = vmatprep.mubr.f32.mxu0 0.0
        %1038 = vmatmul.mubr.f32.gmra.mrb[0].mxu0 %v971
        %v1039 = vpop.f32.mrb[0].mxu0
        %v1040 = vadd.f32 0.0, %v1039
        %v1041 = vpop.f32.mrb[0].mxu0
        %1042 = vdwg.mxu0
        %v1043 = vld [vmem:[%s9] sm:$0xff]
        %s1044 = scalar_lea.vmem %s3, 32
        %v1045 = vld [vmem:[%s1044] sm:$0xff]
        %v1046 = vld [vmem:[%s1044 + $0x8] sm:$0xff]
        %v1047 = vld [vmem:[%s1044 + $0x10] sm:$0xff]
        %v1048 = vld [vmem:[%s1044 + $0x18] sm:$0xff]
        %s1049 = scalar_lea.vmem %s4, 1
        %v1050 = vld [vmem:[%s1049] sm:$0x1]
        %v1052 = vlaneseq
        %v1053 = vshrl.u32 %v1052, 7
        %v1054 = vsub.s32 0, %v1053
        %v1055 = vrot.slane %v1050, %v1054
        %1057 = vmatprep.subr.mxu0 0.0
        %1058 = vmatpush1.msra.mxu0 %v1045
        %1059 = vmatprep.subr.mxu0 0.0
        %1060 = vmatpush1.msra.mxu0 %v1046
        %1061 = vmatprep.subr.mxu0 0.0
        %1062 = vmatpush1.msra.mxu0 %v1047
        %1063 = vmatprep.subr.mxu0 0.0
        %1064 = vmatpush1.msra.mxu0 %v1048
        %1065 = vmatprep.subr.mxu0 0.0
        %1066 = vmatpush1.msra.mxu0 0.0
        %1067 = vmatprep.subr.mxu0 0.0
        %1068 = vmatpush1.msra.mxu0 0.0
        %1069 = vmatprep.subr.mxu0 0.0
        %1070 = vmatpush1.msra.mxu0 0.0
        %1071 = vmatprep.subr.mxu0 0.0
        %1072 = vmatpush1.msra.mxu0 0.0
        %1073 = vmatprep.subr.mxu0 0.0
        %1074 = vmatpush1.msra.mxu0 0.0
        %1075 = vmatprep.subr.mxu0 0.0
        %1076 = vmatpush1.msra.mxu0 0.0
        %1077 = vmatprep.subr.mxu0 0.0
        %1078 = vmatpush1.msra.mxu0 0.0
        %1079 = vmatprep.subr.mxu0 0.0
        %1080 = vmatpush1.msra.mxu0 0.0
        %1081 = vmatprep.subr.mxu0 0.0
        %1082 = vmatpush1.msra.mxu0 0.0
        %1083 = vmatprep.subr.mxu0 0.0
        %1084 = vmatpush1.msra.mxu0 0.0
        %1085 = vmatprep.subr.mxu0 0.0
        %1086 = vmatpush1.msra.mxu0 0.0
        %1087 = vmatprep.subr.mxu0 0.0
        %1088 = vmatpush1.msra.mxu0 0.0
        %1089 = vmatprep.subr.mxu0 0.0
        %1090 = vmatpush1.msra.mxu0 0.0
        %1091 = vmatprep.subr.mxu0 0.0
        %1092 = vmatpush1.msra.mxu0 0.0
        %1093 = vmatprep.subr.mxu0 0.0
        %1094 = vmatpush1.msra.mxu0 0.0
        %1095 = vmatprep.subr.mxu0 0.0
        %1096 = vmatpush1.msra.mxu0 0.0
        %1097 = vmatprep.subr.mxu0 0.0
        %1098 = vmatpush1.msra.mxu0 0.0
        %1099 = vmatprep.subr.mxu0 0.0
        %1100 = vmatpush1.msra.mxu0 0.0
        %1101 = vmatprep.subr.mxu0 0.0
        %1102 = vmatpush1.msra.mxu0 0.0
        %1103 = vmatprep.subr.mxu0 0.0
        %1104 = vmatpush1.msra.mxu0 0.0
        %1105 = vmatprep.subr.mxu0 0.0
        %1106 = vmatpush1.msra.mxu0 0.0
        %1107 = vmatprep.subr.mxu0 0.0
        %1108 = vmatpush1.msra.mxu0 0.0
        %1109 = vmatprep.subr.mxu0 0.0
        %1110 = vmatpush1.msra.mxu0 0.0
        %1111 = vmatprep.subr.mxu0 0.0
        %1112 = vmatpush1.msra.mxu0 0.0
        %1113 = vmatprep.subr.mxu0 0.0
        %1114 = vmatpush1.msra.mxu0 0.0
        %1115 = vmatprep.subr.mxu0 0.0
        %1116 = vmatpush1.msra.mxu0 0.0
        %1117 = vmatprep.subr.mxu0 0.0
        %1118 = vmatpush1.msra.mxu0 0.0
        %1119 = vmatprep.subr.mxu0 0.0
        %1120 = vmatpush1.msra.mxu0 0.0
        %1121 = vmatprep.mubr.f32.mxu0 0.0
        %1122 = vmatmul.mubr.f32.gmra.mrb[0].mxu0 %v644
        %v1123 = vpop.f32.mrb[0].mxu0
        %v1124 = vadd.f32 %v1055, %v1123
        %v1125 = vpop.f32.mrb[0].mxu0
        %1126 = vdwg.mxu0
        %v1127 = vmul.f32 %v1124, 0.35355338
        %s1128 = scalar_lea.vmem %s5, 32
        %v1129 = vld [vmem:[%s1128] sm:$0xff]
        %v1130 = vld [vmem:[%s1128 + $0x8] sm:$0xff]
        %v1131 = vld [vmem:[%s1128 + $0x10] sm:$0xff]
        %v1132 = vld [vmem:[%s1128 + $0x18] sm:$0xff]
        %s1133 = scalar_lea.vmem %s6, 1
        %v1134 = vld [vmem:[%s1133] sm:$0x1]
        %v1136 = vlaneseq
        %v1137 = vshrl.u32 %v1136, 7
        %v1138 = vsub.s32 0, %v1137
        %v1139 = vrot.slane %v1134, %v1138
        %1141 = vmatprep.subr.mxu0 0.0
        %1142 = vmatpush1.msra.mxu0 %v1129
        %1143 = vmatprep.subr.mxu0 0.0
        %1144 = vmatpush1.msra.mxu0 %v1130
        %1145 = vmatprep.subr.mxu0 0.0
        %1146 = vmatpush1.msra.mxu0 %v1131
        %1147 = vmatprep.subr.mxu0 0.0
        %1148 = vmatpush1.msra.mxu0 %v1132
        %1149 = vmatprep.subr.mxu0 0.0
        %1150 = vmatpush1.msra.mxu0 0.0
        %1151 = vmatprep.subr.mxu0 0.0
        %1152 = vmatpush1.msra.mxu0 0.0
        %1153 = vmatprep.subr.mxu0 0.0
        %1154 = vmatpush1.msra.mxu0 0.0
        %1155 = vmatprep.subr.mxu0 0.0
        %1156 = vmatpush1.msra.mxu0 0.0
        %1157 = vmatprep.subr.mxu0 0.0
        %1158 = vmatpush1.msra.mxu0 0.0
        %1159 = vmatprep.subr.mxu0 0.0
        %1160 = vmatpush1.msra.mxu0 0.0
        %1161 = vmatprep.subr.mxu0 0.0
        %1162 = vmatpush1.msra.mxu0 0.0
        %1163 = vmatprep.subr.mxu0 0.0
        %1164 = vmatpush1.msra.mxu0 0.0
        %1165 = vmatprep.subr.mxu0 0.0
        %1166 = vmatpush1.msra.mxu0 0.0
        %1167 = vmatprep.subr.mxu0 0.0
        %1168 = vmatpush1.msra.mxu0 0.0
        %1169 = vmatprep.subr.mxu0 0.0
        %1170 = vmatpush1.msra.mxu0 0.0
        %1171 = vmatprep.subr.mxu0 0.0
        %1172 = vmatpush1.msra.mxu0 0.0
        %1173 = vmatprep.subr.mxu0 0.0
        %1174 = vmatpush1.msra.mxu0 0.0
        %1175 = vmatprep.subr.mxu0 0.0
        %1176 = vmatpush1.msra.mxu0 0.0
        %1177 = vmatprep.subr.mxu0 0.0
        %1178 = vmatpush1.msra.mxu0 0.0
        %1179 = vmatprep.subr.mxu0 0.0
        %1180 = vmatpush1.msra.mxu0 0.0
        %1181 = vmatprep.subr.mxu0 0.0
        %1182 = vmatpush1.msra.mxu0 0.0
        %1183 = vmatprep.subr.mxu0 0.0
        %1184 = vmatpush1.msra.mxu0 0.0
        %1185 = vmatprep.subr.mxu0 0.0
        %1186 = vmatpush1.msra.mxu0 0.0
        %1187 = vmatprep.subr.mxu0 0.0
        %1188 = vmatpush1.msra.mxu0 0.0
        %1189 = vmatprep.subr.mxu0 0.0
        %1190 = vmatpush1.msra.mxu0 0.0
        %1191 = vmatprep.subr.mxu0 0.0
        %1192 = vmatpush1.msra.mxu0 0.0
        %1193 = vmatprep.subr.mxu0 0.0
        %1194 = vmatpush1.msra.mxu0 0.0
        %1195 = vmatprep.subr.mxu0 0.0
        %1196 = vmatpush1.msra.mxu0 0.0
        %1197 = vmatprep.subr.mxu0 0.0
        %1198 = vmatpush1.msra.mxu0 0.0
        %1199 = vmatprep.subr.mxu0 0.0
        %1200 = vmatpush1.msra.mxu0 0.0
        %1201 = vmatprep.subr.mxu0 0.0
        %1202 = vmatpush1.msra.mxu0 0.0
        %1203 = vmatprep.subr.mxu0 0.0
        %1204 = vmatpush1.msra.mxu0 0.0
        %1205 = vmatprep.mubr.f32.mxu0 0.0
        %1206 = vmatmul.mubr.f32.gmra.mrb[0].mxu0 %v644
        %v1207 = vpop.f32.mrb[0].mxu0
        %v1208 = vadd.f32 %v1139, %v1207
        %v1209 = vpop.f32.mrb[0].mxu0
        %1210 = vdwg.mxu0
        %s1211 = scalar_lea.vmem %s7, 32
        %v1212 = vld [vmem:[%s1211] sm:$0xff]
        %v1213 = vld [vmem:[%s1211 + $0x8] sm:$0xff]
        %v1214 = vld [vmem:[%s1211 + $0x10] sm:$0xff]
        %v1215 = vld [vmem:[%s1211 + $0x18] sm:$0xff]
        %s1216 = scalar_lea.vmem %s8, 1
        %v1217 = vld [vmem:[%s1216] sm:$0x1]
        %v1219 = vlaneseq
        %v1220 = vshrl.u32 %v1219, 7
        %v1221 = vsub.s32 0, %v1220
        %v1222 = vrot.slane %v1217, %v1221
        %1224 = vmatprep.subr.mxu0 0.0
        %1225 = vmatpush1.msra.mxu0 %v1212
        %1226 = vmatprep.subr.mxu0 0.0
        %1227 = vmatpush1.msra.mxu0 %v1213
        %1228 = vmatprep.subr.mxu0 0.0
        %1229 = vmatpush1.msra.mxu0 %v1214
        %1230 = vmatprep.subr.mxu0 0.0
        %1231 = vmatpush1.msra.mxu0 %v1215
        %1232 = vmatprep.subr.mxu0 0.0
        %1233 = vmatpush1.msra.mxu0 0.0
        %1234 = vmatprep.subr.mxu0 0.0
        %1235 = vmatpush1.msra.mxu0 0.0
        %1236 = vmatprep.subr.mxu0 0.0
        %1237 = vmatpush1.msra.mxu0 0.0
        %1238 = vmatprep.subr.mxu0 0.0
        %1239 = vmatpush1.msra.mxu0 0.0
        %1240 = vmatprep.subr.mxu0 0.0
        %1241 = vmatpush1.msra.mxu0 0.0
        %1242 = vmatprep.subr.mxu0 0.0
        %1243 = vmatpush1.msra.mxu0 0.0
        %1244 = vmatprep.subr.mxu0 0.0
        %1245 = vmatpush1.msra.mxu0 0.0
        %1246 = vmatprep.subr.mxu0 0.0
        %1247 = vmatpush1.msra.mxu0 0.0
        %1248 = vmatprep.subr.mxu0 0.0
        %1249 = vmatpush1.msra.mxu0 0.0
        %1250 = vmatprep.subr.mxu0 0.0
        %1251 = vmatpush1.msra.mxu0 0.0
        %1252 = vmatprep.subr.mxu0 0.0
        %1253 = vmatpush1.msra.mxu0 0.0
        %1254 = vmatprep.subr.mxu0 0.0
        %1255 = vmatpush1.msra.mxu0 0.0
        %1256 = vmatprep.subr.mxu0 0.0
        %1257 = vmatpush1.msra.mxu0 0.0
        %1258 = vmatprep.subr.mxu0 0.0
        %1259 = vmatpush1.msra.mxu0 0.0
        %1260 = vmatprep.subr.mxu0 0.0
        %1261 = vmatpush1.msra.mxu0 0.0
        %1262 = vmatprep.subr.mxu0 0.0
        %1263 = vmatpush1.msra.mxu0 0.0
        %1264 = vmatprep.subr.mxu0 0.0
        %1265 = vmatpush1.msra.mxu0 0.0
        %1266 = vmatprep.subr.mxu0 0.0
        %1267 = vmatpush1.msra.mxu0 0.0
        %1268 = vmatprep.subr.mxu0 0.0
        %1269 = vmatpush1.msra.mxu0 0.0
        %1270 = vmatprep.subr.mxu0 0.0
        %1271 = vmatpush1.msra.mxu0 0.0
        %1272 = vmatprep.subr.mxu0 0.0
        %1273 = vmatpush1.msra.mxu0 0.0
        %1274 = vmatprep.subr.mxu0 0.0
        %1275 = vmatpush1.msra.mxu0 0.0
        %1276 = vmatprep.subr.mxu0 0.0
        %1277 = vmatpush1.msra.mxu0 0.0
        %1278 = vmatprep.subr.mxu0 0.0
        %1279 = vmatpush1.msra.mxu0 0.0
        %1280 = vmatprep.subr.mxu0 0.0
        %1281 = vmatpush1.msra.mxu0 0.0
        %1282 = vmatprep.subr.mxu0 0.0
        %1283 = vmatpush1.msra.mxu0 0.0
        %1284 = vmatprep.subr.mxu0 0.0
        %1285 = vmatpush1.msra.mxu0 0.0
        %1286 = vmatprep.subr.mxu0 0.0
        %1287 = vmatpush1.msra.mxu0 0.0
        %1288 = vmatprep.mubr.f32.mxu0 0.0
        %1289 = vmatmul.mubr.f32.gmra.mrb[0].mxu0 %v644
        %v1290 = vpop.f32.mrb[0].mxu0
        %v1291 = vadd.f32 %v1222, %v1290
        %v1292 = vpop.f32.mrb[0].mxu0
        %1293 = vdwg.mxu0
        %v1295 = vsel %vm879, %v1127, 0
        %v1298 = vsel %vm879, %v1208, 0
        %1300 = vmatprep.subr.mxu0 0.0
        %1301 = vmatpush1.xpose.msra.mxu0 %v1298
        %1302 = vmatprep.subr.mxu0 0.0
        %1303 = vmatpush1.xpose.msra.mxu0 0.0
        %1304 = vmatprep.subr.mxu0 0.0
        %1305 = vmatpush1.xpose.msra.mxu0 0.0
        %1306 = vmatprep.subr.mxu0 0.0
        %1307 = vmatpush1.xpose.msra.mxu0 0.0
        %1308 = vmatprep.subr.mxu0 0.0
        %1309 = vmatpush1.xpose.msra.mxu0 0.0
        %1310 = vmatprep.subr.mxu0 0.0
        %1311 = vmatpush1.xpose.msra.mxu0 0.0
        %1312 = vmatprep.subr.mxu0 0.0
        %1313 = vmatpush1.xpose.msra.mxu0 0.0
        %1314 = vmatprep.subr.mxu0 0.0
        %1315 = vmatpush1.xpose.msra.mxu0 0.0
        %1316 = vmatprep.subr.mxu0 0.0
        %1317 = vmatpush1.xpose.msra.mxu0 0.0
        %1318 = vmatprep.subr.mxu0 0.0
        %1319 = vmatpush1.xpose.msra.mxu0 0.0
        %1320 = vmatprep.subr.mxu0 0.0
        %1321 = vmatpush1.xpose.msra.mxu0 0.0
        %1322 = vmatprep.subr.mxu0 0.0
        %1323 = vmatpush1.xpose.msra.mxu0 0.0
        %1324 = vmatprep.subr.mxu0 0.0
        %1325 = vmatpush1.xpose.msra.mxu0 0.0
        %1326 = vmatprep.subr.mxu0 0.0
        %1327 = vmatpush1.xpose.msra.mxu0 0.0
        %1328 = vmatprep.subr.mxu0 0.0
        %1329 = vmatpush1.xpose.msra.mxu0 0.0
        %1330 = vmatprep.subr.mxu0 0.0
        %1331 = vmatpush1.xpose.msra.mxu0 0.0
        %1332 = vmatprep.subr.mxu0 0.0
        %1333 = vmatpush1.xpose.msra.mxu0 0.0
        %1334 = vmatprep.subr.mxu0 0.0
        %1335 = vmatpush1.xpose.msra.mxu0 0.0
        %1336 = vmatprep.subr.mxu0 0.0
        %1337 = vmatpush1.xpose.msra.mxu0 0.0
        %1338 = vmatprep.subr.mxu0 0.0
        %1339 = vmatpush1.xpose.msra.mxu0 0.0
        %1340 = vmatprep.subr.mxu0 0.0
        %1341 = vmatpush1.xpose.msra.mxu0 0.0
        %1342 = vmatprep.subr.mxu0 0.0
        %1343 = vmatpush1.xpose.msra.mxu0 0.0
        %1344 = vmatprep.subr.mxu0 0.0
        %1345 = vmatpush1.xpose.msra.mxu0 0.0
        %1346 = vmatprep.subr.mxu0 0.0
        %1347 = vmatpush1.xpose.msra.mxu0 0.0
        %1348 = vmatprep.subr.mxu0 0.0
        %1349 = vmatpush1.xpose.msra.mxu0 0.0
        %1350 = vmatprep.subr.mxu0 0.0
        %1351 = vmatpush1.xpose.msra.mxu0 0.0
        %1352 = vmatprep.subr.mxu0 0.0
        %1353 = vmatpush1.xpose.msra.mxu0 0.0
        %1354 = vmatprep.subr.mxu0 0.0
        %1355 = vmatpush1.xpose.msra.mxu0 0.0
        %1356 = vmatprep.subr.mxu0 0.0
        %1357 = vmatpush1.xpose.msra.mxu0 0.0
        %1358 = vmatprep.subr.mxu0 0.0
        %1359 = vmatpush1.xpose.msra.mxu0 0.0
        %1360 = vmatprep.subr.mxu0 0.0
        %1361 = vmatpush1.xpose.msra.mxu0 0.0
        %1362 = vmatprep.subr.mxu0 0.0
        %1363 = vmatpush1.xpose.msra.mxu0 0.0
        %1364 = vmatprep.mubr.f32.mxu0 0.0
        %1365 = vmatmul.mubr.f32.gmra.mrb[0].mxu0 %v1295
        %v1366 = vpop.f32.mrb[0].mxu0
        %v1367 = vadd.f32 %v630, %v1366
        %v1368 = vpop.f32.mrb[0].mxu0
        %1369 = vdwg.mxu0
        %v1370 = vsel %vm879, %v1367, -inf
        %1371 = vmax.xlane.f32.xlu0 %v1370
        %v1372 = vpop.xlane.xlu0 %1371
        %v1373 = vsub.f32 %v1367, %v1372
        %v1374 = vmul.f32 %v1373, 1.442695
        %v1375 = vpow.pop %v1374
        %v1376 = vsel %vm879, %v1375, 0.0
        %1377 = vadd.xlane.f32.xlu0 %v1376
        %v1378 = vpop.xlane.xlu0 %1377
        %v1379 = vrcp.pop %v1378
        %v1380 = vmul.f32 %v1375, %v1379
        %s1381 = sld [smem:[#allocation2 + $0x1]]
        %v1382 = vstv %s1381
        %v1383 = vmul.f32 %v1380, %v1382
        %v1385 = vsel %vm879, %v1383, 0
        %1387 = vmatprep.subr.mxu0 0.0
        %1388 = vmatpush1.msra.mxu0 %v1291
        %1389 = vmatprep.subr.mxu0 0.0
        %1390 = vmatpush1.msra.mxu0 0.0
        %1391 = vmatprep.subr.mxu0 0.0
        %1392 = vmatpush1.msra.mxu0 0.0
        %1393 = vmatprep.subr.mxu0 0.0
        %1394 = vmatpush1.msra.mxu0 0.0
        %1395 = vmatprep.subr.mxu0 0.0
        %1396 = vmatpush1.msra.mxu0 0.0
        %1397 = vmatprep.subr.mxu0 0.0
        %1398 = vmatpush1.msra.mxu0 0.0
        %1399 = vmatprep.subr.mxu0 0.0
        %1400 = vmatpush1.msra.mxu0 0.0
        %1401 = vmatprep.subr.mxu0 0.0
        %1402 = vmatpush1.msra.mxu0 0.0
        %1403 = vmatprep.subr.mxu0 0.0
        %1404 = vmatpush1.msra.mxu0 0.0
        %1405 = vmatprep.subr.mxu0 0.0
        %1406 = vmatpush1.msra.mxu0 0.0
        %1407 = vmatprep.subr.mxu0 0.0
        %1408 = vmatpush1.msra.mxu0 0.0
        %1409 = vmatprep.subr.mxu0 0.0
        %1410 = vmatpush1.msra.mxu0 0.0
        %1411 = vmatprep.subr.mxu0 0.0
        %1412 = vmatpush1.msra.mxu0 0.0
        %1413 = vmatprep.subr.mxu0 0.0
        %1414 = vmatpush1.msra.mxu0 0.0
        %1415 = vmatprep.subr.mxu0 0.0
        %1416 = vmatpush1.msra.mxu0 0.0
        %1417 = vmatprep.subr.mxu0 0.0
        %1418 = vmatpush1.msra.mxu0 0.0
        %1419 = vmatprep.subr.mxu0 0.0
        %1420 = vmatpush1.msra.mxu0 0.0
        %1421 = vmatprep.subr.mxu0 0.0
        %1422 = vmatpush1.msra.mxu0 0.0
        %1423 = vmatprep.subr.mxu0 0.0
        %1424 = vmatpush1.msra.mxu0 0.0
        %1425 = vmatprep.subr.mxu0 0.0
        %1426 = vmatpush1.msra.mxu0 0.0
        %1427 = vmatprep.subr.mxu0 0.0
        %1428 = vmatpush1.msra.mxu0 0.0
        %1429 = vmatprep.subr.mxu0 0.0
        %1430 = vmatpush1.msra.mxu0 0.0
        %1431 = vmatprep.subr.mxu0 0.0
        %1432 = vmatpush1.msra.mxu0 0.0
        %1433 = vmatprep.subr.mxu0 0.0
        %1434 = vmatpush1.msra.mxu0 0.0
        %1435 = vmatprep.subr.mxu0 0.0
        %1436 = vmatpush1.msra.mxu0 0.0
        %1437 = vmatprep.subr.mxu0 0.0
        %1438 = vmatpush1.msra.mxu0 0.0
        %1439 = vmatprep.subr.mxu0 0.0
        %1440 = vmatpush1.msra.mxu0 0.0
        %1441 = vmatprep.subr.mxu0 0.0
        %1442 = vmatpush1.msra.mxu0 0.0
        %1443 = vmatprep.subr.mxu0 0.0
        %1444 = vmatpush1.msra.mxu0 0.0
        %1445 = vmatprep.subr.mxu0 0.0
        %1446 = vmatpush1.msra.mxu0 0.0
        %1447 = vmatprep.subr.mxu0 0.0
        %1448 = vmatpush1.msra.mxu0 0.0
        %1449 = vmatprep.subr.mxu0 0.0
        %1450 = vmatpush1.msra.mxu0 0.0
        %1451 = vmatprep.mubr.f32.mxu0 0.0
        %1452 = vmatmul.mubr.f32.gmra.mrb[0].mxu0 %v1385
        %v1453 = vpop.f32.mrb[0].mxu0
        %v1454 = vadd.f32 0.0, %v1453
        %v1455 = vpop.f32.mrb[0].mxu0
        %1456 = vdwg.mxu0
        %s1457 = scalar_lea.vmem %s9, 8
        %v1458 = vld [vmem:[%s1457] sm:$0xff]
        %v1460 = vsel %vm879, %v1454, 0
        %1462 = vmatprep.subr.mxu0 0.0
        %1463 = vmatpush1.msra.mxu0 %v1458
        %1464 = vmatprep.subr.mxu0 0.0
        %1465 = vmatpush1.msra.mxu0 0.0
        %1466 = vmatprep.subr.mxu0 0.0
        %1467 = vmatpush1.msra.mxu0 0.0
        %1468 = vmatprep.subr.mxu0 0.0
        %1469 = vmatpush1.msra.mxu0 0.0
        %1470 = vmatprep.subr.mxu0 0.0
        %1471 = vmatpush1.msra.mxu0 0.0
        %1472 = vmatprep.subr.mxu0 0.0
        %1473 = vmatpush1.msra.mxu0 0.0
        %1474 = vmatprep.subr.mxu0 0.0
        %1475 = vmatpush1.msra.mxu0 0.0
        %1476 = vmatprep.subr.mxu0 0.0
        %1477 = vmatpush1.msra.mxu0 0.0
        %1478 = vmatprep.subr.mxu0 0.0
        %1479 = vmatpush1.msra.mxu0 0.0
        %1480 = vmatprep.subr.mxu0 0.0
        %1481 = vmatpush1.msra.mxu0 0.0
        %1482 = vmatprep.subr.mxu0 0.0
        %1483 = vmatpush1.msra.mxu0 0.0
        %1484 = vmatprep.subr.mxu0 0.0
        %1485 = vmatpush1.msra.mxu0 0.0
        %1486 = vmatprep.subr.mxu0 0.0
        %1487 = vmatpush1.msra.mxu0 0.0
        %1488 = vmatprep.subr.mxu0 0.0
        %1489 = vmatpush1.msra.mxu0 0.0
        %1490 = vmatprep.subr.mxu0 0.0
        %1491 = vmatpush1.msra.mxu0 0.0
        %1492 = vmatprep.subr.mxu0 0.0
        %1493 = vmatpush1.msra.mxu0 0.0
        %1494 = vmatprep.subr.mxu0 0.0
        %1495 = vmatpush1.msra.mxu0 0.0
        %1496 = vmatprep.subr.mxu0 0.0
        %1497 = vmatpush1.msra.mxu0 0.0
        %1498 = vmatprep.subr.mxu0 0.0
        %1499 = vmatpush1.msra.mxu0 0.0
        %1500 = vmatprep.subr.mxu0 0.0
        %1501 = vmatpush1.msra.mxu0 0.0
        %1502 = vmatprep.subr.mxu0 0.0
        %1503 = vmatpush1.msra.mxu0 0.0
        %1504 = vmatprep.subr.mxu0 0.0
        %1505 = vmatpush1.msra.mxu0 0.0
        %1506 = vmatprep.subr.mxu0 0.0
        %1507 = vmatpush1.msra.mxu0 0.0
        %1508 = vmatprep.subr.mxu0 0.0
        %1509 = vmatpush1.msra.mxu0 0.0
        %1510 = vmatprep.subr.mxu0 0.0
        %1511 = vmatpush1.msra.mxu0 0.0
        %1512 = vmatprep.subr.mxu0 0.0
        %1513 = vmatpush1.msra.mxu0 0.0
        %1514 = vmatprep.subr.mxu0 0.0
        %1515 = vmatpush1.msra.mxu0 0.0
        %1516 = vmatprep.subr.mxu0 0.0
        %1517 = vmatpush1.msra.mxu0 0.0
        %1518 = vmatprep.subr.mxu0 0.0
        %1519 = vmatpush1.msra.mxu0 0.0
        %1520 = vmatprep.subr.mxu0 0.0
        %1521 = vmatpush1.msra.mxu0 0.0
        %1522 = vmatprep.subr.mxu0 0.0
        %1523 = vmatpush1.msra.mxu0 0.0
        %1524 = vmatprep.subr.mxu0 0.0
        %1525 = vmatpush1.msra.mxu0 0.0
        %1526 = vmatprep.mubr.f32.mxu0 0.0
        %1527 = vmatmul.mubr.f32.gmra.mrb[0].mxu0 %v1460
        %v1528 = vpop.f32.mrb[0].mxu0
        %v1529 = vadd.f32 0.0, %v1528
        %v1530 = vpop.f32.mrb[0].mxu0
        %1531 = vdwg.mxu0
        %v1533 = vsel %vm879, %v1040, 0
        %1535 = vmatprep.subr.mxu0 0.0
        %1536 = vmatpush1.msra.mxu0 %v1043
        %1537 = vmatprep.subr.mxu0 0.0
        %1538 = vmatpush1.msra.mxu0 0.0
        %1539 = vmatprep.subr.mxu0 0.0
        %1540 = vmatpush1.msra.mxu0 0.0
        %1541 = vmatprep.subr.mxu0 0.0
        %1542 = vmatpush1.msra.mxu0 0.0
        %1543 = vmatprep.subr.mxu0 0.0
        %1544 = vmatpush1.msra.mxu0 0.0
        %1545 = vmatprep.subr.mxu0 0.0
        %1546 = vmatpush1.msra.mxu0 0.0
        %1547 = vmatprep.subr.mxu0 0.0
        %1548 = vmatpush1.msra.mxu0 0.0
        %1549 = vmatprep.subr.mxu0 0.0
        %1550 = vmatpush1.msra.mxu0 0.0
        %1551 = vmatprep.subr.mxu0 0.0
        %1552 = vmatpush1.msra.mxu0 0.0
        %1553 = vmatprep.subr.mxu0 0.0
        %1554 = vmatpush1.msra.mxu0 0.0
        %1555 = vmatprep.subr.mxu0 0.0
        %1556 = vmatpush1.msra.mxu0 0.0
        %1557 = vmatprep.subr.mxu0 0.0
        %1558 = vmatpush1.msra.mxu0 0.0
        %1559 = vmatprep.subr.mxu0 0.0
        %1560 = vmatpush1.msra.mxu0 0.0
        %1561 = vmatprep.subr.mxu0 0.0
        %1562 = vmatpush1.msra.mxu0 0.0
        %1563 = vmatprep.subr.mxu0 0.0
        %1564 = vmatpush1.msra.mxu0 0.0
        %1565 = vmatprep.subr.mxu0 0.0
        %1566 = vmatpush1.msra.mxu0 0.0
        %1567 = vmatprep.subr.mxu0 0.0
        %1568 = vmatpush1.msra.mxu0 0.0
        %1569 = vmatprep.subr.mxu0 0.0
        %1570 = vmatpush1.msra.mxu0 0.0
        %1571 = vmatprep.subr.mxu0 0.0
        %1572 = vmatpush1.msra.mxu0 0.0
        %1573 = vmatprep.subr.mxu0 0.0
        %1574 = vmatpush1.msra.mxu0 0.0
        %1575 = vmatprep.subr.mxu0 0.0
        %1576 = vmatpush1.msra.mxu0 0.0
        %1577 = vmatprep.subr.mxu0 0.0
        %1578 = vmatpush1.msra.mxu0 0.0
        %1579 = vmatprep.subr.mxu0 0.0
        %1580 = vmatpush1.msra.mxu0 0.0
        %1581 = vmatprep.subr.mxu0 0.0
        %1582 = vmatpush1.msra.mxu0 0.0
        %1583 = vmatprep.subr.mxu0 0.0
        %1584 = vmatpush1.msra.mxu0 0.0
        %1585 = vmatprep.subr.mxu0 0.0
        %1586 = vmatpush1.msra.mxu0 0.0
        %1587 = vmatprep.subr.mxu0 0.0
        %1588 = vmatpush1.msra.mxu0 0.0
        %1589 = vmatprep.subr.mxu0 0.0
        %1590 = vmatpush1.msra.mxu0 0.0
        %1591 = vmatprep.subr.mxu0 0.0
        %1592 = vmatpush1.msra.mxu0 0.0
        %1593 = vmatprep.subr.mxu0 0.0
        %1594 = vmatpush1.msra.mxu0 0.0
        %1595 = vmatprep.subr.mxu0 0.0
        %1596 = vmatpush1.msra.mxu0 0.0
        %1597 = vmatprep.subr.mxu0 0.0
        %1598 = vmatpush1.msra.mxu0 0.0
        %1599 = vmatprep.mubr.f32.mxu0 0.0
        %1600 = vmatmul.mubr.f32.gmra.mrb[0].mxu0 %v1533
        %v1601 = vpop.f32.mrb[0].mxu0
        %v1602 = vadd.f32 %v1529, %v1601
        %v1603 = vpop.f32.mrb[0].mxu0
        %1604 = vdwg.mxu0
        %s1605 = scalar_lea.vmem %s3, 64
        %v1606 = vld [vmem:[%s1605] sm:$0xff]
        %v1607 = vld [vmem:[%s1605 + $0x8] sm:$0xff]
        %v1608 = vld [vmem:[%s1605 + $0x10] sm:$0xff]
        %v1609 = vld [vmem:[%s1605 + $0x18] sm:$0xff]
        %s1610 = scalar_lea.vmem %s4, 2
        %v1611 = vld [vmem:[%s1610] sm:$0x1]
        %v1613 = vlaneseq
        %v1614 = vshrl.u32 %v1613, 7
        %v1615 = vsub.s32 0, %v1614
        %v1616 = vrot.slane %v1611, %v1615
        %1618 = vmatprep.subr.mxu0 0.0
        %1619 = vmatpush1.msra.mxu0 %v1606
        %1620 = vmatprep.subr.mxu0 0.0
        %1621 = vmatpush1.msra.mxu0 %v1607
        %1622 = vmatprep.subr.mxu0 0.0
        %1623 = vmatpush1.msra.mxu0 %v1608
        %1624 = vmatprep.subr.mxu0 0.0
        %1625 = vmatpush1.msra.mxu0 %v1609
        %1626 = vmatprep.subr.mxu0 0.0
        %1627 = vmatpush1.msra.mxu0 0.0
        %1628 = vmatprep.subr.mxu0 0.0
        %1629 = vmatpush1.msra.mxu0 0.0
        %1630 = vmatprep.subr.mxu0 0.0
        %1631 = vmatpush1.msra.mxu0 0.0
        %1632 = vmatprep.subr.mxu0 0.0
        %1633 = vmatpush1.msra.mxu0 0.0
        %1634 = vmatprep.subr.mxu0 0.0
        %1635 = vmatpush1.msra.mxu0 0.0
        %1636 = vmatprep.subr.mxu0 0.0
        %1637 = vmatpush1.msra.mxu0 0.0
        %1638 = vmatprep.subr.mxu0 0.0
        %1639 = vmatpush1.msra.mxu0 0.0
        %1640 = vmatprep.subr.mxu0 0.0
        %1641 = vmatpush1.msra.mxu0 0.0
        %1642 = vmatprep.subr.mxu0 0.0
        %1643 = vmatpush1.msra.mxu0 0.0
        %1644 = vmatprep.subr.mxu0 0.0
        %1645 = vmatpush1.msra.mxu0 0.0
        %1646 = vmatprep.subr.mxu0 0.0
        %1647 = vmatpush1.msra.mxu0 0.0
        %1648 = vmatprep.subr.mxu0 0.0
        %1649 = vmatpush1.msra.mxu0 0.0
        %1650 = vmatprep.subr.mxu0 0.0
        %1651 = vmatpush1.msra.mxu0 0.0
        %1652 = vmatprep.subr.mxu0 0.0
        %1653 = vmatpush1.msra.mxu0 0.0
        %1654 = vmatprep.subr.mxu0 0.0
        %1655 = vmatpush1.msra.mxu0 0.0
        %1656 = vmatprep.subr.mxu0 0.0
        %1657 = vmatpush1.msra.mxu0 0.0
        %1658 = vmatprep.subr.mxu0 0.0
        %1659 = vmatpush1.msra.mxu0 0.0
        %1660 = vmatprep.subr.mxu0 0.0
        %1661 = vmatpush1.msra.mxu0 0.0
        %1662 = vmatprep.subr.mxu0 0.0
        %1663 = vmatpush1.msra.mxu0 0.0
        %1664 = vmatprep.subr.mxu0 0.0
        %1665 = vmatpush1.msra.mxu0 0.0
        %1666 = vmatprep.subr.mxu0 0.0
        %1667 = vmatpush1.msra.mxu0 0.0
        %1668 = vmatprep.subr.mxu0 0.0
        %1669 = vmatpush1.msra.mxu0 0.0
        %1670 = vmatprep.subr.mxu0 0.0
        %1671 = vmatpush1.msra.mxu0 0.0
        %1672 = vmatprep.subr.mxu0 0.0
        %1673 = vmatpush1.msra.mxu0 0.0
        %1674 = vmatprep.subr.mxu0 0.0
        %1675 = vmatpush1.msra.mxu0 0.0
        %1676 = vmatprep.subr.mxu0 0.0
        %1677 = vmatpush1.msra.mxu0 0.0
        %1678 = vmatprep.subr.mxu0 0.0
        %1679 = vmatpush1.msra.mxu0 0.0
        %1680 = vmatprep.subr.mxu0 0.0
        %1681 = vmatpush1.msra.mxu0 0.0
        %1682 = vmatprep.mubr.f32.mxu0 0.0
        %1683 = vmatmul.mubr.f32.gmra.mrb[0].mxu0 %v644
        %v1684 = vpop.f32.mrb[0].mxu0
        %v1685 = vadd.f32 %v1616, %v1684
        %v1686 = vpop.f32.mrb[0].mxu0
        %1687 = vdwg.mxu0
        %v1688 = vmul.f32 %v1685, 0.35355338
        %s1689 = scalar_lea.vmem %s5, 64
        %v1690 = vld [vmem:[%s1689] sm:$0xff]
        %v1691 = vld [vmem:[%s1689 + $0x8] sm:$0xff]
        %v1692 = vld [vmem:[%s1689 + $0x10] sm:$0xff]
        %v1693 = vld [vmem:[%s1689 + $0x18] sm:$0xff]
        %s1694 = scalar_lea.vmem %s6, 2
        %v1695 = vld [vmem:[%s1694] sm:$0x1]
        %v1697 = vlaneseq
        %v1698 = vshrl.u32 %v1697, 7
        %v1699 = vsub.s32 0, %v1698
        %v1700 = vrot.slane %v1695, %v1699
        %1702 = vmatprep.subr.mxu0 0.0
        %1703 = vmatpush1.msra.mxu0 %v1690
        %1704 = vmatprep.subr.mxu0 0.0
        %1705 = vmatpush1.msra.mxu0 %v1691
        %1706 = vmatprep.subr.mxu0 0.0
        %1707 = vmatpush1.msra.mxu0 %v1692
        %1708 = vmatprep.subr.mxu0 0.0
        %1709 = vmatpush1.msra.mxu0 %v1693
        %1710 = vmatprep.subr.mxu0 0.0
        %1711 = vmatpush1.msra.mxu0 0.0
        %1712 = vmatprep.subr.mxu0 0.0
        %1713 = vmatpush1.msra.mxu0 0.0
        %1714 = vmatprep.subr.mxu0 0.0
        %1715 = vmatpush1.msra.mxu0 0.0
        %1716 = vmatprep.subr.mxu0 0.0
        %1717 = vmatpush1.msra.mxu0 0.0
        %1718 = vmatprep.subr.mxu0 0.0
        %1719 = vmatpush1.msra.mxu0 0.0
        %1720 = vmatprep.subr.mxu0 0.0
        %1721 = vmatpush1.msra.mxu0 0.0
        %1722 = vmatprep.subr.mxu0 0.0
        %1723 = vmatpush1.msra.mxu0 0.0
        %1724 = vmatprep.subr.mxu0 0.0
        %1725 = vmatpush1.msra.mxu0 0.0
        %1726 = vmatprep.subr.mxu0 0.0
        %1727 = vmatpush1.msra.mxu0 0.0
        %1728 = vmatprep.subr.mxu0 0.0
        %1729 = vmatpush1.msra.mxu0 0.0
        %1730 = vmatprep.subr.mxu0 0.0
        %1731 = vmatpush1.msra.mxu0 0.0
        %1732 = vmatprep.subr.mxu0 0.0
        %1733 = vmatpush1.msra.mxu0 0.0
        %1734 = vmatprep.subr.mxu0 0.0
        %1735 = vmatpush1.msra.mxu0 0.0
        %1736 = vmatprep.subr.mxu0 0.0
        %1737 = vmatpush1.msra.mxu0 0.0
        %1738 = vmatprep.subr.mxu0 0.0
        %1739 = vmatpush1.msra.mxu0 0.0
        %1740 = vmatprep.subr.mxu0 0.0
        %1741 = vmatpush1.msra.mxu0 0.0
        %1742 = vmatprep.subr.mxu0 0.0
        %1743 = vmatpush1.msra.mxu0 0.0
        %1744 = vmatprep.subr.mxu0 0.0
        %1745 = vmatpush1.msra.mxu0 0.0
        %1746 = vmatprep.subr.mxu0 0.0
        %1747 = vmatpush1.msra.mxu0 0.0
        %1748 = vmatprep.subr.mxu0 0.0
        %1749 = vmatpush1.msra.mxu0 0.0
        %1750 = vmatprep.subr.mxu0 0.0
        %1751 = vmatpush1.msra.mxu0 0.0
        %1752 = vmatprep.subr.mxu0 0.0
        %1753 = vmatpush1.msra.mxu0 0.0
        %1754 = vmatprep.subr.mxu0 0.0
        %1755 = vmatpush1.msra.mxu0 0.0
        %1756 = vmatprep.subr.mxu0 0.0
        %1757 = vmatpush1.msra.mxu0 0.0
        %1758 = vmatprep.subr.mxu0 0.0
        %1759 = vmatpush1.msra.mxu0 0.0
        %1760 = vmatprep.subr.mxu0 0.0
        %1761 = vmatpush1.msra.mxu0 0.0
        %1762 = vmatprep.subr.mxu0 0.0
        %1763 = vmatpush1.msra.mxu0 0.0
        %1764 = vmatprep.subr.mxu0 0.0
        %1765 = vmatpush1.msra.mxu0 0.0
        %1766 = vmatprep.mubr.f32.mxu0 0.0
        %1767 = vmatmul.mubr.f32.gmra.mrb[0].mxu0 %v644
        %v1768 = vpop.f32.mrb[0].mxu0
        %v1769 = vadd.f32 %v1700, %v1768
        %v1770 = vpop.f32.mrb[0].mxu0
        %1771 = vdwg.mxu0
        %s1772 = scalar_lea.vmem %s7, 64
        %v1773 = vld [vmem:[%s1772] sm:$0xff]
        %v1774 = vld [vmem:[%s1772 + $0x8] sm:$0xff]
        %v1775 = vld [vmem:[%s1772 + $0x10] sm:$0xff]
        %v1776 = vld [vmem:[%s1772 + $0x18] sm:$0xff]
        %s1777 = scalar_lea.vmem %s8, 2
        %v1778 = vld [vmem:[%s1777] sm:$0x1]
        %v1780 = vlaneseq
        %v1781 = vshrl.u32 %v1780, 7
        %v1782 = vsub.s32 0, %v1781
        %v1783 = vrot.slane %v1778, %v1782
        %1785 = vmatprep.subr.mxu0 0.0
        %1786 = vmatpush1.msra.mxu0 %v1773
        %1787 = vmatprep.subr.mxu0 0.0
        %1788 = vmatpush1.msra.mxu0 %v1774
        %1789 = vmatprep.subr.mxu0 0.0
        %1790 = vmatpush1.msra.mxu0 %v1775
        %1791 = vmatprep.subr.mxu0 0.0
        %1792 = vmatpush1.msra.mxu0 %v1776
        %1793 = vmatprep.subr.mxu0 0.0
        %1794 = vmatpush1.msra.mxu0 0.0
        %1795 = vmatprep.subr.mxu0 0.0
        %1796 = vmatpush1.msra.mxu0 0.0
        %1797 = vmatprep.subr.mxu0 0.0
        %1798 = vmatpush1.msra.mxu0 0.0
        %1799 = vmatprep.subr.mxu0 0.0
        %1800 = vmatpush1.msra.mxu0 0.0
        %1801 = vmatprep.subr.mxu0 0.0
        %1802 = vmatpush1.msra.mxu0 0.0
        %1803 = vmatprep.subr.mxu0 0.0
        %1804 = vmatpush1.msra.mxu0 0.0
        %1805 = vmatprep.subr.mxu0 0.0
        %1806 = vmatpush1.msra.mxu0 0.0
        %1807 = vmatprep.subr.mxu0 0.0
        %1808 = vmatpush1.msra.mxu0 0.0
        %1809 = vmatprep.subr.mxu0 0.0
        %1810 = vmatpush1.msra.mxu0 0.0
        %1811 = vmatprep.subr.mxu0 0.0
        %1812 = vmatpush1.msra.mxu0 0.0
        %1813 = vmatprep.subr.mxu0 0.0
        %1814 = vmatpush1.msra.mxu0 0.0
        %1815 = vmatprep.subr.mxu0 0.0
        %1816 = vmatpush1.msra.mxu0 0.0
        %1817 = vmatprep.subr.mxu0 0.0
        %1818 = vmatpush1.msra.mxu0 0.0
        %1819 = vmatprep.subr.mxu0 0.0
        %1820 = vmatpush1.msra.mxu0 0.0
        %1821 = vmatprep.subr.mxu0 0.0
        %1822 = vmatpush1.msra.mxu0 0.0
        %1823 = vmatprep.subr.mxu0 0.0
        %1824 = vmatpush1.msra.mxu0 0.0
        %1825 = vmatprep.subr.mxu0 0.0
        %1826 = vmatpush1.msra.mxu0 0.0
        %1827 = vmatprep.subr.mxu0 0.0
        %1828 = vmatpush1.msra.mxu0 0.0
        %1829 = vmatprep.subr.mxu0 0.0
        %1830 = vmatpush1.msra.mxu0 0.0
        %1831 = vmatprep.subr.mxu0 0.0
        %1832 = vmatpush1.msra.mxu0 0.0
        %1833 = vmatprep.subr.mxu0 0.0
        %1834 = vmatpush1.msra.mxu0 0.0
        %1835 = vmatprep.subr.mxu0 0.0
        %1836 = vmatpush1.msra.mxu0 0.0
        %1837 = vmatprep.subr.mxu0 0.0
        %1838 = vmatpush1.msra.mxu0 0.0
        %1839 = vmatprep.subr.mxu0 0.0
        %1840 = vmatpush1.msra.mxu0 0.0
        %1841 = vmatprep.subr.mxu0 0.0
        %1842 = vmatpush1.msra.mxu0 0.0
        %1843 = vmatprep.subr.mxu0 0.0
        %1844 = vmatpush1.msra.mxu0 0.0
        %1845 = vmatprep.subr.mxu0 0.0
        %1846 = vmatpush1.msra.mxu0 0.0
        %1847 = vmatprep.subr.mxu0 0.0
        %1848 = vmatpush1.msra.mxu0 0.0
        %1849 = vmatprep.mubr.f32.mxu0 0.0
        %1850 = vmatmul.mubr.f32.gmra.mrb[0].mxu0 %v644
        %v1851 = vpop.f32.mrb[0].mxu0
        %v1852 = vadd.f32 %v1783, %v1851
        %v1853 = vpop.f32.mrb[0].mxu0
        %1854 = vdwg.mxu0
        %v1856 = vsel %vm879, %v1688, 0
        %v1859 = vsel %vm879, %v1769, 0
        %1861 = vmatprep.subr.mxu0 0.0
        %1862 = vmatpush1.xpose.msra.mxu0 %v1859
        %1863 = vmatprep.subr.mxu0 0.0
        %1864 = vmatpush1.xpose.msra.mxu0 0.0
        %1865 = vmatprep.subr.mxu0 0.0
        %1866 = vmatpush1.xpose.msra.mxu0 0.0
        %1867 = vmatprep.subr.mxu0 0.0
        %1868 = vmatpush1.xpose.msra.mxu0 0.0
        %1869 = vmatprep.subr.mxu0 0.0
        %1870 = vmatpush1.xpose.msra.mxu0 0.0
        %1871 = vmatprep.subr.mxu0 0.0
        %1872 = vmatpush1.xpose.msra.mxu0 0.0
        %1873 = vmatprep.subr.mxu0 0.0
        %1874 = vmatpush1.xpose.msra.mxu0 0.0
        %1875 = vmatprep.subr.mxu0 0.0
        %1876 = vmatpush1.xpose.msra.mxu0 0.0
        %1877 = vmatprep.subr.mxu0 0.0
        %1878 = vmatpush1.xpose.msra.mxu0 0.0
        %1879 = vmatprep.subr.mxu0 0.0
        %1880 = vmatpush1.xpose.msra.mxu0 0.0
        %1881 = vmatprep.subr.mxu0 0.0
        %1882 = vmatpush1.xpose.msra.mxu0 0.0
        %1883 = vmatprep.subr.mxu0 0.0
        %1884 = vmatpush1.xpose.msra.mxu0 0.0
        %1885 = vmatprep.subr.mxu0 0.0
        %1886 = vmatpush1.xpose.msra.mxu0 0.0
        %1887 = vmatprep.subr.mxu0 0.0
        %1888 = vmatpush1.xpose.msra.mxu0 0.0
        %1889 = vmatprep.subr.mxu0 0.0
        %1890 = vmatpush1.xpose.msra.mxu0 0.0
        %1891 = vmatprep.subr.mxu0 0.0
        %1892 = vmatpush1.xpose.msra.mxu0 0.0
        %1893 = vmatprep.subr.mxu0 0.0
        %1894 = vmatpush1.xpose.msra.mxu0 0.0
        %1895 = vmatprep.subr.mxu0 0.0
        %1896 = vmatpush1.xpose.msra.mxu0 0.0
        %1897 = vmatprep.subr.mxu0 0.0
        %1898 = vmatpush1.xpose.msra.mxu0 0.0
        %1899 = vmatprep.subr.mxu0 0.0
        %1900 = vmatpush1.xpose.msra.mxu0 0.0
        %1901 = vmatprep.subr.mxu0 0.0
        %1902 = vmatpush1.xpose.msra.mxu0 0.0
        %1903 = vmatprep.subr.mxu0 0.0
        %1904 = vmatpush1.xpose.msra.mxu0 0.0
        %1905 = vmatprep.subr.mxu0 0.0
        %1906 = vmatpush1.xpose.msra.mxu0 0.0
        %1907 = vmatprep.subr.mxu0 0.0
        %1908 = vmatpush1.xpose.msra.mxu0 0.0
        %1909 = vmatprep.subr.mxu0 0.0
        %1910 = vmatpush1.xpose.msra.mxu0 0.0
        %1911 = vmatprep.subr.mxu0 0.0
        %1912 = vmatpush1.xpose.msra.mxu0 0.0
        %1913 = vmatprep.subr.mxu0 0.0
        %1914 = vmatpush1.xpose.msra.mxu0 0.0
        %1915 = vmatprep.subr.mxu0 0.0
        %1916 = vmatpush1.xpose.msra.mxu0 0.0
        %1917 = vmatprep.subr.mxu0 0.0
        %1918 = vmatpush1.xpose.msra.mxu0 0.0
        %1919 = vmatprep.subr.mxu0 0.0
        %1920 = vmatpush1.xpose.msra.mxu0 0.0
        %1921 = vmatprep.subr.mxu0 0.0
        %1922 = vmatpush1.xpose.msra.mxu0 0.0
        %1923 = vmatprep.subr.mxu0 0.0
        %1924 = vmatpush1.xpose.msra.mxu0 0.0
        %1925 = vmatprep.mubr.f32.mxu0 0.0
        %1926 = vmatmul.mubr.f32.gmra.mrb[0].mxu0 %v1856
        %v1927 = vpop.f32.mrb[0].mxu0
        %v1928 = vadd.f32 %v630, %v1927
        %v1929 = vpop.f32.mrb[0].mxu0
        %1930 = vdwg.mxu0
        %v1931 = vsel %vm879, %v1928, -inf
        %1932 = vmax.xlane.f32.xlu0 %v1931
        %v1933 = vpop.xlane.xlu0 %1932
        %v1934 = vsub.f32 %v1928, %v1933
        %v1935 = vmul.f32 %v1934, 1.442695
        %v1936 = vpow.pop %v1935
        %v1937 = vsel %vm879, %v1936, 0.0
        %1938 = vadd.xlane.f32.xlu0 %v1937
        %v1939 = vpop.xlane.xlu0 %1938
        %v1940 = vrcp.pop %v1939
        %v1941 = vmul.f32 %v1936, %v1940
        %s1942 = sld [smem:[#allocation2 + $0x2]]
        %v1943 = vstv %s1942
        %v1944 = vmul.f32 %v1941, %v1943
        %v1946 = vsel %vm879, %v1944, 0
        %1948 = vmatprep.subr.mxu0 0.0
        %1949 = vmatpush1.msra.mxu0 %v1852
        %1950 = vmatprep.subr.mxu0 0.0
        %1951 = vmatpush1.msra.mxu0 0.0
        %1952 = vmatprep.subr.mxu0 0.0
        %1953 = vmatpush1.msra.mxu0 0.0
        %1954 = vmatprep.subr.mxu0 0.0
        %1955 = vmatpush1.msra.mxu0 0.0
        %1956 = vmatprep.subr.mxu0 0.0
        %1957 = vmatpush1.msra.mxu0 0.0
        %1958 = vmatprep.subr.mxu0 0.0
        %1959 = vmatpush1.msra.mxu0 0.0
        %1960 = vmatprep.subr.mxu0 0.0
        %1961 = vmatpush1.msra.mxu0 0.0
        %1962 = vmatprep.subr.mxu0 0.0
        %1963 = vmatpush1.msra.mxu0 0.0
        %1964 = vmatprep.subr.mxu0 0.0
        %1965 = vmatpush1.msra.mxu0 0.0
        %1966 = vmatprep.subr.mxu0 0.0
        %1967 = vmatpush1.msra.mxu0 0.0
        %1968 = vmatprep.subr.mxu0 0.0
        %1969 = vmatpush1.msra.mxu0 0.0
        %1970 = vmatprep.subr.mxu0 0.0
        %1971 = vmatpush1.msra.mxu0 0.0
        %1972 = vmatprep.subr.mxu0 0.0
        %1973 = vmatpush1.msra.mxu0 0.0
        %1974 = vmatprep.subr.mxu0 0.0
        %1975 = vmatpush1.msra.mxu0 0.0
        %1976 = vmatprep.subr.mxu0 0.0
        %1977 = vmatpush1.msra.mxu0 0.0
        %1978 = vmatprep.subr.mxu0 0.0
        %1979 = vmatpush1.msra.mxu0 0.0
        %1980 = vmatprep.subr.mxu0 0.0
        %1981 = vmatpush1.msra.mxu0 0.0
        %1982 = vmatprep.subr.mxu0 0.0
        %1983 = vmatpush1.msra.mxu0 0.0
        %1984 = vmatprep.subr.mxu0 0.0
        %1985 = vmatpush1.msra.mxu0 0.0
        %1986 = vmatprep.subr.mxu0 0.0
        %1987 = vmatpush1.msra.mxu0 0.0
        %1988 = vmatprep.subr.mxu0 0.0
        %1989 = vmatpush1.msra.mxu0 0.0
        %1990 = vmatprep.subr.mxu0 0.0
        %1991 = vmatpush1.msra.mxu0 0.0
        %1992 = vmatprep.subr.mxu0 0.0
        %1993 = vmatpush1.msra.mxu0 0.0
        %1994 = vmatprep.subr.mxu0 0.0
        %1995 = vmatpush1.msra.mxu0 0.0
        %1996 = vmatprep.subr.mxu0 0.0
        %1997 = vmatpush1.msra.mxu0 0.0
        %1998 = vmatprep.subr.mxu0 0.0
        %1999 = vmatpush1.msra.mxu0 0.0
        %2000 = vmatprep.subr.mxu0 0.0
        %2001 = vmatpush1.msra.mxu0 0.0
        %2002 = vmatprep.subr.mxu0 0.0
        %2003 = vmatpush1.msra.mxu0 0.0
        %2004 = vmatprep.subr.mxu0 0.0
        %2005 = vmatpush1.msra.mxu0 0.0
        %2006 = vmatprep.subr.mxu0 0.0
        %2007 = vmatpush1.msra.mxu0 0.0
        %2008 = vmatprep.subr.mxu0 0.0
        %2009 = vmatpush1.msra.mxu0 0.0
        %2010 = vmatprep.subr.mxu0 0.0
        %2011 = vmatpush1.msra.mxu0 0.0
        %2012 = vmatprep.mubr.f32.mxu0 0.0
        %2013 = vmatmul.mubr.f32.gmra.mrb[0].mxu0 %v1946
        %v2014 = vpop.f32.mrb[0].mxu0
        %v2015 = vadd.f32 0.0, %v2014
        %v2016 = vpop.f32.mrb[0].mxu0
        %2017 = vdwg.mxu0
        %s2018 = scalar_lea.vmem %s9, 16
        %v2019 = vld [vmem:[%s2018] sm:$0xff]
        %v2021 = vsel %vm879, %v2015, 0
        %2023 = vmatprep.subr.mxu0 0.0
        %2024 = vmatpush1.msra.mxu0 %v2019
        %2025 = vmatprep.subr.mxu0 0.0
        %2026 = vmatpush1.msra.mxu0 0.0
        %2027 = vmatprep.subr.mxu0 0.0
        %2028 = vmatpush1.msra.mxu0 0.0
        %2029 = vmatprep.subr.mxu0 0.0
        %2030 = vmatpush1.msra.mxu0 0.0
        %2031 = vmatprep.subr.mxu0 0.0
        %2032 = vmatpush1.msra.mxu0 0.0
        %2033 = vmatprep.subr.mxu0 0.0
        %2034 = vmatpush1.msra.mxu0 0.0
        %2035 = vmatprep.subr.mxu0 0.0
        %2036 = vmatpush1.msra.mxu0 0.0
        %2037 = vmatprep.subr.mxu0 0.0
        %2038 = vmatpush1.msra.mxu0 0.0
        %2039 = vmatprep.subr.mxu0 0.0
        %2040 = vmatpush1.msra.mxu0 0.0
        %2041 = vmatprep.subr.mxu0 0.0
        %2042 = vmatpush1.msra.mxu0 0.0
        %2043 = vmatprep.subr.mxu0 0.0
        %2044 = vmatpush1.msra.mxu0 0.0
        %2045 = vmatprep.subr.mxu0 0.0
        %2046 = vmatpush1.msra.mxu0 0.0
        %2047 = vmatprep.subr.mxu0 0.0
        %2048 = vmatpush1.msra.mxu0 0.0
        %2049 = vmatprep.subr.mxu0 0.0
        %2050 = vmatpush1.msra.mxu0 0.0
        %2051 = vmatprep.subr.mxu0 0.0
        %2052 = vmatpush1.msra.mxu0 0.0
        %2053 = vmatprep.subr.mxu0 0.0
        %2054 = vmatpush1.msra.mxu0 0.0
        %2055 = vmatprep.subr.mxu0 0.0
        %2056 = vmatpush1.msra.mxu0 0.0
        %2057 = vmatprep.subr.mxu0 0.0
        %2058 = vmatpush1.msra.mxu0 0.0
        %2059 = vmatprep.subr.mxu0 0.0
        %2060 = vmatpush1.msra.mxu0 0.0
        %2061 = vmatprep.subr.mxu0 0.0
        %2062 = vmatpush1.msra.mxu0 0.0
        %2063 = vmatprep.subr.mxu0 0.0
        %2064 = vmatpush1.msra.mxu0 0.0
        %2065 = vmatprep.subr.mxu0 0.0
        %2066 = vmatpush1.msra.mxu0 0.0
        %2067 = vmatprep.subr.mxu0 0.0
        %2068 = vmatpush1.msra.mxu0 0.0
        %2069 = vmatprep.subr.mxu0 0.0
        %2070 = vmatpush1.msra.mxu0 0.0
        %2071 = vmatprep.subr.mxu0 0.0
        %2072 = vmatpush1.msra.mxu0 0.0
        %2073 = vmatprep.subr.mxu0 0.0
        %2074 = vmatpush1.msra.mxu0 0.0
        %2075 = vmatprep.subr.mxu0 0.0
        %2076 = vmatpush1.msra.mxu0 0.0
        %2077 = vmatprep.subr.mxu0 0.0
        %2078 = vmatpush1.msra.mxu0 0.0
        %2079 = vmatprep.subr.mxu0 0.0
        %2080 = vmatpush1.msra.mxu0 0.0
        %2081 = vmatprep.subr.mxu0 0.0
        %2082 = vmatpush1.msra.mxu0 0.0
        %2083 = vmatprep.subr.mxu0 0.0
        %2084 = vmatpush1.msra.mxu0 0.0
        %2085 = vmatprep.subr.mxu0 0.0
        %2086 = vmatpush1.msra.mxu0 0.0
        %2087 = vmatprep.mubr.f32.mxu0 0.0
        %2088 = vmatmul.mubr.f32.gmra.mrb[0].mxu0 %v2021
        %v2089 = vpop.f32.mrb[0].mxu0
        %v2090 = vadd.f32 0.0, %v2089
        %v2091 = vpop.f32.mrb[0].mxu0
        %2092 = vdwg.mxu0
        %v2093 = vadd.f32 %v1602, %v2090
        %s2094 = scalar_lea.vmem %s3, 96
        %v2095 = vld [vmem:[%s2094] sm:$0xff]
        %v2096 = vld [vmem:[%s2094 + $0x8] sm:$0xff]
        %v2097 = vld [vmem:[%s2094 + $0x10] sm:$0xff]
        %v2098 = vld [vmem:[%s2094 + $0x18] sm:$0xff]
        %s2099 = scalar_lea.vmem %s4, 3
        %v2100 = vld [vmem:[%s2099] sm:$0x1]
        %v2102 = vlaneseq
        %v2103 = vshrl.u32 %v2102, 7
        %v2104 = vsub.s32 0, %v2103
        %v2105 = vrot.slane %v2100, %v2104
        %2107 = vmatprep.subr.mxu0 0.0
        %2108 = vmatpush1.msra.mxu0 %v2095
        %2109 = vmatprep.subr.mxu0 0.0
        %2110 = vmatpush1.msra.mxu0 %v2096
        %2111 = vmatprep.subr.mxu0 0.0
        %2112 = vmatpush1.msra.mxu0 %v2097
        %2113 = vmatprep.subr.mxu0 0.0
        %2114 = vmatpush1.msra.mxu0 %v2098
        %2115 = vmatprep.subr.mxu0 0.0
        %2116 = vmatpush1.msra.mxu0 0.0
        %2117 = vmatprep.subr.mxu0 0.0
        %2118 = vmatpush1.msra.mxu0 0.0
        %2119 = vmatprep.subr.mxu0 0.0
        %2120 = vmatpush1.msra.mxu0 0.0
        %2121 = vmatprep.subr.mxu0 0.0
        %2122 = vmatpush1.msra.mxu0 0.0
        %2123 = vmatprep.subr.mxu0 0.0
        %2124 = vmatpush1.msra.mxu0 0.0
        %2125 = vmatprep.subr.mxu0 0.0
        %2126 = vmatpush1.msra.mxu0 0.0
        %2127 = vmatprep.subr.mxu0 0.0
        %2128 = vmatpush1.msra.mxu0 0.0
        %2129 = vmatprep.subr.mxu0 0.0
        %2130 = vmatpush1.msra.mxu0 0.0
        %2131 = vmatprep.subr.mxu0 0.0
        %2132 = vmatpush1.msra.mxu0 0.0
        %2133 = vmatprep.subr.mxu0 0.0
        %2134 = vmatpush1.msra.mxu0 0.0
        %2135 = vmatprep.subr.mxu0 0.0
        %2136 = vmatpush1.msra.mxu0 0.0
        %2137 = vmatprep.subr.mxu0 0.0
        %2138 = vmatpush1.msra.mxu0 0.0
        %2139 = vmatprep.subr.mxu0 0.0
        %2140 = vmatpush1.msra.mxu0 0.0
        %2141 = vmatprep.subr.mxu0 0.0
        %2142 = vmatpush1.msra.mxu0 0.0
        %2143 = vmatprep.subr.mxu0 0.0
        %2144 = vmatpush1.msra.mxu0 0.0
        %2145 = vmatprep.subr.mxu0 0.0
        %2146 = vmatpush1.msra.mxu0 0.0
        %2147 = vmatprep.subr.mxu0 0.0
        %2148 = vmatpush1.msra.mxu0 0.0
        %2149 = vmatprep.subr.mxu0 0.0
        %2150 = vmatpush1.msra.mxu0 0.0
        %2151 = vmatprep.subr.mxu0 0.0
        %2152 = vmatpush1.msra.mxu0 0.0
        %2153 = vmatprep.subr.mxu0 0.0
        %2154 = vmatpush1.msra.mxu0 0.0
        %2155 = vmatprep.subr.mxu0 0.0
        %2156 = vmatpush1.msra.mxu0 0.0
        %2157 = vmatprep.subr.mxu0 0.0
        %2158 = vmatpush1.msra.mxu0 0.0
        %2159 = vmatprep.subr.mxu0 0.0
        %2160 = vmatpush1.msra.mxu0 0.0
        %2161 = vmatprep.subr.mxu0 0.0
        %2162 = vmatpush1.msra.mxu0 0.0
        %2163 = vmatprep.subr.mxu0 0.0
        %2164 = vmatpush1.msra.mxu0 0.0
        %2165 = vmatprep.subr.mxu0 0.0
        %2166 = vmatpush1.msra.mxu0 0.0
        %2167 = vmatprep.subr.mxu0 0.0
        %2168 = vmatpush1.msra.mxu0 0.0
        %2169 = vmatprep.subr.mxu0 0.0
        %2170 = vmatpush1.msra.mxu0 0.0
        %2171 = vmatprep.mubr.f32.mxu0 0.0
        %2172 = vmatmul.mubr.f32.gmra.mrb[0].mxu0 %v644
        %v2173 = vpop.f32.mrb[0].mxu0
        %v2174 = vadd.f32 %v2105, %v2173
        %v2175 = vpop.f32.mrb[0].mxu0
        %2176 = vdwg.mxu0
        %v2177 = vmul.f32 %v2174, 0.35355338
        %s2178 = scalar_lea.vmem %s5, 96
        %v2179 = vld [vmem:[%s2178] sm:$0xff]
        %v2180 = vld [vmem:[%s2178 + $0x8] sm:$0xff]
        %v2181 = vld [vmem:[%s2178 + $0x10] sm:$0xff]
        %v2182 = vld [vmem:[%s2178 + $0x18] sm:$0xff]
        %s2183 = scalar_lea.vmem %s6, 3
        %v2184 = vld [vmem:[%s2183] sm:$0x1]
        %v2186 = vlaneseq
        %v2187 = vshrl.u32 %v2186, 7
        %v2188 = vsub.s32 0, %v2187
        %v2189 = vrot.slane %v2184, %v2188
        %2191 = vmatprep.subr.mxu0 0.0
        %2192 = vmatpush1.msra.mxu0 %v2179
        %2193 = vmatprep.subr.mxu0 0.0
        %2194 = vmatpush1.msra.mxu0 %v2180
        %2195 = vmatprep.subr.mxu0 0.0
        %2196 = vmatpush1.msra.mxu0 %v2181
        %2197 = vmatprep.subr.mxu0 0.0
        %2198 = vmatpush1.msra.mxu0 %v2182
        %2199 = vmatprep.subr.mxu0 0.0
        %2200 = vmatpush1.msra.mxu0 0.0
        %2201 = vmatprep.subr.mxu0 0.0
        %2202 = vmatpush1.msra.mxu0 0.0
        %2203 = vmatprep.subr.mxu0 0.0
        %2204 = vmatpush1.msra.mxu0 0.0
        %2205 = vmatprep.subr.mxu0 0.0
        %2206 = vmatpush1.msra.mxu0 0.0
        %2207 = vmatprep.subr.mxu0 0.0
        %2208 = vmatpush1.msra.mxu0 0.0
        %2209 = vmatprep.subr.mxu0 0.0
        %2210 = vmatpush1.msra.mxu0 0.0
        %2211 = vmatprep.subr.mxu0 0.0
        %2212 = vmatpush1.msra.mxu0 0.0
        %2213 = vmatprep.subr.mxu0 0.0
        %2214 = vmatpush1.msra.mxu0 0.0
        %2215 = vmatprep.subr.mxu0 0.0
        %2216 = vmatpush1.msra.mxu0 0.0
        %2217 = vmatprep.subr.mxu0 0.0
        %2218 = vmatpush1.msra.mxu0 0.0
        %2219 = vmatprep.subr.mxu0 0.0
        %2220 = vmatpush1.msra.mxu0 0.0
        %2221 = vmatprep.subr.mxu0 0.0
        %2222 = vmatpush1.msra.mxu0 0.0
        %2223 = vmatprep.subr.mxu0 0.0
        %2224 = vmatpush1.msra.mxu0 0.0
        %2225 = vmatprep.subr.mxu0 0.0
        %2226 = vmatpush1.msra.mxu0 0.0
        %2227 = vmatprep.subr.mxu0 0.0
        %2228 = vmatpush1.msra.mxu0 0.0
        %2229 = vmatprep.subr.mxu0 0.0
        %2230 = vmatpush1.msra.mxu0 0.0
        %2231 = vmatprep.subr.mxu0 0.0
        %2232 = vmatpush1.msra.mxu0 0.0
        %2233 = vmatprep.subr.mxu0 0.0
        %2234 = vmatpush1.msra.mxu0 0.0
        %2235 = vmatprep.subr.mxu0 0.0
        %2236 = vmatpush1.msra.mxu0 0.0
        %2237 = vmatprep.subr.mxu0 0.0
        %2238 = vmatpush1.msra.mxu0 0.0
        %2239 = vmatprep.subr.mxu0 0.0
        %2240 = vmatpush1.msra.mxu0 0.0
        %2241 = vmatprep.subr.mxu0 0.0
        %2242 = vmatpush1.msra.mxu0 0.0
        %2243 = vmatprep.subr.mxu0 0.0
        %2244 = vmatpush1.msra.mxu0 0.0
        %2245 = vmatprep.subr.mxu0 0.0
        %2246 = vmatpush1.msra.mxu0 0.0
        %2247 = vmatprep.subr.mxu0 0.0
        %2248 = vmatpush1.msra.mxu0 0.0
        %2249 = vmatprep.subr.mxu0 0.0
        %2250 = vmatpush1.msra.mxu0 0.0
        %2251 = vmatprep.subr.mxu0 0.0
        %2252 = vmatpush1.msra.mxu0 0.0
        %2253 = vmatprep.subr.mxu0 0.0
        %2254 = vmatpush1.msra.mxu0 0.0
        %2255 = vmatprep.mubr.f32.mxu0 0.0
        %2256 = vmatmul.mubr.f32.gmra.mrb[0].mxu0 %v644
        %v2257 = vpop.f32.mrb[0].mxu0
        %v2258 = vadd.f32 %v2189, %v2257
        %v2259 = vpop.f32.mrb[0].mxu0
        %2260 = vdwg.mxu0
        %s2261 = scalar_lea.vmem %s7, 96
        %v2262 = vld [vmem:[%s2261] sm:$0xff]
        %v2263 = vld [vmem:[%s2261 + $0x8] sm:$0xff]
        %v2264 = vld [vmem:[%s2261 + $0x10] sm:$0xff]
        %v2265 = vld [vmem:[%s2261 + $0x18] sm:$0xff]
        %s2266 = scalar_lea.vmem %s8, 3
        %v2267 = vld [vmem:[%s2266] sm:$0x1]
        %v2269 = vlaneseq
        %v2270 = vshrl.u32 %v2269, 7
        %v2271 = vsub.s32 0, %v2270
        %v2272 = vrot.slane %v2267, %v2271
        %2274 = vmatprep.subr.mxu0 0.0
        %2275 = vmatpush1.msra.mxu0 %v2262
        %2276 = vmatprep.subr.mxu0 0.0
        %2277 = vmatpush1.msra.mxu0 %v2263
        %2278 = vmatprep.subr.mxu0 0.0
        %2279 = vmatpush1.msra.mxu0 %v2264
        %2280 = vmatprep.subr.mxu0 0.0
        %2281 = vmatpush1.msra.mxu0 %v2265
        %2282 = vmatprep.subr.mxu0 0.0
        %2283 = vmatpush1.msra.mxu0 0.0
        %2284 = vmatprep.subr.mxu0 0.0
        %2285 = vmatpush1.msra.mxu0 0.0
        %2286 = vmatprep.subr.mxu0 0.0
        %2287 = vmatpush1.msra.mxu0 0.0
        %2288 = vmatprep.subr.mxu0 0.0
        %2289 = vmatpush1.msra.mxu0 0.0
        %2290 = vmatprep.subr.mxu0 0.0
        %2291 = vmatpush1.msra.mxu0 0.0
        %2292 = vmatprep.subr.mxu0 0.0
        %2293 = vmatpush1.msra.mxu0 0.0
        %2294 = vmatprep.subr.mxu0 0.0
        %2295 = vmatpush1.msra.mxu0 0.0
        %2296 = vmatprep.subr.mxu0 0.0
        %2297 = vmatpush1.msra.mxu0 0.0
        %2298 = vmatprep.subr.mxu0 0.0
        %2299 = vmatpush1.msra.mxu0 0.0
        %2300 = vmatprep.subr.mxu0 0.0
        %2301 = vmatpush1.msra.mxu0 0.0
        %2302 = vmatprep.subr.mxu0 0.0
        %2303 = vmatpush1.msra.mxu0 0.0
        %2304 = vmatprep.subr.mxu0 0.0
        %2305 = vmatpush1.msra.mxu0 0.0
        %2306 = vmatprep.subr.mxu0 0.0
        %2307 = vmatpush1.msra.mxu0 0.0
        %2308 = vmatprep.subr.mxu0 0.0
        %2309 = vmatpush1.msra.mxu0 0.0
        %2310 = vmatprep.subr.mxu0 0.0
        %2311 = vmatpush1.msra.mxu0 0.0
        %2312 = vmatprep.subr.mxu0 0.0
        %2313 = vmatpush1.msra.mxu0 0.0
        %2314 = vmatprep.subr.mxu0 0.0
        %2315 = vmatpush1.msra.mxu0 0.0
        %2316 = vmatprep.subr.mxu0 0.0
        %2317 = vmatpush1.msra.mxu0 0.0
        %2318 = vmatprep.subr.mxu0 0.0
        %2319 = vmatpush1.msra.mxu0 0.0
        %2320 = vmatprep.subr.mxu0 0.0
        %2321 = vmatpush1.msra.mxu0 0.0
        %2322 = vmatprep.subr.mxu0 0.0
        %2323 = vmatpush1.msra.mxu0 0.0
        %2324 = vmatprep.subr.mxu0 0.0
        %2325 = vmatpush1.msra.mxu0 0.0
        %2326 = vmatprep.subr.mxu0 0.0
        %2327 = vmatpush1.msra.mxu0 0.0
        %2328 = vmatprep.subr.mxu0 0.0
        %2329 = vmatpush1.msra.mxu0 0.0
        %2330 = vmatprep.subr.mxu0 0.0
        %2331 = vmatpush1.msra.mxu0 0.0
        %2332 = vmatprep.subr.mxu0 0.0
        %2333 = vmatpush1.msra.mxu0 0.0
        %2334 = vmatprep.subr.mxu0 0.0
        %2335 = vmatpush1.msra.mxu0 0.0
        %2336 = vmatprep.subr.mxu0 0.0
        %2337 = vmatpush1.msra.mxu0 0.0
        %2338 = vmatprep.mubr.f32.mxu0 0.0
        %2339 = vmatmul.mubr.f32.gmra.mrb[0].mxu0 %v644
        %v2340 = vpop.f32.mrb[0].mxu0
        %v2341 = vadd.f32 %v2272, %v2340
        %v2342 = vpop.f32.mrb[0].mxu0
        %2343 = vdwg.mxu0
        %v2345 = vsel %vm879, %v2177, 0
        %v2348 = vsel %vm879, %v2258, 0
        %2350 = vmatprep.subr.mxu0 0.0
        %2351 = vmatpush1.xpose.msra.mxu0 %v2348
        %2352 = vmatprep.subr.mxu0 0.0
        %2353 = vmatpush1.xpose.msra.mxu0 0.0
        %2354 = vmatprep.subr.mxu0 0.0
        %2355 = vmatpush1.xpose.msra.mxu0 0.0
        %2356 = vmatprep.subr.mxu0 0.0
        %2357 = vmatpush1.xpose.msra.mxu0 0.0
        %2358 = vmatprep.subr.mxu0 0.0
        %2359 = vmatpush1.xpose.msra.mxu0 0.0
        %2360 = vmatprep.subr.mxu0 0.0
        %2361 = vmatpush1.xpose.msra.mxu0 0.0
        %2362 = vmatprep.subr.mxu0 0.0
        %2363 = vmatpush1.xpose.msra.mxu0 0.0
        %2364 = vmatprep.subr.mxu0 0.0
        %2365 = vmatpush1.xpose.msra.mxu0 0.0
        %2366 = vmatprep.subr.mxu0 0.0
        %2367 = vmatpush1.xpose.msra.mxu0 0.0
        %2368 = vmatprep.subr.mxu0 0.0
        %2369 = vmatpush1.xpose.msra.mxu0 0.0
        %2370 = vmatprep.subr.mxu0 0.0
        %2371 = vmatpush1.xpose.msra.mxu0 0.0
        %2372 = vmatprep.subr.mxu0 0.0
        %2373 = vmatpush1.xpose.msra.mxu0 0.0
        %2374 = vmatprep.subr.mxu0 0.0
        %2375 = vmatpush1.xpose.msra.mxu0 0.0
        %2376 = vmatprep.subr.mxu0 0.0
        %2377 = vmatpush1.xpose.msra.mxu0 0.0
        %2378 = vmatprep.subr.mxu0 0.0
        %2379 = vmatpush1.xpose.msra.mxu0 0.0
        %2380 = vmatprep.subr.mxu0 0.0
        %2381 = vmatpush1.xpose.msra.mxu0 0.0
        %2382 = vmatprep.subr.mxu0 0.0
        %2383 = vmatpush1.xpose.msra.mxu0 0.0
        %2384 = vmatprep.subr.mxu0 0.0
        %2385 = vmatpush1.xpose.msra.mxu0 0.0
        %2386 = vmatprep.subr.mxu0 0.0
        %2387 = vmatpush1.xpose.msra.mxu0 0.0
        %2388 = vmatprep.subr.mxu0 0.0
        %2389 = vmatpush1.xpose.msra.mxu0 0.0
        %2390 = vmatprep.subr.mxu0 0.0
        %2391 = vmatpush1.xpose.msra.mxu0 0.0
        %2392 = vmatprep.subr.mxu0 0.0
        %2393 = vmatpush1.xpose.msra.mxu0 0.0
        %2394 = vmatprep.subr.mxu0 0.0
        %2395 = vmatpush1.xpose.msra.mxu0 0.0
        %2396 = vmatprep.subr.mxu0 0.0
        %2397 = vmatpush1.xpose.msra.mxu0 0.0
        %2398 = vmatprep.subr.mxu0 0.0
        %2399 = vmatpush1.xpose.msra.mxu0 0.0
        %2400 = vmatprep.subr.mxu0 0.0
        %2401 = vmatpush1.xpose.msra.mxu0 0.0
        %2402 = vmatprep.subr.mxu0 0.0
        %2403 = vmatpush1.xpose.msra.mxu0 0.0
        %2404 = vmatprep.subr.mxu0 0.0
        %2405 = vmatpush1.xpose.msra.mxu0 0.0
        %2406 = vmatprep.subr.mxu0 0.0
        %2407 = vmatpush1.xpose.msra.mxu0 0.0
        %2408 = vmatprep.subr.mxu0 0.0
        %2409 = vmatpush1.xpose.msra.mxu0 0.0
        %2410 = vmatprep.subr.mxu0 0.0
        %2411 = vmatpush1.xpose.msra.mxu0 0.0
        %2412 = vmatprep.subr.mxu0 0.0
        %2413 = vmatpush1.xpose.msra.mxu0 0.0
        %2414 = vmatprep.mubr.f32.mxu0 0.0
        %2415 = vmatmul.mubr.f32.gmra.mrb[0].mxu0 %v2345
        %v2416 = vpop.f32.mrb[0].mxu0
        %v2417 = vadd.f32 %v630, %v2416
        %v2418 = vpop.f32.mrb[0].mxu0
        %2419 = vdwg.mxu0
        %v2420 = vsel %vm879, %v2417, -inf
        %2421 = vmax.xlane.f32.xlu0 %v2420
        %v2422 = vpop.xlane.xlu0 %2421
        %v2423 = vsub.f32 %v2417, %v2422
        %v2424 = vmul.f32 %v2423, 1.442695
        %v2425 = vpow.pop %v2424
        %v2426 = vsel %vm879, %v2425, 0.0
        %2427 = vadd.xlane.f32.xlu0 %v2426
        %v2428 = vpop.xlane.xlu0 %2427
        %v2429 = vrcp.pop %v2428
        %v2430 = vmul.f32 %v2425, %v2429
        %s2431 = sld [smem:[#allocation2 + $0x3]]
        %v2432 = vstv %s2431
        %v2433 = vmul.f32 %v2430, %v2432
        %v2435 = vsel %vm879, %v2433, 0
        %2437 = vmatprep.subr.mxu0 0.0
        %2438 = vmatpush1.msra.mxu0 %v2341
        %2439 = vmatprep.subr.mxu0 0.0
        %2440 = vmatpush1.msra.mxu0 0.0
        %2441 = vmatprep.subr.mxu0 0.0
        %2442 = vmatpush1.msra.mxu0 0.0
        %2443 = vmatprep.subr.mxu0 0.0
        %2444 = vmatpush1.msra.mxu0 0.0
        %2445 = vmatprep.subr.mxu0 0.0
        %2446 = vmatpush1.msra.mxu0 0.0
        %2447 = vmatprep.subr.mxu0 0.0
        %2448 = vmatpush1.msra.mxu0 0.0
        %2449 = vmatprep.subr.mxu0 0.0
        %2450 = vmatpush1.msra.mxu0 0.0
        %2451 = vmatprep.subr.mxu0 0.0
        %2452 = vmatpush1.msra.mxu0 0.0
        %2453 = vmatprep.subr.mxu0 0.0
        %2454 = vmatpush1.msra.mxu0 0.0
        %2455 = vmatprep.subr.mxu0 0.0
        %2456 = vmatpush1.msra.mxu0 0.0
        %2457 = vmatprep.subr.mxu0 0.0
        %2458 = vmatpush1.msra.mxu0 0.0
        %2459 = vmatprep.subr.mxu0 0.0
        %2460 = vmatpush1.msra.mxu0 0.0
        %2461 = vmatprep.subr.mxu0 0.0
        %2462 = vmatpush1.msra.mxu0 0.0
        %2463 = vmatprep.subr.mxu0 0.0
        %2464 = vmatpush1.msra.mxu0 0.0
        %2465 = vmatprep.subr.mxu0 0.0
        %2466 = vmatpush1.msra.mxu0 0.0
        %2467 = vmatprep.subr.mxu0 0.0
        %2468 = vmatpush1.msra.mxu0 0.0
        %2469 = vmatprep.subr.mxu0 0.0
        %2470 = vmatpush1.msra.mxu0 0.0
        %2471 = vmatprep.subr.mxu0 0.0
        %2472 = vmatpush1.msra.mxu0 0.0
        %2473 = vmatprep.subr.mxu0 0.0
        %2474 = vmatpush1.msra.mxu0 0.0
        %2475 = vmatprep.subr.mxu0 0.0
        %2476 = vmatpush1.msra.mxu0 0.0
        %2477 = vmatprep.subr.mxu0 0.0
        %2478 = vmatpush1.msra.mxu0 0.0
        %2479 = vmatprep.subr.mxu0 0.0
        %2480 = vmatpush1.msra.mxu0 0.0
        %2481 = vmatprep.subr.mxu0 0.0
        %2482 = vmatpush1.msra.mxu0 0.0
        %2483 = vmatprep.subr.mxu0 0.0
        %2484 = vmatpush1.msra.mxu0 0.0
        %2485 = vmatprep.subr.mxu0 0.0
        %2486 = vmatpush1.msra.mxu0 0.0
        %2487 = vmatprep.subr.mxu0 0.0
        %2488 = vmatpush1.msra.mxu0 0.0
        %2489 = vmatprep.subr.mxu0 0.0
        %2490 = vmatpush1.msra.mxu0 0.0
        %2491 = vmatprep.subr.mxu0 0.0
        %2492 = vmatpush1.msra.mxu0 0.0
        %2493 = vmatprep.subr.mxu0 0.0
        %2494 = vmatpush1.msra.mxu0 0.0
        %2495 = vmatprep.subr.mxu0 0.0
        %2496 = vmatpush1.msra.mxu0 0.0
        %2497 = vmatprep.subr.mxu0 0.0
        %2498 = vmatpush1.msra.mxu0 0.0
        %2499 = vmatprep.subr.mxu0 0.0
        %2500 = vmatpush1.msra.mxu0 0.0
        %2501 = vmatprep.mubr.f32.mxu0 0.0
        %2502 = vmatmul.mubr.f32.gmra.mrb[0].mxu0 %v2435
        %v2503 = vpop.f32.mrb[0].mxu0
        %v2504 = vadd.f32 0.0, %v2503
        %v2505 = vpop.f32.mrb[0].mxu0
        %2506 = vdwg.mxu0
        %s2507 = scalar_lea.vmem %s9, 24
        %v2508 = vld [vmem:[%s2507] sm:$0xff]
        %v2510 = vsel %vm879, %v2504, 0
        %2512 = vmatprep.subr.mxu0 0.0
        %2513 = vmatpush1.msra.mxu0 %v2508
        %2514 = vmatprep.subr.mxu0 0.0
        %2515 = vmatpush1.msra.mxu0 0.0
        %2516 = vmatprep.subr.mxu0 0.0
        %2517 = vmatpush1.msra.mxu0 0.0
        %2518 = vmatprep.subr.mxu0 0.0
        %2519 = vmatpush1.msra.mxu0 0.0
        %2520 = vmatprep.subr.mxu0 0.0
        %2521 = vmatpush1.msra.mxu0 0.0
        %2522 = vmatprep.subr.mxu0 0.0
        %2523 = vmatpush1.msra.mxu0 0.0
        %2524 = vmatprep.subr.mxu0 0.0
        %2525 = vmatpush1.msra.mxu0 0.0
        %2526 = vmatprep.subr.mxu0 0.0
        %2527 = vmatpush1.msra.mxu0 0.0
        %2528 = vmatprep.subr.mxu0 0.0
        %2529 = vmatpush1.msra.mxu0 0.0
        %2530 = vmatprep.subr.mxu0 0.0
        %2531 = vmatpush1.msra.mxu0 0.0
        %2532 = vmatprep.subr.mxu0 0.0
        %2533 = vmatpush1.msra.mxu0 0.0
        %2534 = vmatprep.subr.mxu0 0.0
        %2535 = vmatpush1.msra.mxu0 0.0
        %2536 = vmatprep.subr.mxu0 0.0
        %2537 = vmatpush1.msra.mxu0 0.0
        %2538 = vmatprep.subr.mxu0 0.0
        %2539 = vmatpush1.msra.mxu0 0.0
        %2540 = vmatprep.subr.mxu0 0.0
        %2541 = vmatpush1.msra.mxu0 0.0
        %2542 = vmatprep.subr.mxu0 0.0
        %2543 = vmatpush1.msra.mxu0 0.0
        %2544 = vmatprep.subr.mxu0 0.0
        %2545 = vmatpush1.msra.mxu0 0.0
        %2546 = vmatprep.subr.mxu0 0.0
        %2547 = vmatpush1.msra.mxu0 0.0
        %2548 = vmatprep.subr.mxu0 0.0
        %2549 = vmatpush1.msra.mxu0 0.0
        %2550 = vmatprep.subr.mxu0 0.0
        %2551 = vmatpush1.msra.mxu0 0.0
        %2552 = vmatprep.subr.mxu0 0.0
        %2553 = vmatpush1.msra.mxu0 0.0
        %2554 = vmatprep.subr.mxu0 0.0
        %2555 = vmatpush1.msra.mxu0 0.0
        %2556 = vmatprep.subr.mxu0 0.0
        %2557 = vmatpush1.msra.mxu0 0.0
        %2558 = vmatprep.subr.mxu0 0.0
        %2559 = vmatpush1.msra.mxu0 0.0
        %2560 = vmatprep.subr.mxu0 0.0
        %2561 = vmatpush1.msra.mxu0 0.0
        %2562 = vmatprep.subr.mxu0 0.0
        %2563 = vmatpush1.msra.mxu0 0.0
        %2564 = vmatprep.subr.mxu0 0.0
        %2565 = vmatpush1.msra.mxu0 0.0
        %2566 = vmatprep.subr.mxu0 0.0
        %2567 = vmatpush1.msra.mxu0 0.0
        %2568 = vmatprep.subr.mxu0 0.0
        %2569 = vmatpush1.msra.mxu0 0.0
        %2570 = vmatprep.subr.mxu0 0.0
        %2571 = vmatpush1.msra.mxu0 0.0
        %2572 = vmatprep.subr.mxu0 0.0
        %2573 = vmatpush1.msra.mxu0 0.0
        %2574 = vmatprep.subr.mxu0 0.0
        %2575 = vmatpush1.msra.mxu0 0.0
        %2576 = vmatprep.mubr.f32.mxu0 0.0
        %2577 = vmatmul.mubr.f32.gmra.mrb[0].mxu0 %v2510
        %v2578 = vpop.f32.mrb[0].mxu0
        %v2579 = vadd.f32 0.0, %v2578
        %v2580 = vpop.f32.mrb[0].mxu0
        %2581 = vdwg.mxu0
        %v2582 = vadd.f32 %v2093, %v2579
        %v2583 = vld [vmem:[%s10] sm:$0x1]
        %v2585 = vlaneseq
        %v2586 = vshrl.u32 %v2585, 7
        %v2587 = vsub.s32 0, %v2586
        %v2588 = vrot.slane %v2583, %v2587
        %v2590 = vadd.f32 %v2582, %v2588
        %v2591 = vadd.f32 %v629, %v2590
        %v2592 = vsel %vm642, %v2591, 0.0
        %2593 = vadd.xlane.f32.xlu0 %v2592
        %v2594 = vpop.xlane.xlu0 %2593
        %v2595 = vrcp.pop 32.0
        %v2596 = vmul.f32 %v2594, %v2595
        %v2597 = vsub.f32 %v2591, %v2596
        %v2598 = vmul.f32 %v2597, %v2597
        %v2599 = vsel %vm642, %v2598, 0.0
        %2600 = vadd.xlane.f32.xlu0 %v2599
        %v2601 = vpop.xlane.xlu0 %2600
        %v2602 = vmul.f32 %v2601, %v2595
        %v2603 = vadd.f32 %v2602, 1e-05
        %v2604 = vrsqrt.pop %v2603
        %v2605 = vmul.f32 %v2597, %v2604
        %v2606 = vld [vmem:[%s11] sm:$0x1]
        %v2608 = vlaneseq
        %v2609 = vshrl.u32 %v2608, 7
        %v2610 = vsub.s32 0, %v2609
        %v2611 = vrot.slane %v2606, %v2610
        %v2613 = vmul.f32 %v2605, %v2611
        %v2614 = vld [vmem:[%s12] sm:$0x1]
        %v2616 = vlaneseq
        %v2617 = vshrl.u32 %v2616, 7
        %v2618 = vsub.s32 0, %v2617
        %v2619 = vrot.slane %v2614, %v2618
        %v2621 = vadd.f32 %v2613, %v2619
        %v2622 = vld [vmem:[%s13] sm:$0xff]
        %v2623 = vld [vmem:[%s13 + $0x8] sm:$0xff]
        %v2624 = vld [vmem:[%s13 + $0x10] sm:$0xff]
        %v2625 = vld [vmem:[%s13 + $0x18] sm:$0xff]
        %v2626 = vld [vmem:[%s14] sm:$0x1]
        %v2628 = vlaneseq
        %v2629 = vshrl.u32 %v2628, 7
        %v2630 = vsub.s32 0, %v2629
        %v2631 = vrot.slane %v2626, %v2630
        %v2634 = vsel %vm642, %v2621, 0
        %2636 = vmatprep.subr.mxu0 0.0
        %2637 = vmatpush1.msra.mxu0 %v2622
        %2638 = vmatprep.subr.mxu0 0.0
        %2639 = vmatpush1.msra.mxu0 %v2623
        %2640 = vmatprep.subr.mxu0 0.0
        %2641 = vmatpush1.msra.mxu0 %v2624
        %2642 = vmatprep.subr.mxu0 0.0
        %2643 = vmatpush1.msra.mxu0 %v2625
        %2644 = vmatprep.subr.mxu0 0.0
        %2645 = vmatpush1.msra.mxu0 0.0
        %2646 = vmatprep.subr.mxu0 0.0
        %2647 = vmatpush1.msra.mxu0 0.0
        %2648 = vmatprep.subr.mxu0 0.0
        %2649 = vmatpush1.msra.mxu0 0.0
        %2650 = vmatprep.subr.mxu0 0.0
        %2651 = vmatpush1.msra.mxu0 0.0
        %2652 = vmatprep.subr.mxu0 0.0
        %2653 = vmatpush1.msra.mxu0 0.0
        %2654 = vmatprep.subr.mxu0 0.0
        %2655 = vmatpush1.msra.mxu0 0.0
        %2656 = vmatprep.subr.mxu0 0.0
        %2657 = vmatpush1.msra.mxu0 0.0
        %2658 = vmatprep.subr.mxu0 0.0
        %2659 = vmatpush1.msra.mxu0 0.0
        %2660 = vmatprep.subr.mxu0 0.0
        %2661 = vmatpush1.msra.mxu0 0.0
        %2662 = vmatprep.subr.mxu0 0.0
        %2663 = vmatpush1.msra.mxu0 0.0
        %2664 = vmatprep.subr.mxu0 0.0
        %2665 = vmatpush1.msra.mxu0 0.0
        %2666 = vmatprep.subr.mxu0 0.0
        %2667 = vmatpush1.msra.mxu0 0.0
        %2668 = vmatprep.subr.mxu0 0.0
        %2669 = vmatpush1.msra.mxu0 0.0
        %2670 = vmatprep.subr.mxu0 0.0
        %2671 = vmatpush1.msra.mxu0 0.0
        %2672 = vmatprep.subr.mxu0 0.0
        %2673 = vmatpush1.msra.mxu0 0.0
        %2674 = vmatprep.subr.mxu0 0.0
        %2675 = vmatpush1.msra.mxu0 0.0
        %2676 = vmatprep.subr.mxu0 0.0
        %2677 = vmatpush1.msra.mxu0 0.0
        %2678 = vmatprep.subr.mxu0 0.0
        %2679 = vmatpush1.msra.mxu0 0.0
        %2680 = vmatprep.subr.mxu0 0.0
        %2681 = vmatpush1.msra.mxu0 0.0
        %2682 = vmatprep.subr.mxu0 0.0
        %2683 = vmatpush1.msra.mxu0 0.0
        %2684 = vmatprep.subr.mxu0 0.0
        %2685 = vmatpush1.msra.mxu0 0.0
        %2686 = vmatprep.subr.mxu0 0.0
        %2687 = vmatpush1.msra.mxu0 0.0
        %2688 = vmatprep.subr.mxu0 0.0
        %2689 = vmatpush1.msra.mxu0 0.0
        %2690 = vmatprep.subr.mxu0 0.0
        %2691 = vmatpush1.msra.mxu0 0.0
        %2692 = vmatprep.subr.mxu0 0.0
        %2693 = vmatpush1.msra.mxu0 0.0
        %2694 = vmatprep.subr.mxu0 0.0
        %2695 = vmatpush1.msra.mxu0 0.0
        %2696 = vmatprep.subr.mxu0 0.0
        %2697 = vmatpush1.msra.mxu0 0.0
        %2698 = vmatprep.subr.mxu0 0.0
        %2699 = vmatpush1.msra.mxu0 0.0
        %2700 = vmatprep.mubr.f32.mxu0 0.0
        %2701 = vmatmul.mubr.f32.gmra.mrb[0].mxu0 %v2634
        %v2702 = vpop.f32.mrb[0].mxu0
        %v2703 = vadd.f32 %v2631, %v2702
        %v2704 = vpop.f32.mrb[0].mxu0
        %2705 = vdwg.mxu0
        %v2706 = vmul.f32 %v2703, %v2703
        %v2707 = vmul.f32 %v2703, %v2706
        %v2708 = vmul.f32 %v2707, 0.044715
        %v2709 = vadd.f32 %v2703, %v2708
        %v2710 = vmul.f32 %v2709, 0.7978846
        %v2711 = vtanh.pop %v2710
        %v2712 = vadd.f32 %v2711, 1.0
        %v2713 = vmul.f32 %v2712, 0.5
        %v2714 = vmul.f32 %v2703, %v2713
        %v2715 = vld [vmem:[%s15] sm:$0xff]
        %v2716 = vld [vmem:[%s15 + $0x8] sm:$0xff]
        %v2717 = vld [vmem:[%s15 + $0x10] sm:$0xff]
        %v2718 = vld [vmem:[%s15 + $0x18] sm:$0xff]
        %v2719 = vld [vmem:[%s15 + $0x20] sm:$0xff]
        %v2720 = vld [vmem:[%s15 + $0x28] sm:$0xff]
        %v2721 = vld [vmem:[%s15 + $0x30] sm:$0xff]
        %v2722 = vld [vmem:[%s15 + $0x38] sm:$0xff]
        %v2723 = vld [vmem:[%s16] sm:$0x1]
        %v2725 = vlaneseq
        %v2726 = vshrl.u32 %v2725, 7
        %v2727 = vsub.s32 0, %v2726
        %v2728 = vrot.slane %v2723, %v2727
        %vm2730 = vcmask 523264
        %v2732 = vsel %vm2730, %v2714, 0
        %2734 = vmatprep.subr.mxu0 0.0
        %2735 = vmatpush1.msra.mxu0 %v2715
        %2736 = vmatprep.subr.mxu0 0.0
        %2737 = vmatpush1.msra.mxu0 %v2716
        %2738 = vmatprep.subr.mxu0 0.0
        %2739 = vmatpush1.msra.mxu0 %v2717
        %2740 = vmatprep.subr.mxu0 0.0
        %2741 = vmatpush1.msra.mxu0 %v2718
        %2742 = vmatprep.subr.mxu0 0.0
        %2743 = vmatpush1.msra.mxu0 %v2719
        %2744 = vmatprep.subr.mxu0 0.0
        %2745 = vmatpush1.msra.mxu0 %v2720
        %2746 = vmatprep.subr.mxu0 0.0
        %2747 = vmatpush1.msra.mxu0 %v2721
        %2748 = vmatprep.subr.mxu0 0.0
        %2749 = vmatpush1.msra.mxu0 %v2722
        %2750 = vmatprep.subr.mxu0 0.0
        %2751 = vmatpush1.msra.mxu0 0.0
        %2752 = vmatprep.subr.mxu0 0.0
        %2753 = vmatpush1.msra.mxu0 0.0
        %2754 = vmatprep.subr.mxu0 0.0
        %2755 = vmatpush1.msra.mxu0 0.0
        %2756 = vmatprep.subr.mxu0 0.0
        %2757 = vmatpush1.msra.mxu0 0.0
        %2758 = vmatprep.subr.mxu0 0.0
        %2759 = vmatpush1.msra.mxu0 0.0
        %2760 = vmatprep.subr.mxu0 0.0
        %2761 = vmatpush1.msra.mxu0 0.0
        %2762 = vmatprep.subr.mxu0 0.0
        %2763 = vmatpush1.msra.mxu0 0.0
        %2764 = vmatprep.subr.mxu0 0.0
        %2765 = vmatpush1.msra.mxu0 0.0
        %2766 = vmatprep.subr.mxu0 0.0
        %2767 = vmatpush1.msra.mxu0 0.0
        %2768 = vmatprep.subr.mxu0 0.0
        %2769 = vmatpush1.msra.mxu0 0.0
        %2770 = vmatprep.subr.mxu0 0.0
        %2771 = vmatpush1.msra.mxu0 0.0
        %2772 = vmatprep.subr.mxu0 0.0
        %2773 = vmatpush1.msra.mxu0 0.0
        %2774 = vmatprep.subr.mxu0 0.0
        %2775 = vmatpush1.msra.mxu0 0.0
        %2776 = vmatprep.subr.mxu0 0.0
        %2777 = vmatpush1.msra.mxu0 0.0
        %2778 = vmatprep.subr.mxu0 0.0
        %2779 = vmatpush1.msra.mxu0 0.0
        %2780 = vmatprep.subr.mxu0 0.0
        %2781 = vmatpush1.msra.mxu0 0.0
        %2782 = vmatprep.subr.mxu0 0.0
        %2783 = vmatpush1.msra.mxu0 0.0
        %2784 = vmatprep.subr.mxu0 0.0
        %2785 = vmatpush1.msra.mxu0 0.0
        %2786 = vmatprep.subr.mxu0 0.0
        %2787 = vmatpush1.msra.mxu0 0.0
        %2788 = vmatprep.subr.mxu0 0.0
        %2789 = vmatpush1.msra.mxu0 0.0
        %2790 = vmatprep.subr.mxu0 0.0
        %2791 = vmatpush1.msra.mxu0 0.0
        %2792 = vmatprep.subr.mxu0 0.0
        %2793 = vmatpush1.msra.mxu0 0.0
        %2794 = vmatprep.subr.mxu0 0.0
        %2795 = vmatpush1.msra.mxu0 0.0
        %2796 = vmatprep.subr.mxu0 0.0
        %2797 = vmatpush1.msra.mxu0 0.0
        %2798 = vmatprep.mubr.f32.mxu0 0.0
        %2799 = vmatmul.mubr.f32.gmra.mrb[0].mxu0 %v2732
        %v2800 = vpop.f32.mrb[0].mxu0
        %v2801 = vadd.f32 %v2728, %v2800
        %v2802 = vpop.f32.mrb[0].mxu0
        %2803 = vdwg.mxu0
        %v2804 = vadd.f32 %v2621, %v2801
        %v2805 = vsel %vm642, %v2804, 0.0
        %2806 = vadd.xlane.f32.xlu0 %v2805
        %v2807 = vpop.xlane.xlu0 %2806
        %v2808 = vmul.f32 %v2807, %v2595
        %v2809 = vsub.f32 %v2804, %v2808
        %v2810 = vmul.f32 %v2809, %v2809
        %v2811 = vsel %vm642, %v2810, 0.0
        %2812 = vadd.xlane.f32.xlu0 %v2811
        %v2813 = vpop.xlane.xlu0 %2812
        %v2814 = vmul.f32 %v2813, %v2595
        %v2815 = vadd.f32 %v2814, 1e-05
        %v2816 = vrsqrt.pop %v2815
        %v2817 = vmul.f32 %v2809, %v2816
        %v2818 = vld [vmem:[%s17] sm:$0x1]
        %v2820 = vlaneseq
        %v2821 = vshrl.u32 %v2820, 7
        %v2822 = vsub.s32 0, %v2821
        %v2823 = vrot.slane %v2818, %v2822
        %v2825 = vmul.f32 %v2817, %v2823
        %v2826 = vld [vmem:[%s18] sm:$0x1]
        %v2828 = vlaneseq
        %v2829 = vshrl.u32 %v2828, 7
        %v2830 = vsub.s32 0, %v2829
        %v2831 = vrot.slane %v2826, %v2830
        %v2833 = vadd.f32 %v2825, %v2831
        %2834 = vst.msk [vmem:[%s620] sm:$0xff] %vm642, %v2833
        %s2835 = sand.u32 %s451, 1
        %s2836 = scalar_lea.sflag [#allocation3], %s2835
        %s2837 = sand.u32 %s451, 1
        %s2838 = smul.addr %s2837, 8
        %s2839 = scalar_lea.vmem [#allocation5], %s2838
        // Predicated region
        $region101: #{tpu_custom_call.1} parent=95 // pred_check
          %p2840 = pneg %p461
        $region102: #{tpu_custom_call.1} parent=95 // pred_check_branch
          %2842 = sbr.rel (%p2840) target = $region104
        $region103: #{tpu_custom_call.1} parent=95 // pred_region
          %s2844 = ssub.s32 128, 128
          %2845 = vsyncadd %s2836, %s2844
          %s2846 = smul.addr %s34, 128
          %s2847 = scalar_lea.hbm %s19, %s2846
          %s2849 = sshll.u32 %s2839, 4
          %s2850 = int_to_ptr.vmem [resolvable:$true] %s2849
          %2852 = dma.vmem_to_hbm [thread:$0]  %s2850, 128, %s2847, %s2836
        $region104: #{tpu_custom_call.1} parent=95 // pred_fallthru
          _
      $region96: #{tpu_custom_call.1} parent=5 // pred_fallthru
        _
      %p2853 = scmp.le.s32.totalorder 2, %s29
      // Predicated region
      $region105: #{tpu_custom_call.1} parent=5 // pred_check
        %p2854 = pneg %p2853
      $region106: #{tpu_custom_call.1} parent=5 // pred_check_branch
        %2856 = sbr.rel (%p2854) target = $region108
      $region107: #{tpu_custom_call.1} parent=5 // pred_region
        %s2857 = ssub.s32 %s29, 2
        // Predicated region
        $region109: #{tpu_custom_call.1} parent=107 // pred_check
          %p2858 = pneg %p467
        $region110: #{tpu_custom_call.1} parent=107 // pred_check_branch
          %2860 = sbr.rel (%p2858) target = $region112
        $region111: #{tpu_custom_call.1} parent=107 // pred_region
          %s2861 = sand.u32 %s452, 1
          %s2862 = scalar_lea.sflag [#allocation3], %s2861
          %s2863 = sand.u32 %s452, 1
          %s2864 = smul.addr %s2863, 8
          %s2865 = scalar_lea.vmem [#allocation5], %s2864
          %2866 = dma.done %s2862, 128
        $region112: #{tpu_custom_call.1} parent=107 // pred_fallthru
          _
      $region108: #{tpu_custom_call.1} parent=5 // pred_fallthru
        _
    $region6: #{tpu_custom_call.1} parent=1 // loop_footer
      %s33 = sadd.s32 1, %s29
    $region7: #{tpu_custom_call.1} parent=1 // loop_footer_branch
      %28 = sbr.rel target = $region3
    $region8: #{tpu_custom_call.1} parent=1 // loop_exit
      _
    %2867 = vsyncpa [#allocation3], 1
    %s2868 = scalar_lea.sflag [#allocation3], 1
    %2869 = vsyncpa %s2868, 1
    %2870 = vsyncpa [#allocation4], 1
    %s2871 = scalar_lea.sflag [#allocation4], 1
    %2872 = vsyncpa %s2871, 1

</llo_original>
